<compile_context>
chip_gen: v7x
topology: tpu7x:2x2x1
jax: 0.10.0
libtpu: 0.0.40
codegen_flags: <defaults>
</compile_context>

<pallas_src>
import functools
import numpy as np
import jax
import jax.numpy as jnp
from jax import lax
from jax.experimental import pallas as pl
from jax.experimental.pallas import tpu as pltpu


# ------------------------------- fused kernel -------------------------------


def _vae_kernel(xin_ref, p_ref, out_ref, *, layout, cfg):
    M = cfg["num_modules"]
    L = cfg["num_layers"]
    H = cfg["module_hidden"]
    inv_t = 1.0 / float(cfg["temperature"])
    obs_dim = cfg["obs_dim"]
    skill_dim = cfg["skill_dim"]
    latent = cfg["latent_dim"]
    use_bf16 = bool(cfg["use_bf16_matmul"])
    ngl = cfg["num_gating_layers"]

    xin = xin_ref[...]                       # (TB, obs+skill+latent), f32

    def relu(v):
        return jnp.maximum(v, 0.0)

    def mat(name):
        off, din, dout = layout[name]
        return p_ref[off:off + din, :], dout   # static slice of the slab

    def _mm(a, w):
        if use_bf16:
            a = a.astype(jnp.bfloat16)
            w = w.astype(jnp.bfloat16)
        return jnp.dot(a, w, preferred_element_type=jnp.float32)

    def linear(x, name, act_out=False):
        w, dout = mat(name + ".w")
        b, _ = mat(name + ".b")
        y = _mm(x, w) + b
        y = y[:, :dout]
        if act_out:
            y = relu(y)
        return y

    def cmat_mm(x, name):                      # structural constant matmul
        w, dout = mat(name)
        return _mm(x, w)[:, :dout]

    def seg_softmax(raw):
        # softmax over consecutive groups of M lanes; group sums via a
        # constant (M*M, M*M) block matrix -> no slices / concat.
        s = raw * inv_t
        m = jnp.max(s, axis=-1, keepdims=True)     # row max is a valid shift
        e = jnp.exp(s - m)
        den = cmat_mm(e, "G_grp")
        return e * pl.reciprocal(den, approx=True)

    def softmax_full(raw):
        s = raw * inv_t
        m = jnp.max(s, axis=-1, keepdims=True)
        e = jnp.exp(s - m)
        den = jnp.sum(e, axis=-1, keepdims=True)
        return e * pl.reciprocal(den, approx=True)

    def mlp_base(x, names):
        # MLPBase: relu after every fc except the last (last_activation = id)
        for nm in names[:-1]:
            x = linear(x, nm, act_out=True)
        return linear(x, names[-1])

    def soft_module(mod_in, embedding, pf):
        emb = embedding * mod_in                    # cond_ob=True
        x = relu(mod_in)

        if ngl > 0:
            emb = relu(emb)
            for gi in range(ngl - 1):
                emb = linear(emb, f"{pf}.gfc{gi}", act_out=True)
            emb = linear(emb, f"{pf}.gfc{ngl - 1}")

        weights = []
        raw = linear(relu(emb), f"{pf}.wfc0")        # (B, M*M)
        weights.append(seg_softmax(raw))

        for t in range(L - 2):
            # cond input = concat(weights[0..t]) -> sum of row-block matmuls
            cond = linear(weights[0], f"{pf}.cond{t}_0")
            for s2 in range(1, t + 1):
                cond = cond + linear(weights[s2], f"{pf}.cond{t}_{s2}")
            cond = relu(cond * emb)
            raw = linear(cond, f"{pf}.wfc{t + 1}")
            weights.append(seg_softmax(raw))

        cond = linear(weights[0], f"{pf}.condL_0")
        for s2 in range(1, L - 1):
            cond = cond + linear(weights[s2], f"{pf}.condL_{s2}")
        cond = relu(cond * emb)
        last_w = softmax_full(linear(cond, f"{pf}.wlast"))   # (B, M)

        # ---- module layers: lane-dense (B, M*H) buffers ----
        mo = linear(x, f"{pf}.mod0")                          # (B, M*H)
        for i in range(L - 1):
            wt = weights[i]                                   # (B, M*M)
            # mixed[:, j*H+h] = sum_k wt[:, j*M+k] * mo[:, k*H+h]
            mixed = cmat_mm(wt, "SELW_0") * mo                # SELX_0 == I
            for d in range(1, M):
                mixed = mixed + cmat_mm(wt, f"SELW_{d}") * cmat_mm(mo, f"SELX_{d}")
            mo = linear(relu(mixed), f"{pf}.mod{i + 1}")

        # final mix: broadcast last_w over lanes, multiply, sum over modules
        lexp = cmat_mm(last_w, "E_FIN")                       # (B, M*H)
        s = relu(cmat_mm(lexp * mo, "R_FIN"))                 # (B, H)
        return linear(s, f"{pf}.last")

    # ---- base MLPs (both read the shared packed input; the obs / skill rows
    #      are selected by zero-padded first-layer weight rows) ----
    n_base = len(cfg["hidden_shapes"])
    n_em = len(cfg["em_hidden_shapes"])
    out = mlp_base(xin, [f"base.l{i}" for i in range(n_base)])     # (B, D)
    embedding = mlp_base(xin, [f"em.l{i}" for i in range(n_em)])   # (B, D)

    enc = soft_module(out, embedding, "enc")            # (B, 2*latent)
    mu = enc[:, :latent]
    log_var = enc[:, latent:2 * latent]
    eps = xin[:, obs_dim + skill_dim:obs_dim + skill_dim + latent]

    std = jnp.exp(0.5 * log_var)                        # single transcendental
    z = mu + eps * std

    em_z = mlp_base(z, [f"de.l{i}" for i in range(n_em)])
    rec = soft_module(em_z, embedding, "dec")           # (B, obs_dim)

    obs = xin[:, :obs_dim]
    d = obs - rec
    res = jnp.sum(d * d, axis=-1, keepdims=True)        # (B, 1)
    var = std * std
    kl = -0.5 * jnp.sum(1.0 + log_var - mu * mu - var, axis=-1, keepdims=True)

    # lane-dense merged output: lane 0 = res, lane 1 = kl, rest = 0
    lane = lax.broadcasted_iota(jnp.int32, out_ref.shape, 1)
    out_ref[...] = jnp.where(lane == 0, res, jnp.where(lane == 1, kl, 0.0))


# --------------------------------- wrapper -----------------------------------


def make_vae_forward(slab, layout, cfg):
    obs_dim = cfg["obs_dim"]
    skill_dim = cfg["skill_dim"]
    latent = cfg["latent_dim"]
    xw = obs_dim + skill_dim + latent
    kernel = functools.partial(_vae_kernel, layout=layout, cfg=cfg)

    def fwd(obs, skill, eps):
        B = obs.shape[0]
        tb = 128 if B >= 128 else ((B + 7) // 8) * 8      # batch tile (sublane multiple)
        b_pad = ((B + tb - 1) // tb) * tb

        xin = jnp.zeros((b_pad, xw), jnp.float32)
        xin = xin.at[:B, :obs_dim].set(obs.astype(jnp.float32))
        xin = xin.at[:B, obs_dim:obs_dim + skill_dim].set(skill.astype(jnp.float32))
        xin = xin.at[:B, obs_dim + skill_dim:].set(eps.astype(jnp.float32))

        out = pl.pallas_call(
            kernel,
            grid=(b_pad // tb,),
            in_specs=[
                pl.BlockSpec((tb, xw), lambda i: (i, 0)),
                pl.BlockSpec(slab.shape, lambda i: (0, 0)),   # params: resident
            ],
            out_specs=pl.BlockSpec((tb, 128), lambda i: (i, 0)),
            out_shape=jax.ShapeDtypeStruct((b_pad, 128), jnp.float32),
            compiler_params=pltpu.CompilerParams(
                dimension_semantics=("parallel",),
                vmem_limit_bytes=48 * 1024 * 1024,
            ),
        )(xin, slab)
        return out[:B, 0], out[:B, 1]

    return fwd


# ---------------------------- parameter packing ------------------------------


class _SlabPacker:
    """Packs (din, dout<=128) matrices into one (R, 128) f32 slab."""

    def __init__(self):
        self._entries = []
        self._layout = {}
        self._off = 0

    def add(self, name, arr):
        arr = np.asarray(arr, dtype=np.float32)
        if arr.ndim == 1:
            arr = arr[None, :]
        din, dout = arr.shape
        assert dout <= 128, f"{name}: dout {dout} > 128"
        buf = np.zeros((din, 128), np.float32)
        buf[:, :dout] = arr
        self._layout[name] = (self._off, din, dout)
        self._entries.append(buf)
        self._off += din

    def add_linear(self, name, w, b):
        self.add(name + ".w", w)
        self.add(name + ".b", np.asarray(b, np.float32).reshape(1, -1))

    def finish(self):
        slab = np.concatenate(self._entries, axis=0)
        pad = (-slab.shape[0]) % 8
        if pad:
            slab = np.concatenate([slab, np.zeros((pad, 128), np.float32)], axis=0)
        return jnp.asarray(slab), dict(self._layout)


def _rand_linear(rng, din, dout):
    w = (rng.standard_normal((din, dout)) / np.sqrt(din)).astype(np.float32)
    b = (0.01 * rng.standard_normal((dout,))).astype(np.float32)
    return w, b


def build_params_slab(cfg, seed=42):
    # TODO(synk): PyTorch init functions (basic_init / uniform_init) are
    # replaced by deterministic Gaussian init; load real weights here if needed.
    rng = np.random.RandomState(seed)
    M, L, H = cfg["num_modules"], cfg["num_layers"], cfg["module_hidden"]
    D, G, NG = cfg["base_out"], cfg["gating_hidden"], cfg["num_gating_layers"]
    obs_dim, skill_dim, latent = cfg["obs_dim"], cfg["skill_dim"], cfg["latent_dim"]
    hs, ehs = cfg["hidden_shapes"], cfg["em_hidden_shapes"]

    assert hs[-1] == D and ehs[-1] == D, "base/em_base output widths must match"
    assert cfg["latent_dim"] == cfg["output_shape"] // 2
    assert M * H <= 128 and M * M <= 128, "module widths must fit in 128 lanes"

    pk = _SlabPacker()
    xw = obs_dim + skill_dim + latent

    # base MLP (first-layer weight lives in shared-input rows, rest zero)
    w, b = _rand_linear(rng, obs_dim, hs[0])
    w_full = np.zeros((xw, hs[0]), np.float32)
    w_full[:obs_dim] = w
    pk.add_linear("base.l0", w_full, b)
    din = hs[0]
    for i in range(1, len(hs)):
        w, b = _rand_linear(rng, din, hs[i])
        pk.add_linear(f"base.l{i}", w, b)
        din = hs[i]

    # em_base MLP (skill rows of the shared input)
    w, b = _rand_linear(rng, skill_dim, ehs[0])
    w_full = np.zeros((xw, ehs[0]), np.float32)
    w_full[obs_dim:obs_dim + skill_dim] = w
    pk.add_linear("em.l0", w_full, b)
    din = ehs[0]
    for i in range(1, len(ehs)):
        w, b = _rand_linear(rng, din, ehs[i])
        pk.add_linear(f"em.l{i}", w, b)
        din = ehs[i]

    # de_base MLP (input = latent z)
    din = latent
    for i in range(len(ehs)):
        w, b = _rand_linear(rng, din, ehs[i])
        pk.add_linear(f"de.l{i}", w, b)
        din = ehs[i]

    def add_soft(pf, last_out):
        gin = D
        for gi in range(NG):
            w, b = _rand_linear(rng, gin, G)
            pk.add_linear(f"{pf}.gfc{gi}", w, b)
            gin = G
        w, b = _rand_linear(rng, gin, M * M)
        pk.add_linear(f"{pf}.wfc0", w, b)
        for t in range(L - 2):
            w, b = _rand_linear(rng, (t + 1) * M * M, gin)   # cond fc, split rows
            for s2 in range(t + 1):
                blk = w[s2 * M * M:(s2 + 1) * M * M]
                bias = b if s2 == 0 else np.zeros_like(b)
                pk.add_linear(f"{pf}.cond{t}_{s2}", blk, bias)
            w, b = _rand_linear(rng, gin, M * M)
            pk.add_linear(f"{pf}.wfc{t + 1}", w, b)
        w, b = _rand_linear(rng, (L - 1) * M * M, gin)       # cond_last, split rows
        for s2 in range(L - 1):
            blk = w[s2 * M * M:(s2 + 1) * M * M]
            bias = b if s2 == 0 else np.zeros_like(b)
            pk.add_linear(f"{pf}.condL_{s2}", blk, bias)
        w, b = _rand_linear(rng, gin, M)
        pk.add_linear(f"{pf}.wlast", w, b)

        # module layers: layer 0 stacked to (D, M*H), layers >=1 block-diag (M*H, M*H)
        in_dim = D
        for li in range(L):
            ws, bs = [], []
            for _ in range(M):
                w, b = _rand_linear(rng, in_dim, H)
                ws.append(w)
                bs.append(b)
            if li == 0:
                wstk = np.concatenate(ws, axis=1)
            else:
                wstk = np.zeros((M * H, M * H), np.float32)
                for j in range(M):
                    wstk[j * H:(j + 1) * H, j * H:(j + 1) * H] = ws[j]
            bstk = np.concatenate(bs)
            pk.add_linear(f"{pf}.mod{li}", wstk, bstk)
            in_dim = H
        w, b = _rand_linear(rng, H, last_out)
        pk.add_linear(f"{pf}.last", w, b)

    add_soft("enc", cfg["output_shape"])
    add_soft("dec", obs_dim)

    # ---- structural 0/1 constants (shared by encoder & decoder) ----
    # group-sum matrix for the per-row softmax over groups of M lanes
    pk.add("G_grp", np.kron(np.eye(M, dtype=np.float32), np.ones((M, M), np.float32)))
    # SELW_d: (M*M, M*H), picks wt[:, j*M + (j+d)%M] broadcast over H lanes of group j
    for d in range(M):
        selw = np.zeros((M * M, M * H), np.float32)
        for j in range(M):
            k = (j + d) % M
            selw[j * M + k, j * H:(j + 1) * H] = 1.0
        pk.add(f"SELW_{d}", selw)
    # SELX_d: (M*H, M*H), moves module chunk (j+d)%M into group-j lanes (d=0 is identity)
    for d in range(1, M):
        selx = np.zeros((M * H, M * H), np.float32)
        for j in range(M):
            k = (j + d) % M
            selx[k * H:(k + 1) * H, j * H:(j + 1) * H] = np.eye(H, dtype=np.float32)
        pk.add(f"SELX_{d}", selx)
    # E_FIN: broadcast last_w[:, j] across the H lanes of group j
    efin = np.zeros((M, M * H), np.float32)
    for j in range(M):
        efin[j, j * H:(j + 1) * H] = 1.0
    pk.add("E_FIN", efin)
    # R_FIN: sum the M groups down to H lanes
    rfin = np.zeros((M * H, H), np.float32)
    for j in range(M):
        rfin[j * H:(j + 1) * H, :] = np.eye(H, dtype=np.float32)
    pk.add("R_FIN", rfin)

    return pk.finish()


# ----------------------------------- main ------------------------------------

if __name__ == "__main__":
    CFG = dict(
        obs_dim=16,            # input_shape
        skill_dim=8,           # em_input_shape
        output_shape=16,
        latent_dim=8,          # output_shape / 2
        hidden_shapes=[32, 32],
        em_hidden_shapes=[32, 32],
        base_out=32,
        num_layers=3,
        num_modules=4,
        module_hidden=32,
        gating_hidden=32,
        num_gating_layers=2,
        temperature=1.0,
        use_bf16_matmul=True,   # single-pass MXU path on v6e/v7x
    )
    B = 4

    slab, layout = build_params_slab(CFG, seed=42)
    fwd = jax.jit(make_vae_forward(slab, layout, CFG))

    key = jax.random.PRNGKey(0)
    k_obs, k_skill, k_eps = jax.random.split(key, 3)
    obs = jax.random.normal(k_obs, (B, CFG["obs_dim"]), dtype=jnp.float32)
    skill = jax.random.normal(k_skill, (B, CFG["skill_dim"]), dtype=jnp.float32)
    eps = jax.random.normal(k_eps, (B, CFG["latent_dim"]), dtype=jnp.float32)

    res_loss, kl_loss = fwd(obs, skill, eps)
    jax.block_until_ready((res_loss, kl_loss))

    assert res_loss.shape == (B,) and kl_loss.shape == (B,)
    assert bool(jnp.all(jnp.isfinite(res_loss))) and bool(jnp.all(jnp.isfinite(kl_loss)))
    print("KERNEL_OK")
</pallas_src>

<mosaic_0001>
module attributes {stable_mosaic.version = 11 : i64} {
  func.func @_vae_kernel(%arg0: i32, %arg1: memref<8x32xf32, #tpu.memory_space<vmem>>, %arg2: memref<1856x128xf32, #tpu.memory_space<vmem>>, %arg3: memref<8x128xf32, #tpu.memory_space<vmem>>) attributes {dimension_semantics = [#tpu.dimension_semantics<parallel>], iteration_bounds = array<i64: 1>, scalar_prefetch = 0 : i64, scratch_operands = 0 : i64, tpu.core_type = #tpu.core_type<tc>, window_params = [{transform_indices = @transform_0, window_bounds = array<i64: 8, 32>}, {pipeline_mode = #tpu.pipeline_mode<synchronous>, transform_indices = @transform_1, window_bounds = array<i64: 1856, 128>}, {transform_indices = @transform_2, window_bounds = array<i64: 8, 128>}]} {
    %c0 = arith.constant 0 : index
    %c0_0 = arith.constant 0 : index
    %0 = vector.load %arg1[%c0, %c0_0] : memref<8x32xf32, #tpu.memory_space<vmem>>, vector<8x32xf32>
    %c0_1 = arith.constant 0 : index
    %c0_2 = arith.constant 0 : index
    %1 = vector.load %arg2[%c0_1, %c0_2] : memref<1856x128xf32, #tpu.memory_space<vmem>>, vector<32x128xf32>
    %c32 = arith.constant 32 : index
    %c0_3 = arith.constant 0 : index
    %2 = vector.load %arg2[%c32, %c0_3] : memref<1856x128xf32, #tpu.memory_space<vmem>>, vector<1x128xf32>
    %3 = arith.truncf %0 : vector<8x32xf32> to vector<8x32xbf16>
    %4 = arith.truncf %1 : vector<32x128xf32> to vector<32x128xbf16>
    %cst = arith.constant dense<0.000000e+00> : vector<8x128xf32>
    %5 = tpu.matmul %3, %4, %cst {dimension_numbers = #tpu.dot_dimension_numbers<[1], [0], [0], [1], [0, 0, 1, 1], [], []>} : vector<8x32xbf16>, vector<32x128xbf16>, vector<8x128xf32> -> vector<8x128xf32>
    %6 = vector.broadcast %2 : vector<1x128xf32> to vector<8x128xf32>
    %7 = arith.addf %5, %6 : vector<8x128xf32>
    %8 = vector.extract_strided_slice %7 {offsets = [0, 0], sizes = [8, 32], strides = [1, 1]} : vector<8x128xf32> to vector<8x32xf32>
    %cst_4 = arith.constant 0.000000e+00 : f32
    %9 = vector.broadcast %cst_4 : f32 to vector<8x32xf32>
    %10 = arith.maximumf %8, %9 : vector<8x32xf32>
    %c33 = arith.constant 33 : index
    %c0_5 = arith.constant 0 : index
    %11 = vector.load %arg2[%c33, %c0_5] : memref<1856x128xf32, #tpu.memory_space<vmem>>, vector<32x128xf32>
    %c65 = arith.constant 65 : index
    %c0_6 = arith.constant 0 : index
    %12 = vector.load %arg2[%c65, %c0_6] : memref<1856x128xf32, #tpu.memory_space<vmem>>, vector<1x128xf32>
    %13 = arith.truncf %10 : vector<8x32xf32> to vector<8x32xbf16>
    %14 = arith.truncf %11 : vector<32x128xf32> to vector<32x128xbf16>
    %cst_7 = arith.constant dense<0.000000e+00> : vector<8x128xf32>
    %15 = tpu.matmul %13, %14, %cst_7 {dimension_numbers = #tpu.dot_dimension_numbers<[1], [0], [0], [1], [0, 0, 1, 1], [], []>} : vector<8x32xbf16>, vector<32x128xbf16>, vector<8x128xf32> -> vector<8x128xf32>
    %16 = vector.broadcast %12 : vector<1x128xf32> to vector<8x128xf32>
    %17 = arith.addf %15, %16 : vector<8x128xf32>
    %18 = vector.extract_strided_slice %17 {offsets = [0, 0], sizes = [8, 32], strides = [1, 1]} : vector<8x128xf32> to vector<8x32xf32>
    %c66 = arith.constant 66 : index
    %c0_8 = arith.constant 0 : index
    %19 = vector.load %arg2[%c66, %c0_8] : memref<1856x128xf32, #tpu.memory_space<vmem>>, vector<32x128xf32>
    %c98 = arith.constant 98 : index
    %c0_9 = arith.constant 0 : index
    %20 = vector.load %arg2[%c98, %c0_9] : memref<1856x128xf32, #tpu.memory_space<vmem>>, vector<1x128xf32>
    %21 = arith.truncf %0 : vector<8x32xf32> to vector<8x32xbf16>
    %22 = arith.truncf %19 : vector<32x128xf32> to vector<32x128xbf16>
    %cst_10 = arith.constant dense<0.000000e+00> : vector<8x128xf32>
    %23 = tpu.matmul %21, %22, %cst_10 {dimension_numbers = #tpu.dot_dimension_numbers<[1], [0], [0], [1], [0, 0, 1, 1], [], []>} : vector<8x32xbf16>, vector<32x128xbf16>, vector<8x128xf32> -> vector<8x128xf32>
    %24 = vector.broadcast %20 : vector<1x128xf32> to vector<8x128xf32>
    %25 = arith.addf %23, %24 : vector<8x128xf32>
    %26 = vector.extract_strided_slice %25 {offsets = [0, 0], sizes = [8, 32], strides = [1, 1]} : vector<8x128xf32> to vector<8x32xf32>
    %cst_11 = arith.constant 0.000000e+00 : f32
    %27 = vector.broadcast %cst_11 : f32 to vector<8x32xf32>
    %28 = arith.maximumf %26, %27 : vector<8x32xf32>
    %c99 = arith.constant 99 : index
    %c0_12 = arith.constant 0 : index
    %29 = vector.load %arg2[%c99, %c0_12] : memref<1856x128xf32, #tpu.memory_space<vmem>>, vector<32x128xf32>
    %c131 = arith.constant 131 : index
    %c0_13 = arith.constant 0 : index
    %30 = vector.load %arg2[%c131, %c0_13] : memref<1856x128xf32, #tpu.memory_space<vmem>>, vector<1x128xf32>
    %31 = arith.truncf %28 : vector<8x32xf32> to vector<8x32xbf16>
    %32 = arith.truncf %29 : vector<32x128xf32> to vector<32x128xbf16>
    %cst_14 = arith.constant dense<0.000000e+00> : vector<8x128xf32>
    %33 = tpu.matmul %31, %32, %cst_14 {dimension_numbers = #tpu.dot_dimension_numbers<[1], [0], [0], [1], [0, 0, 1, 1], [], []>} : vector<8x32xbf16>, vector<32x128xbf16>, vector<8x128xf32> -> vector<8x128xf32>
    %34 = vector.broadcast %30 : vector<1x128xf32> to vector<8x128xf32>
    %35 = arith.addf %33, %34 : vector<8x128xf32>
    %36 = vector.extract_strided_slice %35 {offsets = [0, 0], sizes = [8, 32], strides = [1, 1]} : vector<8x128xf32> to vector<8x32xf32>
    %37 = arith.mulf %36, %18 : vector<8x32xf32>
    %cst_15 = arith.constant 0.000000e+00 : f32
    %38 = vector.broadcast %cst_15 : f32 to vector<8x32xf32>
    %39 = arith.maximumf %18, %38 : vector<8x32xf32>
    %cst_16 = arith.constant 0.000000e+00 : f32
    %40 = vector.broadcast %cst_16 : f32 to vector<8x32xf32>
    %41 = arith.maximumf %37, %40 : vector<8x32xf32>
    %c174 = arith.constant 174 : index
    %c0_17 = arith.constant 0 : index
    %42 = vector.load %arg2[%c174, %c0_17] : memref<1856x128xf32, #tpu.memory_space<vmem>>, vector<32x128xf32>
    %c206 = arith.constant 206 : index
    %c0_18 = arith.constant 0 : index
    %43 = vector.load %arg2[%c206, %c0_18] : memref<1856x128xf32, #tpu.memory_space<vmem>>, vector<1x128xf32>
    %44 = arith.truncf %41 : vector<8x32xf32> to vector<8x32xbf16>
    %45 = arith.truncf %42 : vector<32x128xf32> to vector<32x128xbf16>
    %cst_19 = arith.constant dense<0.000000e+00> : vector<8x128xf32>
    %46 = tpu.matmul %44, %45, %cst_19 {dimension_numbers = #tpu.dot_dimension_numbers<[1], [0], [0], [1], [0, 0, 1, 1], [], []>} : vector<8x32xbf16>, vector<32x128xbf16>, vector<8x128xf32> -> vector<8x128xf32>
    %47 = vector.broadcast %43 : vector<1x128xf32> to vector<8x128xf32>
    %48 = arith.addf %46, %47 : vector<8x128xf32>
    %49 = vector.extract_strided_slice %48 {offsets = [0, 0], sizes = [8, 32], strides = [1, 1]} : vector<8x128xf32> to vector<8x32xf32>
    %cst_20 = arith.constant 0.000000e+00 : f32
    %50 = vector.broadcast %cst_20 : f32 to vector<8x32xf32>
    %51 = arith.maximumf %49, %50 : vector<8x32xf32>
    %c207 = arith.constant 207 : index
    %c0_21 = arith.constant 0 : index
    %52 = vector.load %arg2[%c207, %c0_21] : memref<1856x128xf32, #tpu.memory_space<vmem>>, vector<32x128xf32>
    %c239 = arith.constant 239 : index
    %c0_22 = arith.constant 0 : index
    %53 = vector.load %arg2[%c239, %c0_22] : memref<1856x128xf32, #tpu.memory_space<vmem>>, vector<1x128xf32>
    %54 = arith.truncf %51 : vector<8x32xf32> to vector<8x32xbf16>
    %55 = arith.truncf %52 : vector<32x128xf32> to vector<32x128xbf16>
    %cst_23 = arith.constant dense<0.000000e+00> : vector<8x128xf32>
    %56 = tpu.matmul %54, %55, %cst_23 {dimension_numbers = #tpu.dot_dimension_numbers<[1], [0], [0], [1], [0, 0, 1, 1], [], []>} : vector<8x32xbf16>, vector<32x128xbf16>, vector<8x128xf32> -> vector<8x128xf32>
    %57 = vector.broadcast %53 : vector<1x128xf32> to vector<8x128xf32>
    %58 = arith.addf %56, %57 : vector<8x128xf32>
    %59 = vector.extract_strided_slice %58 {offsets = [0, 0], sizes = [8, 32], strides = [1, 1]} : vector<8x128xf32> to vector<8x32xf32>
    %cst_24 = arith.constant 0.000000e+00 : f32
    %60 = vector.broadcast %cst_24 : f32 to vector<8x32xf32>
    %61 = arith.maximumf %59, %60 : vector<8x32xf32>
    %c240 = arith.constant 240 : index
    %c0_25 = arith.constant 0 : index
    %62 = vector.load %arg2[%c240, %c0_25] : memref<1856x128xf32, #tpu.memory_space<vmem>>, vector<32x128xf32>
    %c272 = arith.constant 272 : index
    %c0_26 = arith.constant 0 : index
    %63 = vector.load %arg2[%c272, %c0_26] : memref<1856x128xf32, #tpu.memory_space<vmem>>, vector<1x128xf32>
    %64 = arith.truncf %61 : vector<8x32xf32> to vector<8x32xbf16>
    %65 = arith.truncf %62 : vector<32x128xf32> to vector<32x128xbf16>
    %cst_27 = arith.constant dense<0.000000e+00> : vector<8x128xf32>
    %66 = tpu.matmul %64, %65, %cst_27 {dimension_numbers = #tpu.dot_dimension_numbers<[1], [0], [0], [1], [0, 0, 1, 1], [], []>} : vector<8x32xbf16>, vector<32x128xbf16>, vector<8x128xf32> -> vector<8x128xf32>
    %67 = vector.broadcast %63 : vector<1x128xf32> to vector<8x128xf32>
    %68 = arith.addf %66, %67 : vector<8x128xf32>
    %69 = vector.extract_strided_slice %68 {offsets = [0, 0], sizes = [8, 16], strides = [1, 1]} : vector<8x128xf32> to vector<8x16xf32>
    %cst_28 = arith.constant 1.000000e+00 : f32
    %70 = vector.broadcast %cst_28 : f32 to vector<8x16xf32>
    %71 = arith.mulf %69, %70 : vector<8x16xf32>
    %cst_29 = arith.constant dense<0xFF800000> : vector<8xf32>
    %72 = vector.multi_reduction <maximumf>, %71, %cst_29 [1] : vector<8x16xf32> to vector<8xf32>
    %73 = vector.shape_cast %72 : vector<8xf32> to vector<8x1xf32>
    %74 = vector.broadcast %73 : vector<8x1xf32> to vector<8x16xf32>
    %75 = arith.subf %71, %74 : vector<8x16xf32>
    %76 = math.exp %75 : vector<8x16xf32>
    %c1254 = arith.constant 1254 : index
    %c0_30 = arith.constant 0 : index
    %77 = vector.load %arg2[%c1254, %c0_30] : memref<1856x128xf32, #tpu.memory_space<vmem>>, vector<16x128xf32>
    %78 = arith.truncf %76 : vector<8x16xf32> to vector<8x16xbf16>
    %79 = arith.truncf %77 : vector<16x128xf32> to vector<16x128xbf16>
    %cst_31 = arith.constant dense<0.000000e+00> : vector<8x128xf32>
    %80 = tpu.matmul %78, %79, %cst_31 {dimension_numbers = #tpu.dot_dimension_numbers<[1], [0], [0], [1], [0, 0, 1, 1], [], []>} : vector<8x16xbf16>, vector<16x128xbf16>, vector<8x128xf32> -> vector<8x128xf32>
    %81 = vector.extract_strided_slice %80 {offsets = [0, 0], sizes = [8, 16], strides = [1, 1]} : vector<8x128xf32> to vector<8x16xf32>
    %82 = tpu.reciprocal %81 {approx = true} : vector<8x16xf32> -> vector<8x16xf32>
    %83 = arith.mulf %76, %82 : vector<8x16xf32>
    %c273 = arith.constant 273 : index
    %c0_32 = arith.constant 0 : index
    %84 = vector.load %arg2[%c273, %c0_32] : memref<1856x128xf32, #tpu.memory_space<vmem>>, vector<16x128xf32>
    %c289 = arith.constant 289 : index
    %c0_33 = arith.constant 0 : index
    %85 = vector.load %arg2[%c289, %c0_33] : memref<1856x128xf32, #tpu.memory_space<vmem>>, vector<1x128xf32>
    %86 = arith.truncf %83 : vector<8x16xf32> to vector<8x16xbf16>
    %87 = arith.truncf %84 : vector<16x128xf32> to vector<16x128xbf16>
    %cst_34 = arith.constant dense<0.000000e+00> : vector<8x128xf32>
    %88 = tpu.matmul %86, %87, %cst_34 {dimension_numbers = #tpu.dot_dimension_numbers<[1], [0], [0], [1], [0, 0, 1, 1], [], []>} : vector<8x16xbf16>, vector<16x128xbf16>, vector<8x128xf32> -> vector<8x128xf32>
    %89 = vector.broadcast %85 : vector<1x128xf32> to vector<8x128xf32>
    %90 = arith.addf %88, %89 : vector<8x128xf32>
    %91 = vector.extract_strided_slice %90 {offsets = [0, 0], sizes = [8, 32], strides = [1, 1]} : vector<8x128xf32> to vector<8x32xf32>
    %92 = arith.mulf %91, %59 : vector<8x32xf32>
    %cst_35 = arith.constant 0.000000e+00 : f32
    %93 = vector.broadcast %cst_35 : f32 to vector<8x32xf32>
    %94 = arith.maximumf %92, %93 : vector<8x32xf32>
    %c290 = arith.constant 290 : index
    %c0_36 = arith.constant 0 : index
    %95 = vector.load %arg2[%c290, %c0_36] : memref<1856x128xf32, #tpu.memory_space<vmem>>, vector<32x128xf32>
    %c322 = arith.constant 322 : index
    %c0_37 = arith.constant 0 : index
    %96 = vector.load %arg2[%c322, %c0_37] : memref<1856x128xf32, #tpu.memory_space<vmem>>, vector<1x128xf32>
    %97 = arith.truncf %94 : vector<8x32xf32> to vector<8x32xbf16>
    %98 = arith.truncf %95 : vector<32x128xf32> to vector<32x128xbf16>
    %cst_38 = arith.constant dense<0.000000e+00> : vector<8x128xf32>
    %99 = tpu.matmul %97, %98, %cst_38 {dimension_numbers = #tpu.dot_dimension_numbers<[1], [0], [0], [1], [0, 0, 1, 1], [], []>} : vector<8x32xbf16>, vector<32x128xbf16>, vector<8x128xf32> -> vector<8x128xf32>
    %100 = vector.broadcast %96 : vector<1x128xf32> to vector<8x128xf32>
    %101 = arith.addf %99, %100 : vector<8x128xf32>
    %102 = vector.extract_strided_slice %101 {offsets = [0, 0], sizes = [8, 16], strides = [1, 1]} : vector<8x128xf32> to vector<8x16xf32>
    %cst_39 = arith.constant 1.000000e+00 : f32
    %103 = vector.broadcast %cst_39 : f32 to vector<8x16xf32>
    %104 = arith.mulf %102, %103 : vector<8x16xf32>
    %cst_40 = arith.constant dense<0xFF800000> : vector<8xf32>
    %105 = vector.multi_reduction <maximumf>, %104, %cst_40 [1] : vector<8x16xf32> to vector<8xf32>
    %106 = vector.shape_cast %105 : vector<8xf32> to vector<8x1xf32>
    %107 = vector.broadcast %106 : vector<8x1xf32> to vector<8x16xf32>
    %108 = arith.subf %104, %107 : vector<8x16xf32>
    %109 = math.exp %108 : vector<8x16xf32>
    %c1254_41 = arith.constant 1254 : index
    %c0_42 = arith.constant 0 : index
    %110 = vector.load %arg2[%c1254_41, %c0_42] : memref<1856x128xf32, #tpu.memory_space<vmem>>, vector<16x128xf32>
    %111 = arith.truncf %109 : vector<8x16xf32> to vector<8x16xbf16>
    %112 = arith.truncf %110 : vector<16x128xf32> to vector<16x128xbf16>
    %cst_43 = arith.constant dense<0.000000e+00> : vector<8x128xf32>
    %113 = tpu.matmul %111, %112, %cst_43 {dimension_numbers = #tpu.dot_dimension_numbers<[1], [0], [0], [1], [0, 0, 1, 1], [], []>} : vector<8x16xbf16>, vector<16x128xbf16>, vector<8x128xf32> -> vector<8x128xf32>
    %114 = vector.extract_strided_slice %113 {offsets = [0, 0], sizes = [8, 16], strides = [1, 1]} : vector<8x128xf32> to vector<8x16xf32>
    %115 = tpu.reciprocal %114 {approx = true} : vector<8x16xf32> -> vector<8x16xf32>
    %116 = arith.mulf %109, %115 : vector<8x16xf32>
    %c323 = arith.constant 323 : index
    %c0_44 = arith.constant 0 : index
    %117 = vector.load %arg2[%c323, %c0_44] : memref<1856x128xf32, #tpu.memory_space<vmem>>, vector<16x128xf32>
    %c339 = arith.constant 339 : index
    %c0_45 = arith.constant 0 : index
    %118 = vector.load %arg2[%c339, %c0_45] : memref<1856x128xf32, #tpu.memory_space<vmem>>, vector<1x128xf32>
    %119 = arith.truncf %83 : vector<8x16xf32> to vector<8x16xbf16>
    %120 = arith.truncf %117 : vector<16x128xf32> to vector<16x128xbf16>
    %cst_46 = arith.constant dense<0.000000e+00> : vector<8x128xf32>
    %121 = tpu.matmul %119, %120, %cst_46 {dimension_numbers = #tpu.dot_dimension_numbers<[1], [0], [0], [1], [0, 0, 1, 1], [], []>} : vector<8x16xbf16>, vector<16x128xbf16>, vector<8x128xf32> -> vector<8x128xf32>
    %122 = vector.broadcast %118 : vector<1x128xf32> to vector<8x128xf32>
    %123 = arith.addf %121, %122 : vector<8x128xf32>
    %124 = vector.extract_strided_slice %123 {offsets = [0, 0], sizes = [8, 32], strides = [1, 1]} : vector<8x128xf32> to vector<8x32xf32>
    %c340 = arith.constant 340 : index
    %c0_47 = arith.constant 0 : index
    %125 = vector.load %arg2[%c340, %c0_47] : memref<1856x128xf32, #tpu.memory_space<vmem>>, vector<16x128xf32>
    %c356 = arith.constant 356 : index
    %c0_48 = arith.constant 0 : index
    %126 = vector.load %arg2[%c356, %c0_48] : memref<1856x128xf32, #tpu.memory_space<vmem>>, vector<1x128xf32>
    %127 = arith.truncf %116 : vector<8x16xf32> to vector<8x16xbf16>
    %128 = arith.truncf %125 : vector<16x128xf32> to vector<16x128xbf16>
    %cst_49 = arith.constant dense<0.000000e+00> : vector<8x128xf32>
    %129 = tpu.matmul %127, %128, %cst_49 {dimension_numbers = #tpu.dot_dimension_numbers<[1], [0], [0], [1], [0, 0, 1, 1], [], []>} : vector<8x16xbf16>, vector<16x128xbf16>, vector<8x128xf32> -> vector<8x128xf32>
    %130 = vector.broadcast %126 : vector<1x128xf32> to vector<8x128xf32>
    %131 = arith.addf %129, %130 : vector<8x128xf32>
    %132 = vector.extract_strided_slice %131 {offsets = [0, 0], sizes = [8, 32], strides = [1, 1]} : vector<8x128xf32> to vector<8x32xf32>
    %133 = arith.addf %124, %132 : vector<8x32xf32>
    %134 = arith.mulf %133, %59 : vector<8x32xf32>
    %cst_50 = arith.constant 0.000000e+00 : f32
    %135 = vector.broadcast %cst_50 : f32 to vector<8x32xf32>
    %136 = arith.maximumf %134, %135 : vector<8x32xf32>
    %c357 = arith.constant 357 : index
    %c0_51 = arith.constant 0 : index
    %137 = vector.load %arg2[%c357, %c0_51] : memref<1856x128xf32, #tpu.memory_space<vmem>>, vector<32x128xf32>
    %c389 = arith.constant 389 : index
    %c0_52 = arith.constant 0 : index
    %138 = vector.load %arg2[%c389, %c0_52] : memref<1856x128xf32, #tpu.memory_space<vmem>>, vector<1x128xf32>
    %139 = arith.truncf %136 : vector<8x32xf32> to vector<8x32xbf16>
    %140 = arith.truncf %137 : vector<32x128xf32> to vector<32x128xbf16>
    %cst_53 = arith.constant dense<0.000000e+00> : vector<8x128xf32>
    %141 = tpu.matmul %139, %140, %cst_53 {dimension_numbers = #tpu.dot_dimension_numbers<[1], [0], [0], [1], [0, 0, 1, 1], [], []>} : vector<8x32xbf16>, vector<32x128xbf16>, vector<8x128xf32> -> vector<8x128xf32>
    %142 = vector.broadcast %138 : vector<1x128xf32> to vector<8x128xf32>
    %143 = arith.addf %141, %142 : vector<8x128xf32>
    %144 = vector.extract_strided_slice %143 {offsets = [0, 0], sizes = [8, 4], strides = [1, 1]} : vector<8x128xf32> to vector<8x4xf32>
    %cst_54 = arith.constant 1.000000e+00 : f32
    %145 = vector.broadcast %cst_54 : f32 to vector<8x4xf32>
    %146 = arith.mulf %144, %145 : vector<8x4xf32>
    %cst_55 = arith.constant dense<0xFF800000> : vector<8xf32>
    %147 = vector.multi_reduction <maximumf>, %146, %cst_55 [1] : vector<8x4xf32> to vector<8xf32>
    %148 = vector.shape_cast %147 : vector<8xf32> to vector<8x1xf32>
    %149 = vector.broadcast %148 : vector<8x1xf32> to vector<8x4xf32>
    %150 = arith.subf %146, %149 : vector<8x4xf32>
    %151 = math.exp %150 : vector<8x4xf32>
    %cst_56 = arith.constant dense<0.000000e+00> : vector<8xf32>
    %152 = vector.multi_reduction <add>, %151, %cst_56 [1] : vector<8x4xf32> to vector<8xf32>
    %153 = vector.shape_cast %152 : vector<8xf32> to vector<8x1xf32>
    %154 = tpu.reciprocal %153 {approx = true} : vector<8x1xf32> -> vector<8x1xf32>
    %155 = vector.broadcast %154 : vector<8x1xf32> to vector<8x4xf32>
    %156 = arith.mulf %151, %155 : vector<8x4xf32>
    %c390 = arith.constant 390 : index
    %c0_57 = arith.constant 0 : index
    %157 = vector.load %arg2[%c390, %c0_57] : memref<1856x128xf32, #tpu.memory_space<vmem>>, vector<32x128xf32>
    %c422 = arith.constant 422 : index
    %c0_58 = arith.constant 0 : index
    %158 = vector.load %arg2[%c422, %c0_58] : memref<1856x128xf32, #tpu.memory_space<vmem>>, vector<1x128xf32>
    %159 = arith.truncf %39 : vector<8x32xf32> to vector<8x32xbf16>
    %160 = arith.truncf %157 : vector<32x128xf32> to vector<32x128xbf16>
    %cst_59 = arith.constant dense<0.000000e+00> : vector<8x128xf32>
    %161 = tpu.matmul %159, %160, %cst_59 {dimension_numbers = #tpu.dot_dimension_numbers<[1], [0], [0], [1], [0, 0, 1, 1], [], []>} : vector<8x32xbf16>, vector<32x128xbf16>, vector<8x128xf32> -> vector<8x128xf32>
    %162 = vector.broadcast %158 : vector<1x128xf32> to vector<8x128xf32>
    %163 = arith.addf %161, %162 : vector<8x128xf32>
    %c1270 = arith.constant 1270 : index
    %c0_60 = arith.constant 0 : index
    %164 = vector.load %arg2[%c1270, %c0_60] : memref<1856x128xf32, #tpu.memory_space<vmem>>, vector<16x128xf32>
    %165 = arith.truncf %83 : vector<8x16xf32> to vector<8x16xbf16>
    %166 = arith.truncf %164 : vector<16x128xf32> to vector<16x128xbf16>
    %cst_61 = arith.constant dense<0.000000e+00> : vector<8x128xf32>
    %167 = tpu.matmul %165, %166, %cst_61 {dimension_numbers = #tpu.dot_dimension_numbers<[1], [0], [0], [1], [0, 0, 1, 1], [], []>} : vector<8x16xbf16>, vector<16x128xbf16>, vector<8x128xf32> -> vector<8x128xf32>
    %168 = arith.mulf %167, %163 : vector<8x128xf32>
    %c1286 = arith.constant 1286 : index
    %c0_62 = arith.constant 0 : index
    %169 = vector.load %arg2[%c1286, %c0_62] : memref<1856x128xf32, #tpu.memory_space<vmem>>, vector<16x128xf32>
    %170 = arith.truncf %83 : vector<8x16xf32> to vector<8x16xbf16>
    %171 = arith.truncf %169 : vector<16x128xf32> to vector<16x128xbf16>
    %cst_63 = arith.constant dense<0.000000e+00> : vector<8x128xf32>
    %172 = tpu.matmul %170, %171, %cst_63 {dimension_numbers = #tpu.dot_dimension_numbers<[1], [0], [0], [1], [0, 0, 1, 1], [], []>} : vector<8x16xbf16>, vector<16x128xbf16>, vector<8x128xf32> -> vector<8x128xf32>
    %c1334 = arith.constant 1334 : index
    %c0_64 = arith.constant 0 : index
    %173 = vector.load %arg2[%c1334, %c0_64] : memref<1856x128xf32, #tpu.memory_space<vmem>>, vector<128x128xf32>
    %174 = arith.truncf %163 : vector<8x128xf32> to vector<8x128xbf16>
    %175 = arith.truncf %173 : vector<128x128xf32> to vector<128x128xbf16>
    %cst_65 = arith.constant dense<0.000000e+00> : vector<8x128xf32>
    %176 = tpu.matmul %174, %175, %cst_65 {dimension_numbers = #tpu.dot_dimension_numbers<[1], [0], [0], [1], [0, 0, 1, 1], [], []>} : vector<8x128xbf16>, vector<128x128xbf16>, vector<8x128xf32> -> vector<8x128xf32>
    %177 = arith.mulf %172, %176 : vector<8x128xf32>
    %178 = arith.addf %168, %177 : vector<8x128xf32>
    %c1302 = arith.constant 1302 : index
    %c0_66 = arith.constant 0 : index
    %179 = vector.load %arg2[%c1302, %c0_66] : memref<1856x128xf32, #tpu.memory_space<vmem>>, vector<16x128xf32>
    %180 = arith.truncf %83 : vector<8x16xf32> to vector<8x16xbf16>
    %181 = arith.truncf %179 : vector<16x128xf32> to vector<16x128xbf16>
    %cst_67 = arith.constant dense<0.000000e+00> : vector<8x128xf32>
    %182 = tpu.matmul %180, %181, %cst_67 {dimension_numbers = #tpu.dot_dimension_numbers<[1], [0], [0], [1], [0, 0, 1, 1], [], []>} : vector<8x16xbf16>, vector<16x128xbf16>, vector<8x128xf32> -> vector<8x128xf32>
    %c1462 = arith.constant 1462 : index
    %c0_68 = arith.constant 0 : index
    %183 = vector.load %arg2[%c1462, %c0_68] : memref<1856x128xf32, #tpu.memory_space<vmem>>, vector<128x128xf32>
    %184 = arith.truncf %163 : vector<8x128xf32> to vector<8x128xbf16>
    %185 = arith.truncf %183 : vector<128x128xf32> to vector<128x128xbf16>
    %cst_69 = arith.constant dense<0.000000e+00> : vector<8x128xf32>
    %186 = tpu.matmul %184, %185, %cst_69 {dimension_numbers = #tpu.dot_dimension_numbers<[1], [0], [0], [1], [0, 0, 1, 1], [], []>} : vector<8x128xbf16>, vector<128x128xbf16>, vector<8x128xf32> -> vector<8x128xf32>
    %187 = arith.mulf %182, %186 : vector<8x128xf32>
    %188 = arith.addf %178, %187 : vector<8x128xf32>
    %c1318 = arith.constant 1318 : index
    %c0_70 = arith.constant 0 : index
    %189 = vector.load %arg2[%c1318, %c0_70] : memref<1856x128xf32, #tpu.memory_space<vmem>>, vector<16x128xf32>
    %190 = arith.truncf %83 : vector<8x16xf32> to vector<8x16xbf16>
    %191 = arith.truncf %189 : vector<16x128xf32> to vector<16x128xbf16>
    %cst_71 = arith.constant dense<0.000000e+00> : vector<8x128xf32>
    %192 = tpu.matmul %190, %191, %cst_71 {dimension_numbers = #tpu.dot_dimension_numbers<[1], [0], [0], [1], [0, 0, 1, 1], [], []>} : vector<8x16xbf16>, vector<16x128xbf16>, vector<8x128xf32> -> vector<8x128xf32>
    %c1590 = arith.constant 1590 : index
    %c0_72 = arith.constant 0 : index
    %193 = vector.load %arg2[%c1590, %c0_72] : memref<1856x128xf32, #tpu.memory_space<vmem>>, vector<128x128xf32>
    %194 = arith.truncf %163 : vector<8x128xf32> to vector<8x128xbf16>
    %195 = arith.truncf %193 : vector<128x128xf32> to vector<128x128xbf16>
    %cst_73 = arith.constant dense<0.000000e+00> : vector<8x128xf32>
    %196 = tpu.matmul %194, %195, %cst_73 {dimension_numbers = #tpu.dot_dimension_numbers<[1], [0], [0], [1], [0, 0, 1, 1], [], []>} : vector<8x128xbf16>, vector<128x128xbf16>, vector<8x128xf32> -> vector<8x128xf32>
    %197 = arith.mulf %192, %196 : vector<8x128xf32>
    %198 = arith.addf %188, %197 : vector<8x128xf32>
    %cst_74 = arith.constant 0.000000e+00 : f32
    %199 = vector.broadcast %cst_74 : f32 to vector<8x128xf32>
    %200 = arith.maximumf %198, %199 : vector<8x128xf32>
    %c423 = arith.constant 423 : index
    %c0_75 = arith.constant 0 : index
    %201 = vector.load %arg2[%c423, %c0_75] : memref<1856x128xf32, #tpu.memory_space<vmem>>, vector<128x128xf32>
    %c551 = arith.constant 551 : index
    %c0_76 = arith.constant 0 : index
    %202 = vector.load %arg2[%c551, %c0_76] : memref<1856x128xf32, #tpu.memory_space<vmem>>, vector<1x128xf32>
    %203 = arith.truncf %200 : vector<8x128xf32> to vector<8x128xbf16>
    %204 = arith.truncf %201 : vector<128x128xf32> to vector<128x128xbf16>
    %cst_77 = arith.constant dense<0.000000e+00> : vector<8x128xf32>
    %205 = tpu.matmul %203, %204, %cst_77 {dimension_numbers = #tpu.dot_dimension_numbers<[1], [0], [0], [1], [0, 0, 1, 1], [], []>} : vector<8x128xbf16>, vector<128x128xbf16>, vector<8x128xf32> -> vector<8x128xf32>
    %206 = vector.broadcast %202 : vector<1x128xf32> to vector<8x128xf32>
    %207 = arith.addf %205, %206 : vector<8x128xf32>
    %c1270_78 = arith.constant 1270 : index
    %c0_79 = arith.constant 0 : index
    %208 = vector.load %arg2[%c1270_78, %c0_79] : memref<1856x128xf32, #tpu.memory_space<vmem>>, vector<16x128xf32>
    %209 = arith.truncf %116 : vector<8x16xf32> to vector<8x16xbf16>
    %210 = arith.truncf %208 : vector<16x128xf32> to vector<16x128xbf16>
    %cst_80 = arith.constant dense<0.000000e+00> : vector<8x128xf32>
    %211 = tpu.matmul %209, %210, %cst_80 {dimension_numbers = #tpu.dot_dimension_numbers<[1], [0], [0], [1], [0, 0, 1, 1], [], []>} : vector<8x16xbf16>, vector<16x128xbf16>, vector<8x128xf32> -> vector<8x128xf32>
    %212 = arith.mulf %211, %207 : vector<8x128xf32>
    %c1286_81 = arith.constant 1286 : index
    %c0_82 = arith.constant 0 : index
    %213 = vector.load %arg2[%c1286_81, %c0_82] : memref<1856x128xf32, #tpu.memory_space<vmem>>, vector<16x128xf32>
    %214 = arith.truncf %116 : vector<8x16xf32> to vector<8x16xbf16>
    %215 = arith.truncf %213 : vector<16x128xf32> to vector<16x128xbf16>
    %cst_83 = arith.constant dense<0.000000e+00> : vector<8x128xf32>
    %216 = tpu.matmul %214, %215, %cst_83 {dimension_numbers = #tpu.dot_dimension_numbers<[1], [0], [0], [1], [0, 0, 1, 1], [], []>} : vector<8x16xbf16>, vector<16x128xbf16>, vector<8x128xf32> -> vector<8x128xf32>
    %c1334_84 = arith.constant 1334 : index
    %c0_85 = arith.constant 0 : index
    %217 = vector.load %arg2[%c1334_84, %c0_85] : memref<1856x128xf32, #tpu.memory_space<vmem>>, vector<128x128xf32>
    %218 = arith.truncf %207 : vector<8x128xf32> to vector<8x128xbf16>
    %219 = arith.truncf %217 : vector<128x128xf32> to vector<128x128xbf16>
    %cst_86 = arith.constant dense<0.000000e+00> : vector<8x128xf32>
    %220 = tpu.matmul %218, %219, %cst_86 {dimension_numbers = #tpu.dot_dimension_numbers<[1], [0], [0], [1], [0, 0, 1, 1], [], []>} : vector<8x128xbf16>, vector<128x128xbf16>, vector<8x128xf32> -> vector<8x128xf32>
    %221 = arith.mulf %216, %220 : vector<8x128xf32>
    %222 = arith.addf %212, %221 : vector<8x128xf32>
    %c1302_87 = arith.constant 1302 : index
    %c0_88 = arith.constant 0 : index
    %223 = vector.load %arg2[%c1302_87, %c0_88] : memref<1856x128xf32, #tpu.memory_space<vmem>>, vector<16x128xf32>
    %224 = arith.truncf %116 : vector<8x16xf32> to vector<8x16xbf16>
    %225 = arith.truncf %223 : vector<16x128xf32> to vector<16x128xbf16>
    %cst_89 = arith.constant dense<0.000000e+00> : vector<8x128xf32>
    %226 = tpu.matmul %224, %225, %cst_89 {dimension_numbers = #tpu.dot_dimension_numbers<[1], [0], [0], [1], [0, 0, 1, 1], [], []>} : vector<8x16xbf16>, vector<16x128xbf16>, vector<8x128xf32> -> vector<8x128xf32>
    %c1462_90 = arith.constant 1462 : index
    %c0_91 = arith.constant 0 : index
    %227 = vector.load %arg2[%c1462_90, %c0_91] : memref<1856x128xf32, #tpu.memory_space<vmem>>, vector<128x128xf32>
    %228 = arith.truncf %207 : vector<8x128xf32> to vector<8x128xbf16>
    %229 = arith.truncf %227 : vector<128x128xf32> to vector<128x128xbf16>
    %cst_92 = arith.constant dense<0.000000e+00> : vector<8x128xf32>
    %230 = tpu.matmul %228, %229, %cst_92 {dimension_numbers = #tpu.dot_dimension_numbers<[1], [0], [0], [1], [0, 0, 1, 1], [], []>} : vector<8x128xbf16>, vector<128x128xbf16>, vector<8x128xf32> -> vector<8x128xf32>
    %231 = arith.mulf %226, %230 : vector<8x128xf32>
    %232 = arith.addf %222, %231 : vector<8x128xf32>
    %c1318_93 = arith.constant 1318 : index
    %c0_94 = arith.constant 0 : index
    %233 = vector.load %arg2[%c1318_93, %c0_94] : memref<1856x128xf32, #tpu.memory_space<vmem>>, vector<16x128xf32>
    %234 = arith.truncf %116 : vector<8x16xf32> to vector<8x16xbf16>
    %235 = arith.truncf %233 : vector<16x128xf32> to vector<16x128xbf16>
    %cst_95 = arith.constant dense<0.000000e+00> : vector<8x128xf32>
    %236 = tpu.matmul %234, %235, %cst_95 {dimension_numbers = #tpu.dot_dimension_numbers<[1], [0], [0], [1], [0, 0, 1, 1], [], []>} : vector<8x16xbf16>, vector<16x128xbf16>, vector<8x128xf32> -> vector<8x128xf32>
    %c1590_96 = arith.constant 1590 : index
    %c0_97 = arith.constant 0 : index
    %237 = vector.load %arg2[%c1590_96, %c0_97] : memref<1856x128xf32, #tpu.memory_space<vmem>>, vector<128x128xf32>
    %238 = arith.truncf %207 : vector<8x128xf32> to vector<8x128xbf16>
    %239 = arith.truncf %237 : vector<128x128xf32> to vector<128x128xbf16>
    %cst_98 = arith.constant dense<0.000000e+00> : vector<8x128xf32>
    %240 = tpu.matmul %238, %239, %cst_98 {dimension_numbers = #tpu.dot_dimension_numbers<[1], [0], [0], [1], [0, 0, 1, 1], [], []>} : vector<8x128xbf16>, vector<128x128xbf16>, vector<8x128xf32> -> vector<8x128xf32>
    %241 = arith.mulf %236, %240 : vector<8x128xf32>
    %242 = arith.addf %232, %241 : vector<8x128xf32>
    %cst_99 = arith.constant 0.000000e+00 : f32
    %243 = vector.broadcast %cst_99 : f32 to vector<8x128xf32>
    %244 = arith.maximumf %242, %243 : vector<8x128xf32>
    %c552 = arith.constant 552 : index
    %c0_100 = arith.constant 0 : index
    %245 = vector.load %arg2[%c552, %c0_100] : memref<1856x128xf32, #tpu.memory_space<vmem>>, vector<128x128xf32>
    %c680 = arith.constant 680 : index
    %c0_101 = arith.constant 0 : index
    %246 = vector.load %arg2[%c680, %c0_101] : memref<1856x128xf32, #tpu.memory_space<vmem>>, vector<1x128xf32>
    %247 = arith.truncf %244 : vector<8x128xf32> to vector<8x128xbf16>
    %248 = arith.truncf %245 : vector<128x128xf32> to vector<128x128xbf16>
    %cst_102 = arith.constant dense<0.000000e+00> : vector<8x128xf32>
    %249 = tpu.matmul %247, %248, %cst_102 {dimension_numbers = #tpu.dot_dimension_numbers<[1], [0], [0], [1], [0, 0, 1, 1], [], []>} : vector<8x128xbf16>, vector<128x128xbf16>, vector<8x128xf32> -> vector<8x128xf32>
    %250 = vector.broadcast %246 : vector<1x128xf32> to vector<8x128xf32>
    %251 = arith.addf %249, %250 : vector<8x128xf32>
    %c1718 = arith.constant 1718 : index
    %c0_103 = arith.constant 0 : index
    %252 = vector.load %arg2[%c1718, %c0_103] : memref<1856x128xf32, #tpu.memory_space<vmem>>, vector<4x128xf32>
    %253 = arith.truncf %156 : vector<8x4xf32> to vector<8x4xbf16>
    %254 = arith.truncf %252 : vector<4x128xf32> to vector<4x128xbf16>
    %cst_104 = arith.constant dense<0.000000e+00> : vector<8x128xf32>
    %255 = tpu.matmul %253, %254, %cst_104 {dimension_numbers = #tpu.dot_dimension_numbers<[1], [0], [0], [1], [0, 0, 1, 1], [], []>} : vector<8x4xbf16>, vector<4x128xbf16>, vector<8x128xf32> -> vector<8x128xf32>
    %256 = arith.mulf %255, %251 : vector<8x128xf32>
    %c1722 = arith.constant 1722 : index
    %c0_105 = arith.constant 0 : index
    %257 = vector.load %arg2[%c1722, %c0_105] : memref<1856x128xf32, #tpu.memory_space<vmem>>, vector<128x128xf32>
    %258 = arith.truncf %256 : vector<8x128xf32> to vector<8x128xbf16>
    %259 = arith.truncf %257 : vector<128x128xf32> to vector<128x128xbf16>
    %cst_106 = arith.constant dense<0.000000e+00> : vector<8x128xf32>
    %260 = tpu.matmul %258, %259, %cst_106 {dimension_numbers = #tpu.dot_dimension_numbers<[1], [0], [0], [1], [0, 0, 1, 1], [], []>} : vector<8x128xbf16>, vector<128x128xbf16>, vector<8x128xf32> -> vector<8x128xf32>
    %261 = vector.extract_strided_slice %260 {offsets = [0, 0], sizes = [8, 32], strides = [1, 1]} : vector<8x128xf32> to vector<8x32xf32>
    %cst_107 = arith.constant 0.000000e+00 : f32
    %262 = vector.broadcast %cst_107 : f32 to vector<8x32xf32>
    %263 = arith.maximumf %261, %262 : vector<8x32xf32>
    %c681 = arith.constant 681 : index
    %c0_108 = arith.constant 0 : index
    %264 = vector.load %arg2[%c681, %c0_108] : memref<1856x128xf32, #tpu.memory_space<vmem>>, vector<32x128xf32>
    %c713 = arith.constant 713 : index
    %c0_109 = arith.constant 0 : index
    %265 = vector.load %arg2[%c713, %c0_109] : memref<1856x128xf32, #tpu.memory_space<vmem>>, vector<1x128xf32>
    %266 = arith.truncf %263 : vector<8x32xf32> to vector<8x32xbf16>
    %267 = arith.truncf %264 : vector<32x128xf32> to vector<32x128xbf16>
    %cst_110 = arith.constant dense<0.000000e+00> : vector<8x128xf32>
    %268 = tpu.matmul %266, %267, %cst_110 {dimension_numbers = #tpu.dot_dimension_numbers<[1], [0], [0], [1], [0, 0, 1, 1], [], []>} : vector<8x32xbf16>, vector<32x128xbf16>, vector<8x128xf32> -> vector<8x128xf32>
    %269 = vector.broadcast %265 : vector<1x128xf32> to vector<8x128xf32>
    %270 = arith.addf %268, %269 : vector<8x128xf32>
    %271 = vector.extract_strided_slice %270 {offsets = [0, 0], sizes = [8, 16], strides = [1, 1]} : vector<8x128xf32> to vector<8x16xf32>
    %272 = vector.extract_strided_slice %271 {offsets = [0, 0], sizes = [8, 8], strides = [1, 1]} : vector<8x16xf32> to vector<8x8xf32>
    %273 = vector.extract_strided_slice %271 {offsets = [0, 8], sizes = [8, 8], strides = [1, 1]} : vector<8x16xf32> to vector<8x8xf32>
    %274 = vector.extract_strided_slice %0 {offsets = [0, 24], sizes = [8, 8], strides = [1, 1]} : vector<8x32xf32> to vector<8x8xf32>
    %cst_111 = arith.constant 5.000000e-01 : f32
    %275 = vector.broadcast %cst_111 : f32 to vector<8x8xf32>
    %276 = arith.mulf %275, %273 : vector<8x8xf32>
    %277 = math.exp %276 : vector<8x8xf32>
    %278 = arith.mulf %274, %277 : vector<8x8xf32>
    %279 = arith.addf %272, %278 : vector<8x8xf32>
    %c132 = arith.constant 132 : index
    %c0_112 = arith.constant 0 : index
    %280 = vector.load %arg2[%c132, %c0_112] : memref<1856x128xf32, #tpu.memory_space<vmem>>, vector<8x128xf32>
    %c140 = arith.constant 140 : index
    %c0_113 = arith.constant 0 : index
    %281 = vector.load %arg2[%c140, %c0_113] : memref<1856x128xf32, #tpu.memory_space<vmem>>, vector<1x128xf32>
    %282 = arith.truncf %279 : vector<8x8xf32> to vector<8x8xbf16>
    %283 = arith.truncf %280 : vector<8x128xf32> to vector<8x128xbf16>
    %cst_114 = arith.constant dense<0.000000e+00> : vector<8x128xf32>
    %284 = tpu.matmul %282, %283, %cst_114 {dimension_numbers = #tpu.dot_dimension_numbers<[1], [0], [0], [1], [0, 0, 1, 1], [], []>} : vector<8x8xbf16>, vector<8x128xbf16>, vector<8x128xf32> -> vector<8x128xf32>
    %285 = vector.broadcast %281 : vector<1x128xf32> to vector<8x128xf32>
    %286 = arith.addf %284, %285 : vector<8x128xf32>
    %287 = vector.extract_strided_slice %286 {offsets = [0, 0], sizes = [8, 32], strides = [1, 1]} : vector<8x128xf32> to vector<8x32xf32>
    %cst_115 = arith.constant 0.000000e+00 : f32
    %288 = vector.broadcast %cst_115 : f32 to vector<8x32xf32>
    %289 = arith.maximumf %287, %288 : vector<8x32xf32>
    %c141 = arith.constant 141 : index
    %c0_116 = arith.constant 0 : index
    %290 = vector.load %arg2[%c141, %c0_116] : memref<1856x128xf32, #tpu.memory_space<vmem>>, vector<32x128xf32>
    %c173 = arith.constant 173 : index
    %c0_117 = arith.constant 0 : index
    %291 = vector.load %arg2[%c173, %c0_117] : memref<1856x128xf32, #tpu.memory_space<vmem>>, vector<1x128xf32>
    %292 = arith.truncf %289 : vector<8x32xf32> to vector<8x32xbf16>
    %293 = arith.truncf %290 : vector<32x128xf32> to vector<32x128xbf16>
    %cst_118 = arith.constant dense<0.000000e+00> : vector<8x128xf32>
    %294 = tpu.matmul %292, %293, %cst_118 {dimension_numbers = #tpu.dot_dimension_numbers<[1], [0], [0], [1], [0, 0, 1, 1], [], []>} : vector<8x32xbf16>, vector<32x128xbf16>, vector<8x128xf32> -> vector<8x128xf32>
    %295 = vector.broadcast %291 : vector<1x128xf32> to vector<8x128xf32>
    %296 = arith.addf %294, %295 : vector<8x128xf32>
    %297 = vector.extract_strided_slice %296 {offsets = [0, 0], sizes = [8, 32], strides = [1, 1]} : vector<8x128xf32> to vector<8x32xf32>
    %298 = arith.mulf %36, %297 : vector<8x32xf32>
    %cst_119 = arith.constant 0.000000e+00 : f32
    %299 = vector.broadcast %cst_119 : f32 to vector<8x32xf32>
    %300 = arith.maximumf %297, %299 : vector<8x32xf32>
    %cst_120 = arith.constant 0.000000e+00 : f32
    %301 = vector.broadcast %cst_120 : f32 to vector<8x32xf32>
    %302 = arith.maximumf %298, %301 : vector<8x32xf32>
    %c714 = arith.constant 714 : index
    %c0_121 = arith.constant 0 : index
    %303 = vector.load %arg2[%c714, %c0_121] : memref<1856x128xf32, #tpu.memory_space<vmem>>, vector<32x128xf32>
    %c746 = arith.constant 746 : index
    %c0_122 = arith.constant 0 : index
    %304 = vector.load %arg2[%c746, %c0_122] : memref<1856x128xf32, #tpu.memory_space<vmem>>, vector<1x128xf32>
    %305 = arith.truncf %302 : vector<8x32xf32> to vector<8x32xbf16>
    %306 = arith.truncf %303 : vector<32x128xf32> to vector<32x128xbf16>
    %cst_123 = arith.constant dense<0.000000e+00> : vector<8x128xf32>
    %307 = tpu.matmul %305, %306, %cst_123 {dimension_numbers = #tpu.dot_dimension_numbers<[1], [0], [0], [1], [0, 0, 1, 1], [], []>} : vector<8x32xbf16>, vector<32x128xbf16>, vector<8x128xf32> -> vector<8x128xf32>
    %308 = vector.broadcast %304 : vector<1x128xf32> to vector<8x128xf32>
    %309 = arith.addf %307, %308 : vector<8x128xf32>
    %310 = vector.extract_strided_slice %309 {offsets = [0, 0], sizes = [8, 32], strides = [1, 1]} : vector<8x128xf32> to vector<8x32xf32>
    %cst_124 = arith.constant 0.000000e+00 : f32
    %311 = vector.broadcast %cst_124 : f32 to vector<8x32xf32>
    %312 = arith.maximumf %310, %311 : vector<8x32xf32>
    %c747 = arith.constant 747 : index
    %c0_125 = arith.constant 0 : index
    %313 = vector.load %arg2[%c747, %c0_125] : memref<1856x128xf32, #tpu.memory_space<vmem>>, vector<32x128xf32>
    %c779 = arith.constant 779 : index
    %c0_126 = arith.constant 0 : index
    %314 = vector.load %arg2[%c779, %c0_126] : memref<1856x128xf32, #tpu.memory_space<vmem>>, vector<1x128xf32>
    %315 = arith.truncf %312 : vector<8x32xf32> to vector<8x32xbf16>
    %316 = arith.truncf %313 : vector<32x128xf32> to vector<32x128xbf16>
    %cst_127 = arith.constant dense<0.000000e+00> : vector<8x128xf32>
    %317 = tpu.matmul %315, %316, %cst_127 {dimension_numbers = #tpu.dot_dimension_numbers<[1], [0], [0], [1], [0, 0, 1, 1], [], []>} : vector<8x32xbf16>, vector<32x128xbf16>, vector<8x128xf32> -> vector<8x128xf32>
    %318 = vector.broadcast %314 : vector<1x128xf32> to vector<8x128xf32>
    %319 = arith.addf %317, %318 : vector<8x128xf32>
    %320 = vector.extract_strided_slice %319 {offsets = [0, 0], sizes = [8, 32], strides = [1, 1]} : vector<8x128xf32> to vector<8x32xf32>
    %cst_128 = arith.constant 0.000000e+00 : f32
    %321 = vector.broadcast %cst_128 : f32 to vector<8x32xf32>
    %322 = arith.maximumf %320, %321 : vector<8x32xf32>
    %c780 = arith.constant 780 : index
    %c0_129 = arith.constant 0 : index
    %323 = vector.load %arg2[%c780, %c0_129] : memref<1856x128xf32, #tpu.memory_space<vmem>>, vector<32x128xf32>
    %c812 = arith.constant 812 : index
    %c0_130 = arith.constant 0 : index
    %324 = vector.load %arg2[%c812, %c0_130] : memref<1856x128xf32, #tpu.memory_space<vmem>>, vector<1x128xf32>
    %325 = arith.truncf %322 : vector<8x32xf32> to vector<8x32xbf16>
    %326 = arith.truncf %323 : vector<32x128xf32> to vector<32x128xbf16>
    %cst_131 = arith.constant dense<0.000000e+00> : vector<8x128xf32>
    %327 = tpu.matmul %325, %326, %cst_131 {dimension_numbers = #tpu.dot_dimension_numbers<[1], [0], [0], [1], [0, 0, 1, 1], [], []>} : vector<8x32xbf16>, vector<32x128xbf16>, vector<8x128xf32> -> vector<8x128xf32>
    %328 = vector.broadcast %324 : vector<1x128xf32> to vector<8x128xf32>
    %329 = arith.addf %327, %328 : vector<8x128xf32>
    %330 = vector.extract_strided_slice %329 {offsets = [0, 0], sizes = [8, 16], strides = [1, 1]} : vector<8x128xf32> to vector<8x16xf32>
    %cst_132 = arith.constant 1.000000e+00 : f32
    %331 = vector.broadcast %cst_132 : f32 to vector<8x16xf32>
    %332 = arith.mulf %330, %331 : vector<8x16xf32>
    %cst_133 = arith.constant dense<0xFF800000> : vector<8xf32>
    %333 = vector.multi_reduction <maximumf>, %332, %cst_133 [1] : vector<8x16xf32> to vector<8xf32>
    %334 = vector.shape_cast %333 : vector<8xf32> to vector<8x1xf32>
    %335 = vector.broadcast %334 : vector<8x1xf32> to vector<8x16xf32>
    %336 = arith.subf %332, %335 : vector<8x16xf32>
    %337 = math.exp %336 : vector<8x16xf32>
    %c1254_134 = arith.constant 1254 : index
    %c0_135 = arith.constant 0 : index
    %338 = vector.load %arg2[%c1254_134, %c0_135] : memref<1856x128xf32, #tpu.memory_space<vmem>>, vector<16x128xf32>
    %339 = arith.truncf %337 : vector<8x16xf32> to vector<8x16xbf16>
    %340 = arith.truncf %338 : vector<16x128xf32> to vector<16x128xbf16>
    %cst_136 = arith.constant dense<0.000000e+00> : vector<8x128xf32>
    %341 = tpu.matmul %339, %340, %cst_136 {dimension_numbers = #tpu.dot_dimension_numbers<[1], [0], [0], [1], [0, 0, 1, 1], [], []>} : vector<8x16xbf16>, vector<16x128xbf16>, vector<8x128xf32> -> vector<8x128xf32>
    %342 = vector.extract_strided_slice %341 {offsets = [0, 0], sizes = [8, 16], strides = [1, 1]} : vector<8x128xf32> to vector<8x16xf32>
    %343 = tpu.reciprocal %342 {approx = true} : vector<8x16xf32> -> vector<8x16xf32>
    %344 = arith.mulf %337, %343 : vector<8x16xf32>
    %c813 = arith.constant 813 : index
    %c0_137 = arith.constant 0 : index
    %345 = vector.load %arg2[%c813, %c0_137] : memref<1856x128xf32, #tpu.memory_space<vmem>>, vector<16x128xf32>
    %c829 = arith.constant 829 : index
    %c0_138 = arith.constant 0 : index
    %346 = vector.load %arg2[%c829, %c0_138] : memref<1856x128xf32, #tpu.memory_space<vmem>>, vector<1x128xf32>
    %347 = arith.truncf %344 : vector<8x16xf32> to vector<8x16xbf16>
    %348 = arith.truncf %345 : vector<16x128xf32> to vector<16x128xbf16>
    %cst_139 = arith.constant dense<0.000000e+00> : vector<8x128xf32>
    %349 = tpu.matmul %347, %348, %cst_139 {dimension_numbers = #tpu.dot_dimension_numbers<[1], [0], [0], [1], [0, 0, 1, 1], [], []>} : vector<8x16xbf16>, vector<16x128xbf16>, vector<8x128xf32> -> vector<8x128xf32>
    %350 = vector.broadcast %346 : vector<1x128xf32> to vector<8x128xf32>
    %351 = arith.addf %349, %350 : vector<8x128xf32>
    %352 = vector.extract_strided_slice %351 {offsets = [0, 0], sizes = [8, 32], strides = [1, 1]} : vector<8x128xf32> to vector<8x32xf32>
    %353 = arith.mulf %352, %320 : vector<8x32xf32>
    %cst_140 = arith.constant 0.000000e+00 : f32
    %354 = vector.broadcast %cst_140 : f32 to vector<8x32xf32>
    %355 = arith.maximumf %353, %354 : vector<8x32xf32>
    %c830 = arith.constant 830 : index
    %c0_141 = arith.constant 0 : index
    %356 = vector.load %arg2[%c830, %c0_141] : memref<1856x128xf32, #tpu.memory_space<vmem>>, vector<32x128xf32>
    %c862 = arith.constant 862 : index
    %c0_142 = arith.constant 0 : index
    %357 = vector.load %arg2[%c862, %c0_142] : memref<1856x128xf32, #tpu.memory_space<vmem>>, vector<1x128xf32>
    %358 = arith.truncf %355 : vector<8x32xf32> to vector<8x32xbf16>
    %359 = arith.truncf %356 : vector<32x128xf32> to vector<32x128xbf16>
    %cst_143 = arith.constant dense<0.000000e+00> : vector<8x128xf32>
    %360 = tpu.matmul %358, %359, %cst_143 {dimension_numbers = #tpu.dot_dimension_numbers<[1], [0], [0], [1], [0, 0, 1, 1], [], []>} : vector<8x32xbf16>, vector<32x128xbf16>, vector<8x128xf32> -> vector<8x128xf32>
    %361 = vector.broadcast %357 : vector<1x128xf32> to vector<8x128xf32>
    %362 = arith.addf %360, %361 : vector<8x128xf32>
    %363 = vector.extract_strided_slice %362 {offsets = [0, 0], sizes = [8, 16], strides = [1, 1]} : vector<8x128xf32> to vector<8x16xf32>
    %cst_144 = arith.constant 1.000000e+00 : f32
    %364 = vector.broadcast %cst_144 : f32 to vector<8x16xf32>
    %365 = arith.mulf %363, %364 : vector<8x16xf32>
    %cst_145 = arith.constant dense<0xFF800000> : vector<8xf32>
    %366 = vector.multi_reduction <maximumf>, %365, %cst_145 [1] : vector<8x16xf32> to vector<8xf32>
    %367 = vector.shape_cast %366 : vector<8xf32> to vector<8x1xf32>
    %368 = vector.broadcast %367 : vector<8x1xf32> to vector<8x16xf32>
    %369 = arith.subf %365, %368 : vector<8x16xf32>
    %370 = math.exp %369 : vector<8x16xf32>
    %c1254_146 = arith.constant 1254 : index
    %c0_147 = arith.constant 0 : index
    %371 = vector.load %arg2[%c1254_146, %c0_147] : memref<1856x128xf32, #tpu.memory_space<vmem>>, vector<16x128xf32>
    %372 = arith.truncf %370 : vector<8x16xf32> to vector<8x16xbf16>
    %373 = arith.truncf %371 : vector<16x128xf32> to vector<16x128xbf16>
    %cst_148 = arith.constant dense<0.000000e+00> : vector<8x128xf32>
    %374 = tpu.matmul %372, %373, %cst_148 {dimension_numbers = #tpu.dot_dimension_numbers<[1], [0], [0], [1], [0, 0, 1, 1], [], []>} : vector<8x16xbf16>, vector<16x128xbf16>, vector<8x128xf32> -> vector<8x128xf32>
    %375 = vector.extract_strided_slice %374 {offsets = [0, 0], sizes = [8, 16], strides = [1, 1]} : vector<8x128xf32> to vector<8x16xf32>
    %376 = tpu.reciprocal %375 {approx = true} : vector<8x16xf32> -> vector<8x16xf32>
    %377 = arith.mulf %370, %376 : vector<8x16xf32>
    %c863 = arith.constant 863 : index
    %c0_149 = arith.constant 0 : index
    %378 = vector.load %arg2[%c863, %c0_149] : memref<1856x128xf32, #tpu.memory_space<vmem>>, vector<16x128xf32>
    %c879 = arith.constant 879 : index
    %c0_150 = arith.constant 0 : index
    %379 = vector.load %arg2[%c879, %c0_150] : memref<1856x128xf32, #tpu.memory_space<vmem>>, vector<1x128xf32>
    %380 = arith.truncf %344 : vector<8x16xf32> to vector<8x16xbf16>
    %381 = arith.truncf %378 : vector<16x128xf32> to vector<16x128xbf16>
    %cst_151 = arith.constant dense<0.000000e+00> : vector<8x128xf32>
    %382 = tpu.matmul %380, %381, %cst_151 {dimension_numbers = #tpu.dot_dimension_numbers<[1], [0], [0], [1], [0, 0, 1, 1], [], []>} : vector<8x16xbf16>, vector<16x128xbf16>, vector<8x128xf32> -> vector<8x128xf32>
    %383 = vector.broadcast %379 : vector<1x128xf32> to vector<8x128xf32>
    %384 = arith.addf %382, %383 : vector<8x128xf32>
    %385 = vector.extract_strided_slice %384 {offsets = [0, 0], sizes = [8, 32], strides = [1, 1]} : vector<8x128xf32> to vector<8x32xf32>
    %c880 = arith.constant 880 : index
    %c0_152 = arith.constant 0 : index
    %386 = vector.load %arg2[%c880, %c0_152] : memref<1856x128xf32, #tpu.memory_space<vmem>>, vector<16x128xf32>
    %c896 = arith.constant 896 : index
    %c0_153 = arith.constant 0 : index
    %387 = vector.load %arg2[%c896, %c0_153] : memref<1856x128xf32, #tpu.memory_space<vmem>>, vector<1x128xf32>
    %388 = arith.truncf %377 : vector<8x16xf32> to vector<8x16xbf16>
    %389 = arith.truncf %386 : vector<16x128xf32> to vector<16x128xbf16>
    %cst_154 = arith.constant dense<0.000000e+00> : vector<8x128xf32>
    %390 = tpu.matmul %388, %389, %cst_154 {dimension_numbers = #tpu.dot_dimension_numbers<[1], [0], [0], [1], [0, 0, 1, 1], [], []>} : vector<8x16xbf16>, vector<16x128xbf16>, vector<8x128xf32> -> vector<8x128xf32>
    %391 = vector.broadcast %387 : vector<1x128xf32> to vector<8x128xf32>
    %392 = arith.addf %390, %391 : vector<8x128xf32>
    %393 = vector.extract_strided_slice %392 {offsets = [0, 0], sizes = [8, 32], strides = [1, 1]} : vector<8x128xf32> to vector<8x32xf32>
    %394 = arith.addf %385, %393 : vector<8x32xf32>
    %395 = arith.mulf %394, %320 : vector<8x32xf32>
    %cst_155 = arith.constant 0.000000e+00 : f32
    %396 = vector.broadcast %cst_155 : f32 to vector<8x32xf32>
    %397 = arith.maximumf %395, %396 : vector<8x32xf32>
    %c897 = arith.constant 897 : index
    %c0_156 = arith.constant 0 : index
    %398 = vector.load %arg2[%c897, %c0_156] : memref<1856x128xf32, #tpu.memory_space<vmem>>, vector<32x128xf32>
    %c929 = arith.constant 929 : index
    %c0_157 = arith.constant 0 : index
    %399 = vector.load %arg2[%c929, %c0_157] : memref<1856x128xf32, #tpu.memory_space<vmem>>, vector<1x128xf32>
    %400 = arith.truncf %397 : vector<8x32xf32> to vector<8x32xbf16>
    %401 = arith.truncf %398 : vector<32x128xf32> to vector<32x128xbf16>
    %cst_158 = arith.constant dense<0.000000e+00> : vector<8x128xf32>
    %402 = tpu.matmul %400, %401, %cst_158 {dimension_numbers = #tpu.dot_dimension_numbers<[1], [0], [0], [1], [0, 0, 1, 1], [], []>} : vector<8x32xbf16>, vector<32x128xbf16>, vector<8x128xf32> -> vector<8x128xf32>
    %403 = vector.broadcast %399 : vector<1x128xf32> to vector<8x128xf32>
    %404 = arith.addf %402, %403 : vector<8x128xf32>
    %405 = vector.extract_strided_slice %404 {offsets = [0, 0], sizes = [8, 4], strides = [1, 1]} : vector<8x128xf32> to vector<8x4xf32>
    %cst_159 = arith.constant 1.000000e+00 : f32
    %406 = vector.broadcast %cst_159 : f32 to vector<8x4xf32>
    %407 = arith.mulf %405, %406 : vector<8x4xf32>
    %cst_160 = arith.constant dense<0xFF800000> : vector<8xf32>
    %408 = vector.multi_reduction <maximumf>, %407, %cst_160 [1] : vector<8x4xf32> to vector<8xf32>
    %409 = vector.shape_cast %408 : vector<8xf32> to vector<8x1xf32>
    %410 = vector.broadcast %409 : vector<8x1xf32> to vector<8x4xf32>
    %411 = arith.subf %407, %410 : vector<8x4xf32>
    %412 = math.exp %411 : vector<8x4xf32>
    %cst_161 = arith.constant dense<0.000000e+00> : vector<8xf32>
    %413 = vector.multi_reduction <add>, %412, %cst_161 [1] : vector<8x4xf32> to vector<8xf32>
    %414 = vector.shape_cast %413 : vector<8xf32> to vector<8x1xf32>
    %415 = tpu.reciprocal %414 {approx = true} : vector<8x1xf32> -> vector<8x1xf32>
    %416 = vector.broadcast %415 : vector<8x1xf32> to vector<8x4xf32>
    %417 = arith.mulf %412, %416 : vector<8x4xf32>
    %c930 = arith.constant 930 : index
    %c0_162 = arith.constant 0 : index
    %418 = vector.load %arg2[%c930, %c0_162] : memref<1856x128xf32, #tpu.memory_space<vmem>>, vector<32x128xf32>
    %c962 = arith.constant 962 : index
    %c0_163 = arith.constant 0 : index
    %419 = vector.load %arg2[%c962, %c0_163] : memref<1856x128xf32, #tpu.memory_space<vmem>>, vector<1x128xf32>
    %420 = arith.truncf %300 : vector<8x32xf32> to vector<8x32xbf16>
    %421 = arith.truncf %418 : vector<32x128xf32> to vector<32x128xbf16>
    %cst_164 = arith.constant dense<0.000000e+00> : vector<8x128xf32>
    %422 = tpu.matmul %420, %421, %cst_164 {dimension_numbers = #tpu.dot_dimension_numbers<[1], [0], [0], [1], [0, 0, 1, 1], [], []>} : vector<8x32xbf16>, vector<32x128xbf16>, vector<8x128xf32> -> vector<8x128xf32>
    %423 = vector.broadcast %419 : vector<1x128xf32> to vector<8x128xf32>
    %424 = arith.addf %422, %423 : vector<8x128xf32>
    %c1270_165 = arith.constant 1270 : index
    %c0_166 = arith.constant 0 : index
    %425 = vector.load %arg2[%c1270_165, %c0_166] : memref<1856x128xf32, #tpu.memory_space<vmem>>, vector<16x128xf32>
    %426 = arith.truncf %344 : vector<8x16xf32> to vector<8x16xbf16>
    %427 = arith.truncf %425 : vector<16x128xf32> to vector<16x128xbf16>
    %cst_167 = arith.constant dense<0.000000e+00> : vector<8x128xf32>
    %428 = tpu.matmul %426, %427, %cst_167 {dimension_numbers = #tpu.dot_dimension_numbers<[1], [0], [0], [1], [0, 0, 1, 1], [], []>} : vector<8x16xbf16>, vector<16x128xbf16>, vector<8x128xf32> -> vector<8x128xf32>
    %429 = arith.mulf %428, %424 : vector<8x128xf32>
    %c1286_168 = arith.constant 1286 : index
    %c0_169 = arith.constant 0 : index
    %430 = vector.load %arg2[%c1286_168, %c0_169] : memref<1856x128xf32, #tpu.memory_space<vmem>>, vector<16x128xf32>
    %431 = arith.truncf %344 : vector<8x16xf32> to vector<8x16xbf16>
    %432 = arith.truncf %430 : vector<16x128xf32> to vector<16x128xbf16>
    %cst_170 = arith.constant dense<0.000000e+00> : vector<8x128xf32>
    %433 = tpu.matmul %431, %432, %cst_170 {dimension_numbers = #tpu.dot_dimension_numbers<[1], [0], [0], [1], [0, 0, 1, 1], [], []>} : vector<8x16xbf16>, vector<16x128xbf16>, vector<8x128xf32> -> vector<8x128xf32>
    %c1334_171 = arith.constant 1334 : index
    %c0_172 = arith.constant 0 : index
    %434 = vector.load %arg2[%c1334_171, %c0_172] : memref<1856x128xf32, #tpu.memory_space<vmem>>, vector<128x128xf32>
    %435 = arith.truncf %424 : vector<8x128xf32> to vector<8x128xbf16>
    %436 = arith.truncf %434 : vector<128x128xf32> to vector<128x128xbf16>
    %cst_173 = arith.constant dense<0.000000e+00> : vector<8x128xf32>
    %437 = tpu.matmul %435, %436, %cst_173 {dimension_numbers = #tpu.dot_dimension_numbers<[1], [0], [0], [1], [0, 0, 1, 1], [], []>} : vector<8x128xbf16>, vector<128x128xbf16>, vector<8x128xf32> -> vector<8x128xf32>
    %438 = arith.mulf %433, %437 : vector<8x128xf32>
    %439 = arith.addf %429, %438 : vector<8x128xf32>
    %c1302_174 = arith.constant 1302 : index
    %c0_175 = arith.constant 0 : index
    %440 = vector.load %arg2[%c1302_174, %c0_175] : memref<1856x128xf32, #tpu.memory_space<vmem>>, vector<16x128xf32>
    %441 = arith.truncf %344 : vector<8x16xf32> to vector<8x16xbf16>
    %442 = arith.truncf %440 : vector<16x128xf32> to vector<16x128xbf16>
    %cst_176 = arith.constant dense<0.000000e+00> : vector<8x128xf32>
    %443 = tpu.matmul %441, %442, %cst_176 {dimension_numbers = #tpu.dot_dimension_numbers<[1], [0], [0], [1], [0, 0, 1, 1], [], []>} : vector<8x16xbf16>, vector<16x128xbf16>, vector<8x128xf32> -> vector<8x128xf32>
    %c1462_177 = arith.constant 1462 : index
    %c0_178 = arith.constant 0 : index
    %444 = vector.load %arg2[%c1462_177, %c0_178] : memref<1856x128xf32, #tpu.memory_space<vmem>>, vector<128x128xf32>
    %445 = arith.truncf %424 : vector<8x128xf32> to vector<8x128xbf16>
    %446 = arith.truncf %444 : vector<128x128xf32> to vector<128x128xbf16>
    %cst_179 = arith.constant dense<0.000000e+00> : vector<8x128xf32>
    %447 = tpu.matmul %445, %446, %cst_179 {dimension_numbers = #tpu.dot_dimension_numbers<[1], [0], [0], [1], [0, 0, 1, 1], [], []>} : vector<8x128xbf16>, vector<128x128xbf16>, vector<8x128xf32> -> vector<8x128xf32>
    %448 = arith.mulf %443, %447 : vector<8x128xf32>
    %449 = arith.addf %439, %448 : vector<8x128xf32>
    %c1318_180 = arith.constant 1318 : index
    %c0_181 = arith.constant 0 : index
    %450 = vector.load %arg2[%c1318_180, %c0_181] : memref<1856x128xf32, #tpu.memory_space<vmem>>, vector<16x128xf32>
    %451 = arith.truncf %344 : vector<8x16xf32> to vector<8x16xbf16>
    %452 = arith.truncf %450 : vector<16x128xf32> to vector<16x128xbf16>
    %cst_182 = arith.constant dense<0.000000e+00> : vector<8x128xf32>
    %453 = tpu.matmul %451, %452, %cst_182 {dimension_numbers = #tpu.dot_dimension_numbers<[1], [0], [0], [1], [0, 0, 1, 1], [], []>} : vector<8x16xbf16>, vector<16x128xbf16>, vector<8x128xf32> -> vector<8x128xf32>
    %c1590_183 = arith.constant 1590 : index
    %c0_184 = arith.constant 0 : index
    %454 = vector.load %arg2[%c1590_183, %c0_184] : memref<1856x128xf32, #tpu.memory_space<vmem>>, vector<128x128xf32>
    %455 = arith.truncf %424 : vector<8x128xf32> to vector<8x128xbf16>
    %456 = arith.truncf %454 : vector<128x128xf32> to vector<128x128xbf16>
    %cst_185 = arith.constant dense<0.000000e+00> : vector<8x128xf32>
    %457 = tpu.matmul %455, %456, %cst_185 {dimension_numbers = #tpu.dot_dimension_numbers<[1], [0], [0], [1], [0, 0, 1, 1], [], []>} : vector<8x128xbf16>, vector<128x128xbf16>, vector<8x128xf32> -> vector<8x128xf32>
    %458 = arith.mulf %453, %457 : vector<8x128xf32>
    %459 = arith.addf %449, %458 : vector<8x128xf32>
    %cst_186 = arith.constant 0.000000e+00 : f32
    %460 = vector.broadcast %cst_186 : f32 to vector<8x128xf32>
    %461 = arith.maximumf %459, %460 : vector<8x128xf32>
    %c963 = arith.constant 963 : index
    %c0_187 = arith.constant 0 : index
    %462 = vector.load %arg2[%c963, %c0_187] : memref<1856x128xf32, #tpu.memory_space<vmem>>, vector<128x128xf32>
    %c1091 = arith.constant 1091 : index
    %c0_188 = arith.constant 0 : index
    %463 = vector.load %arg2[%c1091, %c0_188] : memref<1856x128xf32, #tpu.memory_space<vmem>>, vector<1x128xf32>
    %464 = arith.truncf %461 : vector<8x128xf32> to vector<8x128xbf16>
    %465 = arith.truncf %462 : vector<128x128xf32> to vector<128x128xbf16>
    %cst_189 = arith.constant dense<0.000000e+00> : vector<8x128xf32>
    %466 = tpu.matmul %464, %465, %cst_189 {dimension_numbers = #tpu.dot_dimension_numbers<[1], [0], [0], [1], [0, 0, 1, 1], [], []>} : vector<8x128xbf16>, vector<128x128xbf16>, vector<8x128xf32> -> vector<8x128xf32>
    %467 = vector.broadcast %463 : vector<1x128xf32> to vector<8x128xf32>
    %468 = arith.addf %466, %467 : vector<8x128xf32>
    %c1270_190 = arith.constant 1270 : index
    %c0_191 = arith.constant 0 : index
    %469 = vector.load %arg2[%c1270_190, %c0_191] : memref<1856x128xf32, #tpu.memory_space<vmem>>, vector<16x128xf32>
    %470 = arith.truncf %377 : vector<8x16xf32> to vector<8x16xbf16>
    %471 = arith.truncf %469 : vector<16x128xf32> to vector<16x128xbf16>
    %cst_192 = arith.constant dense<0.000000e+00> : vector<8x128xf32>
    %472 = tpu.matmul %470, %471, %cst_192 {dimension_numbers = #tpu.dot_dimension_numbers<[1], [0], [0], [1], [0, 0, 1, 1], [], []>} : vector<8x16xbf16>, vector<16x128xbf16>, vector<8x128xf32> -> vector<8x128xf32>
    %473 = arith.mulf %472, %468 : vector<8x128xf32>
    %c1286_193 = arith.constant 1286 : index
    %c0_194 = arith.constant 0 : index
    %474 = vector.load %arg2[%c1286_193, %c0_194] : memref<1856x128xf32, #tpu.memory_space<vmem>>, vector<16x128xf32>
    %475 = arith.truncf %377 : vector<8x16xf32> to vector<8x16xbf16>
    %476 = arith.truncf %474 : vector<16x128xf32> to vector<16x128xbf16>
    %cst_195 = arith.constant dense<0.000000e+00> : vector<8x128xf32>
    %477 = tpu.matmul %475, %476, %cst_195 {dimension_numbers = #tpu.dot_dimension_numbers<[1], [0], [0], [1], [0, 0, 1, 1], [], []>} : vector<8x16xbf16>, vector<16x128xbf16>, vector<8x128xf32> -> vector<8x128xf32>
    %c1334_196 = arith.constant 1334 : index
    %c0_197 = arith.constant 0 : index
    %478 = vector.load %arg2[%c1334_196, %c0_197] : memref<1856x128xf32, #tpu.memory_space<vmem>>, vector<128x128xf32>
    %479 = arith.truncf %468 : vector<8x128xf32> to vector<8x128xbf16>
    %480 = arith.truncf %478 : vector<128x128xf32> to vector<128x128xbf16>
    %cst_198 = arith.constant dense<0.000000e+00> : vector<8x128xf32>
    %481 = tpu.matmul %479, %480, %cst_198 {dimension_numbers = #tpu.dot_dimension_numbers<[1], [0], [0], [1], [0, 0, 1, 1], [], []>} : vector<8x128xbf16>, vector<128x128xbf16>, vector<8x128xf32> -> vector<8x128xf32>
    %482 = arith.mulf %477, %481 : vector<8x128xf32>
    %483 = arith.addf %473, %482 : vector<8x128xf32>
    %c1302_199 = arith.constant 1302 : index
    %c0_200 = arith.constant 0 : index
    %484 = vector.load %arg2[%c1302_199, %c0_200] : memref<1856x128xf32, #tpu.memory_space<vmem>>, vector<16x128xf32>
    %485 = arith.truncf %377 : vector<8x16xf32> to vector<8x16xbf16>
    %486 = arith.truncf %484 : vector<16x128xf32> to vector<16x128xbf16>
    %cst_201 = arith.constant dense<0.000000e+00> : vector<8x128xf32>
    %487 = tpu.matmul %485, %486, %cst_201 {dimension_numbers = #tpu.dot_dimension_numbers<[1], [0], [0], [1], [0, 0, 1, 1], [], []>} : vector<8x16xbf16>, vector<16x128xbf16>, vector<8x128xf32> -> vector<8x128xf32>
    %c1462_202 = arith.constant 1462 : index
    %c0_203 = arith.constant 0 : index
    %488 = vector.load %arg2[%c1462_202, %c0_203] : memref<1856x128xf32, #tpu.memory_space<vmem>>, vector<128x128xf32>
    %489 = arith.truncf %468 : vector<8x128xf32> to vector<8x128xbf16>
    %490 = arith.truncf %488 : vector<128x128xf32> to vector<128x128xbf16>
    %cst_204 = arith.constant dense<0.000000e+00> : vector<8x128xf32>
    %491 = tpu.matmul %489, %490, %cst_204 {dimension_numbers = #tpu.dot_dimension_numbers<[1], [0], [0], [1], [0, 0, 1, 1], [], []>} : vector<8x128xbf16>, vector<128x128xbf16>, vector<8x128xf32> -> vector<8x128xf32>
    %492 = arith.mulf %487, %491 : vector<8x128xf32>
    %493 = arith.addf %483, %492 : vector<8x128xf32>
    %c1318_205 = arith.constant 1318 : index
    %c0_206 = arith.constant 0 : index
    %494 = vector.load %arg2[%c1318_205, %c0_206] : memref<1856x128xf32, #tpu.memory_space<vmem>>, vector<16x128xf32>
    %495 = arith.truncf %377 : vector<8x16xf32> to vector<8x16xbf16>
    %496 = arith.truncf %494 : vector<16x128xf32> to vector<16x128xbf16>
    %cst_207 = arith.constant dense<0.000000e+00> : vector<8x128xf32>
    %497 = tpu.matmul %495, %496, %cst_207 {dimension_numbers = #tpu.dot_dimension_numbers<[1], [0], [0], [1], [0, 0, 1, 1], [], []>} : vector<8x16xbf16>, vector<16x128xbf16>, vector<8x128xf32> -> vector<8x128xf32>
    %c1590_208 = arith.constant 1590 : index
    %c0_209 = arith.constant 0 : index
    %498 = vector.load %arg2[%c1590_208, %c0_209] : memref<1856x128xf32, #tpu.memory_space<vmem>>, vector<128x128xf32>
    %499 = arith.truncf %468 : vector<8x128xf32> to vector<8x128xbf16>
    %500 = arith.truncf %498 : vector<128x128xf32> to vector<128x128xbf16>
    %cst_210 = arith.constant dense<0.000000e+00> : vector<8x128xf32>
    %501 = tpu.matmul %499, %500, %cst_210 {dimension_numbers = #tpu.dot_dimension_numbers<[1], [0], [0], [1], [0, 0, 1, 1], [], []>} : vector<8x128xbf16>, vector<128x128xbf16>, vector<8x128xf32> -> vector<8x128xf32>
    %502 = arith.mulf %497, %501 : vector<8x128xf32>
    %503 = arith.addf %493, %502 : vector<8x128xf32>
    %cst_211 = arith.constant 0.000000e+00 : f32
    %504 = vector.broadcast %cst_211 : f32 to vector<8x128xf32>
    %505 = arith.maximumf %503, %504 : vector<8x128xf32>
    %c1092 = arith.constant 1092 : index
    %c0_212 = arith.constant 0 : index
    %506 = vector.load %arg2[%c1092, %c0_212] : memref<1856x128xf32, #tpu.memory_space<vmem>>, vector<128x128xf32>
    %c1220 = arith.constant 1220 : index
    %c0_213 = arith.constant 0 : index
    %507 = vector.load %arg2[%c1220, %c0_213] : memref<1856x128xf32, #tpu.memory_space<vmem>>, vector<1x128xf32>
    %508 = arith.truncf %505 : vector<8x128xf32> to vector<8x128xbf16>
    %509 = arith.truncf %506 : vector<128x128xf32> to vector<128x128xbf16>
    %cst_214 = arith.constant dense<0.000000e+00> : vector<8x128xf32>
    %510 = tpu.matmul %508, %509, %cst_214 {dimension_numbers = #tpu.dot_dimension_numbers<[1], [0], [0], [1], [0, 0, 1, 1], [], []>} : vector<8x128xbf16>, vector<128x128xbf16>, vector<8x128xf32> -> vector<8x128xf32>
    %511 = vector.broadcast %507 : vector<1x128xf32> to vector<8x128xf32>
    %512 = arith.addf %510, %511 : vector<8x128xf32>
    %c1718_215 = arith.constant 1718 : index
    %c0_216 = arith.constant 0 : index
    %513 = vector.load %arg2[%c1718_215, %c0_216] : memref<1856x128xf32, #tpu.memory_space<vmem>>, vector<4x128xf32>
    %514 = arith.truncf %417 : vector<8x4xf32> to vector<8x4xbf16>
    %515 = arith.truncf %513 : vector<4x128xf32> to vector<4x128xbf16>
    %cst_217 = arith.constant dense<0.000000e+00> : vector<8x128xf32>
    %516 = tpu.matmul %514, %515, %cst_217 {dimension_numbers = #tpu.dot_dimension_numbers<[1], [0], [0], [1], [0, 0, 1, 1], [], []>} : vector<8x4xbf16>, vector<4x128xbf16>, vector<8x128xf32> -> vector<8x128xf32>
    %517 = arith.mulf %516, %512 : vector<8x128xf32>
    %c1722_218 = arith.constant 1722 : index
    %c0_219 = arith.constant 0 : index
    %518 = vector.load %arg2[%c1722_218, %c0_219] : memref<1856x128xf32, #tpu.memory_space<vmem>>, vector<128x128xf32>
    %519 = arith.truncf %517 : vector<8x128xf32> to vector<8x128xbf16>
    %520 = arith.truncf %518 : vector<128x128xf32> to vector<128x128xbf16>
    %cst_220 = arith.constant dense<0.000000e+00> : vector<8x128xf32>
    %521 = tpu.matmul %519, %520, %cst_220 {dimension_numbers = #tpu.dot_dimension_numbers<[1], [0], [0], [1], [0, 0, 1, 1], [], []>} : vector<8x128xbf16>, vector<128x128xbf16>, vector<8x128xf32> -> vector<8x128xf32>
    %522 = vector.extract_strided_slice %521 {offsets = [0, 0], sizes = [8, 32], strides = [1, 1]} : vector<8x128xf32> to vector<8x32xf32>
    %cst_221 = arith.constant 0.000000e+00 : f32
    %523 = vector.broadcast %cst_221 : f32 to vector<8x32xf32>
    %524 = arith.maximumf %522, %523 : vector<8x32xf32>
    %c1221 = arith.constant 1221 : index
    %c0_222 = arith.constant 0 : index
    %525 = vector.load %arg2[%c1221, %c0_222] : memref<1856x128xf32, #tpu.memory_space<vmem>>, vector<32x128xf32>
    %c1253 = arith.constant 1253 : index
    %c0_223 = arith.constant 0 : index
    %526 = vector.load %arg2[%c1253, %c0_223] : memref<1856x128xf32, #tpu.memory_space<vmem>>, vector<1x128xf32>
    %527 = arith.truncf %524 : vector<8x32xf32> to vector<8x32xbf16>
    %528 = arith.truncf %525 : vector<32x128xf32> to vector<32x128xbf16>
    %cst_224 = arith.constant dense<0.000000e+00> : vector<8x128xf32>
    %529 = tpu.matmul %527, %528, %cst_224 {dimension_numbers = #tpu.dot_dimension_numbers<[1], [0], [0], [1], [0, 0, 1, 1], [], []>} : vector<8x32xbf16>, vector<32x128xbf16>, vector<8x128xf32> -> vector<8x128xf32>
    %530 = vector.broadcast %526 : vector<1x128xf32> to vector<8x128xf32>
    %531 = arith.addf %529, %530 : vector<8x128xf32>
    %532 = vector.extract_strided_slice %531 {offsets = [0, 0], sizes = [8, 16], strides = [1, 1]} : vector<8x128xf32> to vector<8x16xf32>
    %533 = vector.extract_strided_slice %0 {offsets = [0, 0], sizes = [8, 16], strides = [1, 1]} : vector<8x32xf32> to vector<8x16xf32>
    %534 = arith.subf %533, %532 : vector<8x16xf32>
    %535 = arith.mulf %534, %534 : vector<8x16xf32>
    %cst_225 = arith.constant dense<0.000000e+00> : vector<8xf32>
    %536 = vector.multi_reduction <add>, %535, %cst_225 [1] : vector<8x16xf32> to vector<8xf32>
    %537 = vector.shape_cast %536 : vector<8xf32> to vector<8x1xf32>
    %538 = arith.mulf %277, %277 : vector<8x8xf32>
    %cst_226 = arith.constant 1.000000e+00 : f32
    %539 = vector.broadcast %cst_226 : f32 to vector<8x8xf32>
    %540 = arith.addf %539, %273 : vector<8x8xf32>
    %541 = arith.mulf %272, %272 : vector<8x8xf32>
    %542 = arith.subf %540, %541 : vector<8x8xf32>
    %543 = arith.subf %542, %538 : vector<8x8xf32>
    %cst_227 = arith.constant dense<0.000000e+00> : vector<8xf32>
    %544 = vector.multi_reduction <add>, %543, %cst_227 [1] : vector<8x8xf32> to vector<8xf32>
    %545 = vector.shape_cast %544 : vector<8xf32> to vector<8x1xf32>
    %cst_228 = arith.constant -5.000000e-01 : f32
    %546 = vector.broadcast %cst_228 : f32 to vector<8x1xf32>
    %547 = arith.mulf %546, %545 : vector<8x1xf32>
    %548 = tpu.iota {dimensions = array<i32: 1>} : vector<8x128xi32>
    %c0_i32 = arith.constant 0 : i32
    %549 = vector.broadcast %c0_i32 : i32 to vector<8x128xi32>
    %550 = arith.cmpi eq, %548, %549 : vector<8x128xi32>
    %c1_i32 = arith.constant 1 : i32
    %551 = vector.broadcast %c1_i32 : i32 to vector<8x128xi32>
    %552 = arith.cmpi eq, %548, %551 : vector<8x128xi32>
    %cst_229 = arith.constant 0.000000e+00 : f32
    %553 = vector.shape_cast %547 : vector<8x1xf32> to vector<8x1xf32>
    %554 = vector.broadcast %553 : vector<8x1xf32> to vector<8x128xf32>
    %555 = vector.broadcast %cst_229 : f32 to vector<8x128xf32>
    %556 = arith.select %552, %554, %555 : vector<8x128xi1>, vector<8x128xf32>
    %557 = vector.shape_cast %537 : vector<8x1xf32> to vector<8x1xf32>
    %558 = vector.broadcast %557 : vector<8x1xf32> to vector<8x128xf32>
    %559 = arith.select %550, %558, %556 : vector<8x128xi1>, vector<8x128xf32>
    %c0_230 = arith.constant 0 : index
    %c0_231 = arith.constant 0 : index
    %560 = vector.load %arg3[%c0_230, %c0_231] : memref<8x128xf32, #tpu.memory_space<vmem>>, vector<8x128xf32>
    tpu.vector_store %arg3[%c0_230, %c0_231], %559 {strides = array<i32>} : memref<8x128xf32, #tpu.memory_space<vmem>>, vector<8x128xf32>,
    return
  }
  func.func @transform_0(%arg0: i32) -> (i32, i32) {
    %c0_i32 = arith.constant 0 : i32
    %c0_i32_0 = arith.constant 0 : i32
    return %arg0, %c0_i32 : i32, i32
  }
  func.func @transform_1(%arg0: i32) -> (i32, i32) {
    %c0_i32 = arith.constant 0 : i32
    %c0_i32_0 = arith.constant 0 : i32
    %c0_i32_1 = arith.constant 0 : i32
    return %c0_i32, %c0_i32_0 : i32, i32
  }
  func.func @transform_2(%arg0: i32) -> (i32, i32) {
    %c0_i32 = arith.constant 0 : i32
    %c0_i32_0 = arith.constant 0 : i32
    return %arg0, %c0_i32 : i32, i32
  }
}

</mosaic_0001>

<llo_original>
// kernel: fwd.1
$region0: #{fwd.1}
  #allocation0 [shape = 'u32[]', space=smem, size = 0x4, offset = 0x4, fixed_abs, tag = 'smem constant byte address 0x4 - core index']
  #allocation1 [shape = 'u32[144,128]{1,0:T(1,128)}', space=vmem, size = 0x12000, scoped, tag = 'internal scratch']
  %s0 = inlined_call_operand.vmem [shape: f32[8,32], index: 0, kind: input, shape index: {}]
  %s1 = inlined_call_operand.hbm [shape: f32[1856,128], index: 1, kind: input, shape index: {}]
  %s2 = inlined_call_operand.vmem [shape: f32[8,128], index: 2, kind: output, shape index: {}]
  %s3 = sld [smem:[#allocation0]]
  $region22: #{fwd.1} parent=0
    _
  %s5 = ssub.s32 1, %s3
  %s6 = scalar_select 0, %s5, %s3
  $region1: #{fwd.1} parent=0
    #allocation2 [shape = 'u8[950272]{0}', space=vmem, size = 0xe8000, scoped, tag = 'input window, operand 1, single buffered']
    #allocation3 [shape = 's32[1]{0}', space=sflag, size = 0x4, scoped, tag = 'scoped memory for fwd.1']
    %7 = vsyncpa [#allocation3], 0
    // Predicated region
    $region2: #{fwd.1} parent=1 // pred_check
      _
    $region3: #{fwd.1} parent=1 // pred_check_branch
      %9 = sbr.rel (0) target = $region5
    $region4: #{fwd.1} parent=1 // pred_region
      _
    $region5: #{fwd.1} parent=1 // pred_fallthru
      _
    // Predicated region
    $region6: #{fwd.1} parent=1 // pred_check
      _
    $region7: #{fwd.1} parent=1 // pred_check_branch
      %11 = sbr.rel (0) target = $region9
    $region8: #{fwd.1} parent=1 // pred_region
      %s13 = ssub.s32 29696, 29696
      %14 = vsyncadd [#allocation3], %s13
      %s15 = sshll.u32 [#allocation2], 4
      %s16 = int_to_ptr.vmem [resolvable:$true] %s15
      %21 = dma.hbm_to_vmem [thread:$0]  %s1, 29696, %s16, [#allocation3], 128, 128, 8
    $region9: #{fwd.1} parent=1 // pred_fallthru
      _
    // Predicated region
    $region10: #{fwd.1} parent=1 // pred_check
      _
    $region11: #{fwd.1} parent=1 // pred_check_branch
      %23 = sbr.rel (0) target = $region13
    $region12: #{fwd.1} parent=1 // pred_region
      %24 = dma.done [#allocation3], 29696
    $region13: #{fwd.1} parent=1 // pred_fallthru
      _
    %v26 = vld [vmem:[%s0] sm:$0xff]
    %v27 = vld [vmem:[#allocation2] sm:$0xff]
    %v28 = vld [vmem:[#allocation2 + $0x8] sm:$0xff]
    %v29 = vld [vmem:[#allocation2 + $0x10] sm:$0xff]
    %v30 = vld [vmem:[#allocation2 + $0x18] sm:$0xff]
    %v31 = vld [vmem:[#allocation2 + $0x20] sm:$0x1]
    %v32 = vpack.c.bf16 %v26, %v26
    %v33 = vpack.c.bf16 %v28, %v27
    %v34 = vpack.c.bf16 %v30, %v29
    %v35 = vlaneseq
    %v36 = vshrl.u32 %v35, 7
    %v37 = vsub.s32 0, %v36
    %v38 = vrot.slane %v31, %v37
    %vm39 = vcmask 261120
    %v41 = vsel %vm39, %v32, 0
    %43 = vmatprep.subr.bf16.mxu0 0
    %44 = vmatpush1.bf16.msra.mxu0 %v33
    %45 = vmatprep.subr.bf16.mxu0 0
    %46 = vmatpush1.bf16.msra.mxu0 %v34
    %47 = vmatprep.subr.bf16.mxu0 0
    %48 = vmatpush1.bf16.msra.mxu0 0
    %49 = vmatprep.subr.bf16.mxu0 0
    %50 = vmatpush1.bf16.msra.mxu0 0
    %51 = vmatprep.subr.bf16.mxu0 0
    %52 = vmatpush1.bf16.msra.mxu0 0
    %53 = vmatprep.subr.bf16.mxu0 0
    %54 = vmatpush1.bf16.msra.mxu0 0
    %55 = vmatprep.subr.bf16.mxu0 0
    %56 = vmatpush1.bf16.msra.mxu0 0
    %57 = vmatprep.subr.bf16.mxu0 0
    %58 = vmatpush1.bf16.msra.mxu0 0
    %59 = vmatprep.subr.bf16.mxu0 0
    %60 = vmatpush1.bf16.msra.mxu0 0
    %61 = vmatprep.subr.bf16.mxu0 0
    %62 = vmatpush1.bf16.msra.mxu0 0
    %63 = vmatprep.subr.bf16.mxu0 0
    %64 = vmatpush1.bf16.msra.mxu0 0
    %65 = vmatprep.subr.bf16.mxu0 0
    %66 = vmatpush1.bf16.msra.mxu0 0
    %67 = vmatprep.subr.bf16.mxu0 0
    %68 = vmatpush1.bf16.msra.mxu0 0
    %69 = vmatprep.subr.bf16.mxu0 0
    %70 = vmatpush1.bf16.msra.mxu0 0
    %71 = vmatprep.subr.bf16.mxu0 0
    %72 = vmatpush1.bf16.msra.mxu0 0
    %73 = vmatprep.subr.bf16.mxu0 0
    %74 = vmatpush1.bf16.msra.mxu0 0
    %75 = vmatprep.mubr.bf16.mxu0 0
    %76 = vmatmul.mubr.bf16.gmra.mrb[0].mxu0 %v41
    %v77 = vpop.f32.mrb[0].mxu0
    %v78 = vadd.f32 %v38, %v77
    %v79 = vpop.f32.mrb[0].mxu0
    %v80 = vpop.f32.mrb[0].mxu0
    %v81 = vpop.f32.mrb[0].mxu0
    %82 = vdwg.mxu0
    %v83 = vmax.f32 %v78, 0.0
    %v84 = vld [vmem:[#allocation2 + $0x21] sm:$0xff]
    %v85 = vld [vmem:[#allocation2 + $0x29] sm:$0xff]
    %v86 = vld [vmem:[#allocation2 + $0x31] sm:$0xff]
    %v87 = vld [vmem:[#allocation2 + $0x39] sm:$0xff]
    %v88 = vld [vmem:[#allocation2 + $0x41] sm:$0x1]
    %v89 = vpack.c.bf16 %v83, %v83
    %v90 = vpack.c.bf16 %v85, %v84
    %v91 = vpack.c.bf16 %v87, %v86
    %v92 = vlaneseq
    %v93 = vshrl.u32 %v92, 7
    %v94 = vsub.s32 0, %v93
    %v95 = vrot.slane %v88, %v94
    %v97 = vsel %vm39, %v89, 0
    %99 = vmatprep.subr.bf16.mxu0 0
    %100 = vmatpush1.bf16.msra.mxu0 %v90
    %101 = vmatprep.subr.bf16.mxu0 0
    %102 = vmatpush1.bf16.msra.mxu0 %v91
    %103 = vmatprep.subr.bf16.mxu0 0
    %104 = vmatpush1.bf16.msra.mxu0 0
    %105 = vmatprep.subr.bf16.mxu0 0
    %106 = vmatpush1.bf16.msra.mxu0 0
    %107 = vmatprep.subr.bf16.mxu0 0
    %108 = vmatpush1.bf16.msra.mxu0 0
    %109 = vmatprep.subr.bf16.mxu0 0
    %110 = vmatpush1.bf16.msra.mxu0 0
    %111 = vmatprep.subr.bf16.mxu0 0
    %112 = vmatpush1.bf16.msra.mxu0 0
    %113 = vmatprep.subr.bf16.mxu0 0
    %114 = vmatpush1.bf16.msra.mxu0 0
    %115 = vmatprep.subr.bf16.mxu0 0
    %116 = vmatpush1.bf16.msra.mxu0 0
    %117 = vmatprep.subr.bf16.mxu0 0
    %118 = vmatpush1.bf16.msra.mxu0 0
    %119 = vmatprep.subr.bf16.mxu0 0
    %120 = vmatpush1.bf16.msra.mxu0 0
    %121 = vmatprep.subr.bf16.mxu0 0
    %122 = vmatpush1.bf16.msra.mxu0 0
    %123 = vmatprep.subr.bf16.mxu0 0
    %124 = vmatpush1.bf16.msra.mxu0 0
    %125 = vmatprep.subr.bf16.mxu0 0
    %126 = vmatpush1.bf16.msra.mxu0 0
    %127 = vmatprep.subr.bf16.mxu0 0
    %128 = vmatpush1.bf16.msra.mxu0 0
    %129 = vmatprep.subr.bf16.mxu0 0
    %130 = vmatpush1.bf16.msra.mxu0 0
    %131 = vmatprep.mubr.bf16.mxu0 0
    %132 = vmatmul.mubr.bf16.gmra.mrb[0].mxu0 %v97
    %v133 = vpop.f32.mrb[0].mxu0
    %v134 = vadd.f32 %v95, %v133
    %v135 = vpop.f32.mrb[0].mxu0
    %v136 = vpop.f32.mrb[0].mxu0
    %v137 = vpop.f32.mrb[0].mxu0
    %138 = vdwg.mxu0
    %v139 = vld [vmem:[#allocation2 + $0x42] sm:$0xff]
    %v140 = vld [vmem:[#allocation2 + $0x4a] sm:$0xff]
    %v141 = vld [vmem:[#allocation2 + $0x52] sm:$0xff]
    %v142 = vld [vmem:[#allocation2 + $0x5a] sm:$0xff]
    %v143 = vld [vmem:[#allocation2 + $0x62] sm:$0x1]
    %v144 = vpack.c.bf16 %v140, %v139
    %v145 = vpack.c.bf16 %v142, %v141
    %v146 = vlaneseq
    %v147 = vshrl.u32 %v146, 7
    %v148 = vsub.s32 0, %v147
    %v149 = vrot.slane %v143, %v148
    %150 = vmatprep.subr.bf16.mxu0 0
    %151 = vmatpush1.bf16.msra.mxu0 %v144
    %152 = vmatprep.subr.bf16.mxu0 0
    %153 = vmatpush1.bf16.msra.mxu0 %v145
    %154 = vmatprep.subr.bf16.mxu0 0
    %155 = vmatpush1.bf16.msra.mxu0 0
    %156 = vmatprep.subr.bf16.mxu0 0
    %157 = vmatpush1.bf16.msra.mxu0 0
    %158 = vmatprep.subr.bf16.mxu0 0
    %159 = vmatpush1.bf16.msra.mxu0 0
    %160 = vmatprep.subr.bf16.mxu0 0
    %161 = vmatpush1.bf16.msra.mxu0 0
    %162 = vmatprep.subr.bf16.mxu0 0
    %163 = vmatpush1.bf16.msra.mxu0 0
    %164 = vmatprep.subr.bf16.mxu0 0
    %165 = vmatpush1.bf16.msra.mxu0 0
    %166 = vmatprep.subr.bf16.mxu0 0
    %167 = vmatpush1.bf16.msra.mxu0 0
    %168 = vmatprep.subr.bf16.mxu0 0
    %169 = vmatpush1.bf16.msra.mxu0 0
    %170 = vmatprep.subr.bf16.mxu0 0
    %171 = vmatpush1.bf16.msra.mxu0 0
    %172 = vmatprep.subr.bf16.mxu0 0
    %173 = vmatpush1.bf16.msra.mxu0 0
    %174 = vmatprep.subr.bf16.mxu0 0
    %175 = vmatpush1.bf16.msra.mxu0 0
    %176 = vmatprep.subr.bf16.mxu0 0
    %177 = vmatpush1.bf16.msra.mxu0 0
    %178 = vmatprep.subr.bf16.mxu0 0
    %179 = vmatpush1.bf16.msra.mxu0 0
    %180 = vmatprep.subr.bf16.mxu0 0
    %181 = vmatpush1.bf16.msra.mxu0 0
    %182 = vmatprep.mubr.bf16.mxu0 0
    %183 = vmatmul.mubr.bf16.gmra.mrb[0].mxu0 %v41
    %v184 = vpop.f32.mrb[0].mxu0
    %v185 = vadd.f32 %v149, %v184
    %v186 = vpop.f32.mrb[0].mxu0
    %v187 = vpop.f32.mrb[0].mxu0
    %v188 = vpop.f32.mrb[0].mxu0
    %189 = vdwg.mxu0
    %v190 = vmax.f32 %v185, 0.0
    %v191 = vld [vmem:[#allocation2 + $0x63] sm:$0xff]
    %v192 = vld [vmem:[#allocation2 + $0x6b] sm:$0xff]
    %v193 = vld [vmem:[#allocation2 + $0x73] sm:$0xff]
    %v194 = vld [vmem:[#allocation2 + $0x7b] sm:$0xff]
    %v195 = vld [vmem:[#allocation2 + $0x83] sm:$0x1]
    %v196 = vpack.c.bf16 %v190, %v190
    %v197 = vpack.c.bf16 %v192, %v191
    %v198 = vpack.c.bf16 %v194, %v193
    %v199 = vlaneseq
    %v200 = vshrl.u32 %v199, 7
    %v201 = vsub.s32 0, %v200
    %v202 = vrot.slane %v195, %v201
    %v204 = vsel %vm39, %v196, 0
    %206 = vmatprep.subr.bf16.mxu0 0
    %207 = vmatpush1.bf16.msra.mxu0 %v197
    %208 = vmatprep.subr.bf16.mxu0 0
    %209 = vmatpush1.bf16.msra.mxu0 %v198
    %210 = vmatprep.subr.bf16.mxu0 0
    %211 = vmatpush1.bf16.msra.mxu0 0
    %212 = vmatprep.subr.bf16.mxu0 0
    %213 = vmatpush1.bf16.msra.mxu0 0
    %214 = vmatprep.subr.bf16.mxu0 0
    %215 = vmatpush1.bf16.msra.mxu0 0
    %216 = vmatprep.subr.bf16.mxu0 0
    %217 = vmatpush1.bf16.msra.mxu0 0
    %218 = vmatprep.subr.bf16.mxu0 0
    %219 = vmatpush1.bf16.msra.mxu0 0
    %220 = vmatprep.subr.bf16.mxu0 0
    %221 = vmatpush1.bf16.msra.mxu0 0
    %222 = vmatprep.subr.bf16.mxu0 0
    %223 = vmatpush1.bf16.msra.mxu0 0
    %224 = vmatprep.subr.bf16.mxu0 0
    %225 = vmatpush1.bf16.msra.mxu0 0
    %226 = vmatprep.subr.bf16.mxu0 0
    %227 = vmatpush1.bf16.msra.mxu0 0
    %228 = vmatprep.subr.bf16.mxu0 0
    %229 = vmatpush1.bf16.msra.mxu0 0
    %230 = vmatprep.subr.bf16.mxu0 0
    %231 = vmatpush1.bf16.msra.mxu0 0
    %232 = vmatprep.subr.bf16.mxu0 0
    %233 = vmatpush1.bf16.msra.mxu0 0
    %234 = vmatprep.subr.bf16.mxu0 0
    %235 = vmatpush1.bf16.msra.mxu0 0
    %236 = vmatprep.subr.bf16.mxu0 0
    %237 = vmatpush1.bf16.msra.mxu0 0
    %238 = vmatprep.mubr.bf16.mxu0 0
    %239 = vmatmul.mubr.bf16.gmra.mrb[0].mxu0 %v204
    %v240 = vpop.f32.mrb[0].mxu0
    %v241 = vadd.f32 %v202, %v240
    %v242 = vpop.f32.mrb[0].mxu0
    %v243 = vpop.f32.mrb[0].mxu0
    %v244 = vpop.f32.mrb[0].mxu0
    %245 = vdwg.mxu0
    %v246 = vmul.f32 %v241, %v134
    %v247 = vmax.f32 %v134, 0.0
    %v248 = vmax.f32 %v246, 0.0
    %v249 = vld [vmem:[#allocation2 + $0xae] sm:$0xff]
    %v250 = vld [vmem:[#allocation2 + $0xb6] sm:$0xff]
    %v251 = vld [vmem:[#allocation2 + $0xbe] sm:$0xff]
    %v252 = vld [vmem:[#allocation2 + $0xc6] sm:$0xff]
    %v253 = vld [vmem:[#allocation2 + $0xce] sm:$0x1]
    %v254 = vpack.c.bf16 %v248, %v248
    %v255 = vpack.c.bf16 %v250, %v249
    %v256 = vpack.c.bf16 %v252, %v251
    %v257 = vlaneseq
    %v258 = vshrl.u32 %v257, 7
    %v259 = vsub.s32 0, %v258
    %v260 = vrot.slane %v253, %v259
    %v262 = vsel %vm39, %v254, 0
    %264 = vmatprep.subr.bf16.mxu0 0
    %265 = vmatpush1.bf16.msra.mxu0 %v255
    %266 = vmatprep.subr.bf16.mxu0 0
    %267 = vmatpush1.bf16.msra.mxu0 %v256
    %268 = vmatprep.subr.bf16.mxu0 0
    %269 = vmatpush1.bf16.msra.mxu0 0
    %270 = vmatprep.subr.bf16.mxu0 0
    %271 = vmatpush1.bf16.msra.mxu0 0
    %272 = vmatprep.subr.bf16.mxu0 0
    %273 = vmatpush1.bf16.msra.mxu0 0
    %274 = vmatprep.subr.bf16.mxu0 0
    %275 = vmatpush1.bf16.msra.mxu0 0
    %276 = vmatprep.subr.bf16.mxu0 0
    %277 = vmatpush1.bf16.msra.mxu0 0
    %278 = vmatprep.subr.bf16.mxu0 0
    %279 = vmatpush1.bf16.msra.mxu0 0
    %280 = vmatprep.subr.bf16.mxu0 0
    %281 = vmatpush1.bf16.msra.mxu0 0
    %282 = vmatprep.subr.bf16.mxu0 0
    %283 = vmatpush1.bf16.msra.mxu0 0
    %284 = vmatprep.subr.bf16.mxu0 0
    %285 = vmatpush1.bf16.msra.mxu0 0
    %286 = vmatprep.subr.bf16.mxu0 0
    %287 = vmatpush1.bf16.msra.mxu0 0
    %288 = vmatprep.subr.bf16.mxu0 0
    %289 = vmatpush1.bf16.msra.mxu0 0
    %290 = vmatprep.subr.bf16.mxu0 0
    %291 = vmatpush1.bf16.msra.mxu0 0
    %292 = vmatprep.subr.bf16.mxu0 0
    %293 = vmatpush1.bf16.msra.mxu0 0
    %294 = vmatprep.subr.bf16.mxu0 0
    %295 = vmatpush1.bf16.msra.mxu0 0
    %296 = vmatprep.mubr.bf16.mxu0 0
    %297 = vmatmul.mubr.bf16.gmra.mrb[0].mxu0 %v262
    %v298 = vpop.f32.mrb[0].mxu0
    %v299 = vadd.f32 %v260, %v298
    %v300 = vpop.f32.mrb[0].mxu0
    %v301 = vpop.f32.mrb[0].mxu0
    %v302 = vpop.f32.mrb[0].mxu0
    %303 = vdwg.mxu0
    %v304 = vmax.f32 %v299, 0.0
    %v305 = vld [vmem:[#allocation2 + $0xcf] sm:$0xff]
    %v306 = vld [vmem:[#allocation2 + $0xd7] sm:$0xff]
    %v307 = vld [vmem:[#allocation2 + $0xdf] sm:$0xff]
    %v308 = vld [vmem:[#allocation2 + $0xe7] sm:$0xff]
    %v309 = vld [vmem:[#allocation2 + $0xef] sm:$0x1]
    %v310 = vpack.c.bf16 %v304, %v304
    %v311 = vpack.c.bf16 %v306, %v305
    %v312 = vpack.c.bf16 %v308, %v307
    %v313 = vlaneseq
    %v314 = vshrl.u32 %v313, 7
    %v315 = vsub.s32 0, %v314
    %v316 = vrot.slane %v309, %v315
    %v318 = vsel %vm39, %v310, 0
    %320 = vmatprep.subr.bf16.mxu0 0
    %321 = vmatpush1.bf16.msra.mxu0 %v311
    %322 = vmatprep.subr.bf16.mxu0 0
    %323 = vmatpush1.bf16.msra.mxu0 %v312
    %324 = vmatprep.subr.bf16.mxu0 0
    %325 = vmatpush1.bf16.msra.mxu0 0
    %326 = vmatprep.subr.bf16.mxu0 0
    %327 = vmatpush1.bf16.msra.mxu0 0
    %328 = vmatprep.subr.bf16.mxu0 0
    %329 = vmatpush1.bf16.msra.mxu0 0
    %330 = vmatprep.subr.bf16.mxu0 0
    %331 = vmatpush1.bf16.msra.mxu0 0
    %332 = vmatprep.subr.bf16.mxu0 0
    %333 = vmatpush1.bf16.msra.mxu0 0
    %334 = vmatprep.subr.bf16.mxu0 0
    %335 = vmatpush1.bf16.msra.mxu0 0
    %336 = vmatprep.subr.bf16.mxu0 0
    %337 = vmatpush1.bf16.msra.mxu0 0
    %338 = vmatprep.subr.bf16.mxu0 0
    %339 = vmatpush1.bf16.msra.mxu0 0
    %340 = vmatprep.subr.bf16.mxu0 0
    %341 = vmatpush1.bf16.msra.mxu0 0
    %342 = vmatprep.subr.bf16.mxu0 0
    %343 = vmatpush1.bf16.msra.mxu0 0
    %344 = vmatprep.subr.bf16.mxu0 0
    %345 = vmatpush1.bf16.msra.mxu0 0
    %346 = vmatprep.subr.bf16.mxu0 0
    %347 = vmatpush1.bf16.msra.mxu0 0
    %348 = vmatprep.subr.bf16.mxu0 0
    %349 = vmatpush1.bf16.msra.mxu0 0
    %350 = vmatprep.subr.bf16.mxu0 0
    %351 = vmatpush1.bf16.msra.mxu0 0
    %352 = vmatprep.mubr.bf16.mxu0 0
    %353 = vmatmul.mubr.bf16.gmra.mrb[0].mxu0 %v318
    %v354 = vpop.f32.mrb[0].mxu0
    %v355 = vadd.f32 %v316, %v354
    %v356 = vpop.f32.mrb[0].mxu0
    %v357 = vpop.f32.mrb[0].mxu0
    %v358 = vpop.f32.mrb[0].mxu0
    %359 = vdwg.mxu0
    %v360 = vmax.f32 %v355, 0.0
    %v361 = vld [vmem:[#allocation2 + $0xf0] sm:$0xff]
    %v362 = vld [vmem:[#allocation2 + $0xf8] sm:$0xff]
    %v363 = vld [vmem:[#allocation2 + $0x100] sm:$0xff]
    %v364 = vld [vmem:[#allocation2 + $0x108] sm:$0xff]
    %v365 = vld [vmem:[#allocation2 + $0x110] sm:$0x1]
    %v366 = vpack.c.bf16 %v360, %v360
    %v367 = vpack.c.bf16 %v362, %v361
    %v368 = vpack.c.bf16 %v364, %v363
    %v369 = vlaneseq
    %v370 = vshrl.u32 %v369, 7
    %v371 = vsub.s32 0, %v370
    %v372 = vrot.slane %v365, %v371
    %v374 = vsel %vm39, %v366, 0
    %376 = vmatprep.subr.bf16.mxu0 0
    %377 = vmatpush1.bf16.msra.mxu0 %v367
    %378 = vmatprep.subr.bf16.mxu0 0
    %379 = vmatpush1.bf16.msra.mxu0 %v368
    %380 = vmatprep.subr.bf16.mxu0 0
    %381 = vmatpush1.bf16.msra.mxu0 0
    %382 = vmatprep.subr.bf16.mxu0 0
    %383 = vmatpush1.bf16.msra.mxu0 0
    %384 = vmatprep.subr.bf16.mxu0 0
    %385 = vmatpush1.bf16.msra.mxu0 0
    %386 = vmatprep.subr.bf16.mxu0 0
    %387 = vmatpush1.bf16.msra.mxu0 0
    %388 = vmatprep.subr.bf16.mxu0 0
    %389 = vmatpush1.bf16.msra.mxu0 0
    %390 = vmatprep.subr.bf16.mxu0 0
    %391 = vmatpush1.bf16.msra.mxu0 0
    %392 = vmatprep.subr.bf16.mxu0 0
    %393 = vmatpush1.bf16.msra.mxu0 0
    %394 = vmatprep.subr.bf16.mxu0 0
    %395 = vmatpush1.bf16.msra.mxu0 0
    %396 = vmatprep.subr.bf16.mxu0 0
    %397 = vmatpush1.bf16.msra.mxu0 0
    %398 = vmatprep.subr.bf16.mxu0 0
    %399 = vmatpush1.bf16.msra.mxu0 0
    %400 = vmatprep.subr.bf16.mxu0 0
    %401 = vmatpush1.bf16.msra.mxu0 0
    %402 = vmatprep.subr.bf16.mxu0 0
    %403 = vmatpush1.bf16.msra.mxu0 0
    %404 = vmatprep.subr.bf16.mxu0 0
    %405 = vmatpush1.bf16.msra.mxu0 0
    %406 = vmatprep.subr.bf16.mxu0 0
    %407 = vmatpush1.bf16.msra.mxu0 0
    %408 = vmatprep.mubr.bf16.mxu0 0
    %409 = vmatmul.mubr.bf16.gmra.mrb[0].mxu0 %v374
    %v410 = vpop.f32.mrb[0].mxu0
    %v411 = vadd.f32 %v372, %v410
    %v412 = vpop.f32.mrb[0].mxu0
    %v413 = vpop.f32.mrb[0].mxu0
    %v414 = vpop.f32.mrb[0].mxu0
    %415 = vdwg.mxu0
    %vm416 = vcmask 130048
    %v417 = vsel %vm416, %v411, -inf
    %418 = vmax.xlane.f32.xlu0 %v417
    %v419 = vpop.xlane.xlu0 %418
    %v420 = vsub.f32 %v411, %v419
    %v421 = vmul.f32 %v420, 1.442695
    %v422 = vpow.pop %v421
    %v423 = vld [vmem:[#allocation2 + $0x4e6] sm:$0xff]
    %v424 = vld [vmem:[#allocation2 + $0x4ee] sm:$0xff]
    %v425 = vpack.c.bf16 %v422, %v422
    %v426 = vpack.c.bf16 %v424, %v423
    %v428 = vsel %vm416, %v425, 0
    %430 = vmatprep.subr.bf16.mxu0 0
    %431 = vmatpush1.bf16.msra.mxu0 %v426
    %432 = vmatprep.subr.bf16.mxu0 0
    %433 = vmatpush1.bf16.msra.mxu0 0
    %434 = vmatprep.subr.bf16.mxu0 0
    %435 = vmatpush1.bf16.msra.mxu0 0
    %436 = vmatprep.subr.bf16.mxu0 0
    %437 = vmatpush1.bf16.msra.mxu0 0
    %438 = vmatprep.subr.bf16.mxu0 0
    %439 = vmatpush1.bf16.msra.mxu0 0
    %440 = vmatprep.subr.bf16.mxu0 0
    %441 = vmatpush1.bf16.msra.mxu0 0
    %442 = vmatprep.subr.bf16.mxu0 0
    %443 = vmatpush1.bf16.msra.mxu0 0
    %444 = vmatprep.subr.bf16.mxu0 0
    %445 = vmatpush1.bf16.msra.mxu0 0
    %446 = vmatprep.subr.bf16.mxu0 0
    %447 = vmatpush1.bf16.msra.mxu0 0
    %448 = vmatprep.subr.bf16.mxu0 0
    %449 = vmatpush1.bf16.msra.mxu0 0
    %450 = vmatprep.subr.bf16.mxu0 0
    %451 = vmatpush1.bf16.msra.mxu0 0
    %452 = vmatprep.subr.bf16.mxu0 0
    %453 = vmatpush1.bf16.msra.mxu0 0
    %454 = vmatprep.subr.bf16.mxu0 0
    %455 = vmatpush1.bf16.msra.mxu0 0
    %456 = vmatprep.subr.bf16.mxu0 0
    %457 = vmatpush1.bf16.msra.mxu0 0
    %458 = vmatprep.subr.bf16.mxu0 0
    %459 = vmatpush1.bf16.msra.mxu0 0
    %460 = vmatprep.subr.bf16.mxu0 0
    %461 = vmatpush1.bf16.msra.mxu0 0
    %462 = vmatprep.mubr.bf16.mxu0 0
    %463 = vmatmul.mubr.bf16.gmra.mrb[0].mxu0 %v428
    %v464 = vpop.f32.mrb[0].mxu0
    %v465 = vadd.f32 0.0, %v464
    %v466 = vpop.f32.mrb[0].mxu0
    %v467 = vpop.f32.mrb[0].mxu0
    %v468 = vpop.f32.mrb[0].mxu0
    %469 = vdwg.mxu0
    %v470 = vrcp.pop %v465
    %v471 = vmul.f32 %v422, %v470
    %v472 = vld [vmem:[#allocation2 + $0x111] sm:$0xff]
    %v473 = vld [vmem:[#allocation2 + $0x119] sm:$0xff]
    %v474 = vld [vmem:[#allocation2 + $0x121] sm:$0x1]
    %v475 = vpack.c.bf16 %v471, %v471
    %v476 = vpack.c.bf16 %v473, %v472
    %v477 = vlaneseq
    %v478 = vshrl.u32 %v477, 7
    %v479 = vsub.s32 0, %v478
    %v480 = vrot.slane %v474, %v479
    %v482 = vsel %vm416, %v475, 0
    %484 = vmatprep.subr.bf16.mxu0 0
    %485 = vmatpush1.bf16.msra.mxu0 %v476
    %486 = vmatprep.subr.bf16.mxu0 0
    %487 = vmatpush1.bf16.msra.mxu0 0
    %488 = vmatprep.subr.bf16.mxu0 0
    %489 = vmatpush1.bf16.msra.mxu0 0
    %490 = vmatprep.subr.bf16.mxu0 0
    %491 = vmatpush1.bf16.msra.mxu0 0
    %492 = vmatprep.subr.bf16.mxu0 0
    %493 = vmatpush1.bf16.msra.mxu0 0
    %494 = vmatprep.subr.bf16.mxu0 0
    %495 = vmatpush1.bf16.msra.mxu0 0
    %496 = vmatprep.subr.bf16.mxu0 0
    %497 = vmatpush1.bf16.msra.mxu0 0
    %498 = vmatprep.subr.bf16.mxu0 0
    %499 = vmatpush1.bf16.msra.mxu0 0
    %500 = vmatprep.subr.bf16.mxu0 0
    %501 = vmatpush1.bf16.msra.mxu0 0
    %502 = vmatprep.subr.bf16.mxu0 0
    %503 = vmatpush1.bf16.msra.mxu0 0
    %504 = vmatprep.subr.bf16.mxu0 0
    %505 = vmatpush1.bf16.msra.mxu0 0
    %506 = vmatprep.subr.bf16.mxu0 0
    %507 = vmatpush1.bf16.msra.mxu0 0
    %508 = vmatprep.subr.bf16.mxu0 0
    %509 = vmatpush1.bf16.msra.mxu0 0
    %510 = vmatprep.subr.bf16.mxu0 0
    %511 = vmatpush1.bf16.msra.mxu0 0
    %512 = vmatprep.subr.bf16.mxu0 0
    %513 = vmatpush1.bf16.msra.mxu0 0
    %514 = vmatprep.subr.bf16.mxu0 0
    %515 = vmatpush1.bf16.msra.mxu0 0
    %516 = vmatprep.mubr.bf16.mxu0 0
    %517 = vmatmul.mubr.bf16.gmra.mrb[0].mxu0 %v482
    %v518 = vpop.f32.mrb[0].mxu0
    %v519 = vadd.f32 %v480, %v518
    %v520 = vpop.f32.mrb[0].mxu0
    %v521 = vpop.f32.mrb[0].mxu0
    %v522 = vpop.f32.mrb[0].mxu0
    %523 = vdwg.mxu0
    %v524 = vmul.f32 %v519, %v355
    %v525 = vmax.f32 %v524, 0.0
    %v526 = vld [vmem:[#allocation2 + $0x122] sm:$0xff]
    %v527 = vld [vmem:[#allocation2 + $0x12a] sm:$0xff]
    %v528 = vld [vmem:[#allocation2 + $0x132] sm:$0xff]
    %v529 = vld [vmem:[#allocation2 + $0x13a] sm:$0xff]
    %v530 = vld [vmem:[#allocation2 + $0x142] sm:$0x1]
    %v531 = vpack.c.bf16 %v525, %v525
    %v532 = vpack.c.bf16 %v527, %v526
    %v533 = vpack.c.bf16 %v529, %v528
    %v534 = vlaneseq
    %v535 = vshrl.u32 %v534, 7
    %v536 = vsub.s32 0, %v535
    %v537 = vrot.slane %v530, %v536
    %v539 = vsel %vm39, %v531, 0
    %541 = vmatprep.subr.bf16.mxu0 0
    %542 = vmatpush1.bf16.msra.mxu0 %v532
    %543 = vmatprep.subr.bf16.mxu0 0
    %544 = vmatpush1.bf16.msra.mxu0 %v533
    %545 = vmatprep.subr.bf16.mxu0 0
    %546 = vmatpush1.bf16.msra.mxu0 0
    %547 = vmatprep.subr.bf16.mxu0 0
    %548 = vmatpush1.bf16.msra.mxu0 0
    %549 = vmatprep.subr.bf16.mxu0 0
    %550 = vmatpush1.bf16.msra.mxu0 0
    %551 = vmatprep.subr.bf16.mxu0 0
    %552 = vmatpush1.bf16.msra.mxu0 0
    %553 = vmatprep.subr.bf16.mxu0 0
    %554 = vmatpush1.bf16.msra.mxu0 0
    %555 = vmatprep.subr.bf16.mxu0 0
    %556 = vmatpush1.bf16.msra.mxu0 0
    %557 = vmatprep.subr.bf16.mxu0 0
    %558 = vmatpush1.bf16.msra.mxu0 0
    %559 = vmatprep.subr.bf16.mxu0 0
    %560 = vmatpush1.bf16.msra.mxu0 0
    %561 = vmatprep.subr.bf16.mxu0 0
    %562 = vmatpush1.bf16.msra.mxu0 0
    %563 = vmatprep.subr.bf16.mxu0 0
    %564 = vmatpush1.bf16.msra.mxu0 0
    %565 = vmatprep.subr.bf16.mxu0 0
    %566 = vmatpush1.bf16.msra.mxu0 0
    %567 = vmatprep.subr.bf16.mxu0 0
    %568 = vmatpush1.bf16.msra.mxu0 0
    %569 = vmatprep.subr.bf16.mxu0 0
    %570 = vmatpush1.bf16.msra.mxu0 0
    %571 = vmatprep.subr.bf16.mxu0 0
    %572 = vmatpush1.bf16.msra.mxu0 0
    %573 = vmatprep.mubr.bf16.mxu0 0
    %574 = vmatmul.mubr.bf16.gmra.mrb[0].mxu0 %v539
    %v575 = vpop.f32.mrb[0].mxu0
    %v576 = vadd.f32 %v537, %v575
    %v577 = vpop.f32.mrb[0].mxu0
    %v578 = vpop.f32.mrb[0].mxu0
    %v579 = vpop.f32.mrb[0].mxu0
    %580 = vdwg.mxu0
    %v581 = vsel %vm416, %v576, -inf
    %582 = vmax.xlane.f32.xlu0 %v581
    %v583 = vpop.xlane.xlu0 %582
    %v584 = vsub.f32 %v576, %v583
    %v585 = vmul.f32 %v584, 1.442695
    %v586 = vpow.pop %v585
    %v587 = vpack.c.bf16 %v586, %v586
    %v589 = vsel %vm416, %v587, 0
    %591 = vmatprep.subr.bf16.mxu0 0
    %592 = vmatpush1.bf16.msra.mxu0 %v426
    %593 = vmatprep.subr.bf16.mxu0 0
    %594 = vmatpush1.bf16.msra.mxu0 0
    %595 = vmatprep.subr.bf16.mxu0 0
    %596 = vmatpush1.bf16.msra.mxu0 0
    %597 = vmatprep.subr.bf16.mxu0 0
    %598 = vmatpush1.bf16.msra.mxu0 0
    %599 = vmatprep.subr.bf16.mxu0 0
    %600 = vmatpush1.bf16.msra.mxu0 0
    %601 = vmatprep.subr.bf16.mxu0 0
    %602 = vmatpush1.bf16.msra.mxu0 0
    %603 = vmatprep.subr.bf16.mxu0 0
    %604 = vmatpush1.bf16.msra.mxu0 0
    %605 = vmatprep.subr.bf16.mxu0 0
    %606 = vmatpush1.bf16.msra.mxu0 0
    %607 = vmatprep.subr.bf16.mxu0 0
    %608 = vmatpush1.bf16.msra.mxu0 0
    %609 = vmatprep.subr.bf16.mxu0 0
    %610 = vmatpush1.bf16.msra.mxu0 0
    %611 = vmatprep.subr.bf16.mxu0 0
    %612 = vmatpush1.bf16.msra.mxu0 0
    %613 = vmatprep.subr.bf16.mxu0 0
    %614 = vmatpush1.bf16.msra.mxu0 0
    %615 = vmatprep.subr.bf16.mxu0 0
    %616 = vmatpush1.bf16.msra.mxu0 0
    %617 = vmatprep.subr.bf16.mxu0 0
    %618 = vmatpush1.bf16.msra.mxu0 0
    %619 = vmatprep.subr.bf16.mxu0 0
    %620 = vmatpush1.bf16.msra.mxu0 0
    %621 = vmatprep.subr.bf16.mxu0 0
    %622 = vmatpush1.bf16.msra.mxu0 0
    %623 = vmatprep.mubr.bf16.mxu0 0
    %624 = vmatmul.mubr.bf16.gmra.mrb[0].mxu0 %v589
    %v625 = vpop.f32.mrb[0].mxu0
    %v626 = vadd.f32 0.0, %v625
    %v627 = vpop.f32.mrb[0].mxu0
    %v628 = vpop.f32.mrb[0].mxu0
    %v629 = vpop.f32.mrb[0].mxu0
    %630 = vdwg.mxu0
    %v631 = vrcp.pop %v626
    %v632 = vmul.f32 %v586, %v631
    %v633 = vld [vmem:[#allocation2 + $0x143] sm:$0xff]
    %v634 = vld [vmem:[#allocation2 + $0x14b] sm:$0xff]
    %v635 = vld [vmem:[#allocation2 + $0x153] sm:$0x1]
    %v636 = vpack.c.bf16 %v634, %v633
    %v637 = vlaneseq
    %v638 = vshrl.u32 %v637, 7
    %v639 = vsub.s32 0, %v638
    %v640 = vrot.slane %v635, %v639
    %641 = vmatprep.subr.bf16.mxu0 0
    %642 = vmatpush1.bf16.msra.mxu0 %v636
    %643 = vmatprep.subr.bf16.mxu0 0
    %644 = vmatpush1.bf16.msra.mxu0 0
    %645 = vmatprep.subr.bf16.mxu0 0
    %646 = vmatpush1.bf16.msra.mxu0 0
    %647 = vmatprep.subr.bf16.mxu0 0
    %648 = vmatpush1.bf16.msra.mxu0 0
    %649 = vmatprep.subr.bf16.mxu0 0
    %650 = vmatpush1.bf16.msra.mxu0 0
    %651 = vmatprep.subr.bf16.mxu0 0
    %652 = vmatpush1.bf16.msra.mxu0 0
    %653 = vmatprep.subr.bf16.mxu0 0
    %654 = vmatpush1.bf16.msra.mxu0 0
    %655 = vmatprep.subr.bf16.mxu0 0
    %656 = vmatpush1.bf16.msra.mxu0 0
    %657 = vmatprep.subr.bf16.mxu0 0
    %658 = vmatpush1.bf16.msra.mxu0 0
    %659 = vmatprep.subr.bf16.mxu0 0
    %660 = vmatpush1.bf16.msra.mxu0 0
    %661 = vmatprep.subr.bf16.mxu0 0
    %662 = vmatpush1.bf16.msra.mxu0 0
    %663 = vmatprep.subr.bf16.mxu0 0
    %664 = vmatpush1.bf16.msra.mxu0 0
    %665 = vmatprep.subr.bf16.mxu0 0
    %666 = vmatpush1.bf16.msra.mxu0 0
    %667 = vmatprep.subr.bf16.mxu0 0
    %668 = vmatpush1.bf16.msra.mxu0 0
    %669 = vmatprep.subr.bf16.mxu0 0
    %670 = vmatpush1.bf16.msra.mxu0 0
    %671 = vmatprep.subr.bf16.mxu0 0
    %672 = vmatpush1.bf16.msra.mxu0 0
    %673 = vmatprep.mubr.bf16.mxu0 0
    %674 = vmatmul.mubr.bf16.gmra.mrb[0].mxu0 %v482
    %v675 = vpop.f32.mrb[0].mxu0
    %v676 = vadd.f32 %v640, %v675
    %v677 = vpop.f32.mrb[0].mxu0
    %v678 = vpop.f32.mrb[0].mxu0
    %v679 = vpop.f32.mrb[0].mxu0
    %680 = vdwg.mxu0
    %v681 = vld [vmem:[#allocation2 + $0x154] sm:$0xff]
    %v682 = vld [vmem:[#allocation2 + $0x15c] sm:$0xff]
    %v683 = vld [vmem:[#allocation2 + $0x164] sm:$0x1]
    %v684 = vpack.c.bf16 %v632, %v632
    %v685 = vpack.c.bf16 %v682, %v681
    %v686 = vlaneseq
    %v687 = vshrl.u32 %v686, 7
    %v688 = vsub.s32 0, %v687
    %v689 = vrot.slane %v683, %v688
    %v691 = vsel %vm416, %v684, 0
    %693 = vmatprep.subr.bf16.mxu0 0
    %694 = vmatpush1.bf16.msra.mxu0 %v685
    %695 = vmatprep.subr.bf16.mxu0 0
    %696 = vmatpush1.bf16.msra.mxu0 0
    %697 = vmatprep.subr.bf16.mxu0 0
    %698 = vmatpush1.bf16.msra.mxu0 0
    %699 = vmatprep.subr.bf16.mxu0 0
    %700 = vmatpush1.bf16.msra.mxu0 0
    %701 = vmatprep.subr.bf16.mxu0 0
    %702 = vmatpush1.bf16.msra.mxu0 0
    %703 = vmatprep.subr.bf16.mxu0 0
    %704 = vmatpush1.bf16.msra.mxu0 0
    %705 = vmatprep.subr.bf16.mxu0 0
    %706 = vmatpush1.bf16.msra.mxu0 0
    %707 = vmatprep.subr.bf16.mxu0 0
    %708 = vmatpush1.bf16.msra.mxu0 0
    %709 = vmatprep.subr.bf16.mxu0 0
    %710 = vmatpush1.bf16.msra.mxu0 0
    %711 = vmatprep.subr.bf16.mxu0 0
    %712 = vmatpush1.bf16.msra.mxu0 0
    %713 = vmatprep.subr.bf16.mxu0 0
    %714 = vmatpush1.bf16.msra.mxu0 0
    %715 = vmatprep.subr.bf16.mxu0 0
    %716 = vmatpush1.bf16.msra.mxu0 0
    %717 = vmatprep.subr.bf16.mxu0 0
    %718 = vmatpush1.bf16.msra.mxu0 0
    %719 = vmatprep.subr.bf16.mxu0 0
    %720 = vmatpush1.bf16.msra.mxu0 0
    %721 = vmatprep.subr.bf16.mxu0 0
    %722 = vmatpush1.bf16.msra.mxu0 0
    %723 = vmatprep.subr.bf16.mxu0 0
    %724 = vmatpush1.bf16.msra.mxu0 0
    %725 = vmatprep.mubr.bf16.mxu0 0
    %726 = vmatmul.mubr.bf16.gmra.mrb[0].mxu0 %v691
    %v727 = vpop.f32.mrb[0].mxu0
    %v728 = vadd.f32 %v689, %v727
    %v729 = vpop.f32.mrb[0].mxu0
    %v730 = vpop.f32.mrb[0].mxu0
    %v731 = vpop.f32.mrb[0].mxu0
    %732 = vdwg.mxu0
    %v733 = vadd.f32 %v676, %v728
    %v734 = vmul.f32 %v733, %v355
    %v735 = vmax.f32 %v734, 0.0
    %v736 = vld [vmem:[#allocation2 + $0x165] sm:$0xff]
    %v737 = vld [vmem:[#allocation2 + $0x16d] sm:$0xff]
    %v738 = vld [vmem:[#allocation2 + $0x175] sm:$0xff]
    %v739 = vld [vmem:[#allocation2 + $0x17d] sm:$0xff]
    %v740 = vld [vmem:[#allocation2 + $0x185] sm:$0x1]
    %v741 = vpack.c.bf16 %v735, %v735
    %v742 = vpack.c.bf16 %v737, %v736
    %v743 = vpack.c.bf16 %v739, %v738
    %v744 = vlaneseq
    %v745 = vshrl.u32 %v744, 7
    %v746 = vsub.s32 0, %v745
    %v747 = vrot.slane %v740, %v746
    %v749 = vsel %vm39, %v741, 0
    %751 = vmatprep.subr.bf16.mxu0 0
    %752 = vmatpush1.bf16.msra.mxu0 %v742
    %753 = vmatprep.subr.bf16.mxu0 0
    %754 = vmatpush1.bf16.msra.mxu0 %v743
    %755 = vmatprep.subr.bf16.mxu0 0
    %756 = vmatpush1.bf16.msra.mxu0 0
    %757 = vmatprep.subr.bf16.mxu0 0
    %758 = vmatpush1.bf16.msra.mxu0 0
    %759 = vmatprep.subr.bf16.mxu0 0
    %760 = vmatpush1.bf16.msra.mxu0 0
    %761 = vmatprep.subr.bf16.mxu0 0
    %762 = vmatpush1.bf16.msra.mxu0 0
    %763 = vmatprep.subr.bf16.mxu0 0
    %764 = vmatpush1.bf16.msra.mxu0 0
    %765 = vmatprep.subr.bf16.mxu0 0
    %766 = vmatpush1.bf16.msra.mxu0 0
    %767 = vmatprep.subr.bf16.mxu0 0
    %768 = vmatpush1.bf16.msra.mxu0 0
    %769 = vmatprep.subr.bf16.mxu0 0
    %770 = vmatpush1.bf16.msra.mxu0 0
    %771 = vmatprep.subr.bf16.mxu0 0
    %772 = vmatpush1.bf16.msra.mxu0 0
    %773 = vmatprep.subr.bf16.mxu0 0
    %774 = vmatpush1.bf16.msra.mxu0 0
    %775 = vmatprep.subr.bf16.mxu0 0
    %776 = vmatpush1.bf16.msra.mxu0 0
    %777 = vmatprep.subr.bf16.mxu0 0
    %778 = vmatpush1.bf16.msra.mxu0 0
    %779 = vmatprep.subr.bf16.mxu0 0
    %780 = vmatpush1.bf16.msra.mxu0 0
    %781 = vmatprep.subr.bf16.mxu0 0
    %782 = vmatpush1.bf16.msra.mxu0 0
    %783 = vmatprep.mubr.bf16.mxu0 0
    %784 = vmatmul.mubr.bf16.gmra.mrb[0].mxu0 %v749
    %v785 = vpop.f32.mrb[0].mxu0
    %v786 = vadd.f32 %v747, %v785
    %v787 = vpop.f32.mrb[0].mxu0
    %v788 = vpop.f32.mrb[0].mxu0
    %v789 = vpop.f32.mrb[0].mxu0
    %790 = vdwg.mxu0
    %vm791 = vcmask 31744
    %v792 = vsel %vm791, %v786, -inf
    %793 = vmax.xlane.f32.xlu0 %v792
    %v794 = vpop.xlane.xlu0 %793
    %v795 = vsub.f32 %v786, %v794
    %v796 = vmul.f32 %v795, 1.442695
    %v797 = vpow.pop %v796
    %v798 = vsel %vm791, %v797, 0.0
    %799 = vadd.xlane.f32.xlu0 %v798
    %v800 = vpop.xlane.xlu0 %799
    %v801 = vrcp.pop %v800
    %v802 = vmul.f32 %v797, %v801
    %v803 = vld [vmem:[#allocation2 + $0x186] sm:$0xff]
    %v804 = vld [vmem:[#allocation2 + $0x18e] sm:$0xff]
    %v805 = vld [vmem:[#allocation2 + $0x196] sm:$0xff]
    %v806 = vld [vmem:[#allocation2 + $0x19e] sm:$0xff]
    %v807 = vld [vmem:[#allocation2 + $0x1a6] sm:$0x1]
    %v808 = vpack.c.bf16 %v247, %v247
    %v809 = vpack.c.bf16 %v804, %v803
    %v810 = vpack.c.bf16 %v806, %v805
    %v811 = vlaneseq
    %v812 = vshrl.u32 %v811, 7
    %v813 = vsub.s32 0, %v812
    %v814 = vrot.slane %v807, %v813
    %v816 = vsel %vm39, %v808, 0
    %818 = vmatprep.subr.bf16.mxu0 0
    %819 = vmatpush1.bf16.msra.mxu0 %v809
    %820 = vmatprep.subr.bf16.mxu0 0
    %821 = vmatpush1.bf16.msra.mxu0 %v810
    %822 = vmatprep.subr.bf16.mxu0 0
    %823 = vmatpush1.bf16.msra.mxu0 0
    %824 = vmatprep.subr.bf16.mxu0 0
    %825 = vmatpush1.bf16.msra.mxu0 0
    %826 = vmatprep.subr.bf16.mxu0 0
    %827 = vmatpush1.bf16.msra.mxu0 0
    %828 = vmatprep.subr.bf16.mxu0 0
    %829 = vmatpush1.bf16.msra.mxu0 0
    %830 = vmatprep.subr.bf16.mxu0 0
    %831 = vmatpush1.bf16.msra.mxu0 0
    %832 = vmatprep.subr.bf16.mxu0 0
    %833 = vmatpush1.bf16.msra.mxu0 0
    %834 = vmatprep.subr.bf16.mxu0 0
    %835 = vmatpush1.bf16.msra.mxu0 0
    %836 = vmatprep.subr.bf16.mxu0 0
    %837 = vmatpush1.bf16.msra.mxu0 0
    %838 = vmatprep.subr.bf16.mxu0 0
    %839 = vmatpush1.bf16.msra.mxu0 0
    %840 = vmatprep.subr.bf16.mxu0 0
    %841 = vmatpush1.bf16.msra.mxu0 0
    %842 = vmatprep.subr.bf16.mxu0 0
    %843 = vmatpush1.bf16.msra.mxu0 0
    %844 = vmatprep.subr.bf16.mxu0 0
    %845 = vmatpush1.bf16.msra.mxu0 0
    %846 = vmatprep.subr.bf16.mxu0 0
    %847 = vmatpush1.bf16.msra.mxu0 0
    %848 = vmatprep.subr.bf16.mxu0 0
    %849 = vmatpush1.bf16.msra.mxu0 0
    %850 = vmatprep.mubr.bf16.mxu0 0
    %851 = vmatmul.mubr.bf16.gmra.mrb[0].mxu0 %v816
    %v852 = vpop.f32.mrb[0].mxu0
    %v853 = vadd.f32 %v814, %v852
    %v854 = vpop.f32.mrb[0].mxu0
    %v855 = vpop.f32.mrb[0].mxu0
    %v856 = vpop.f32.mrb[0].mxu0
    %857 = vdwg.mxu0
    %v858 = vld [vmem:[#allocation2 + $0x4f6] sm:$0xff]
    %v859 = vld [vmem:[#allocation2 + $0x4fe] sm:$0xff]
    %v860 = vpack.c.bf16 %v859, %v858
    %861 = vmatprep.subr.bf16.mxu0 0
    %862 = vmatpush1.bf16.msra.mxu0 %v860
    %863 = vmatprep.subr.bf16.mxu0 0
    %864 = vmatpush1.bf16.msra.mxu0 0
    %865 = vmatprep.subr.bf16.mxu0 0
    %866 = vmatpush1.bf16.msra.mxu0 0
    %867 = vmatprep.subr.bf16.mxu0 0
    %868 = vmatpush1.bf16.msra.mxu0 0
    %869 = vmatprep.subr.bf16.mxu0 0
    %870 = vmatpush1.bf16.msra.mxu0 0
    %871 = vmatprep.subr.bf16.mxu0 0
    %872 = vmatpush1.bf16.msra.mxu0 0
    %873 = vmatprep.subr.bf16.mxu0 0
    %874 = vmatpush1.bf16.msra.mxu0 0
    %875 = vmatprep.subr.bf16.mxu0 0
    %876 = vmatpush1.bf16.msra.mxu0 0
    %877 = vmatprep.subr.bf16.mxu0 0
    %878 = vmatpush1.bf16.msra.mxu0 0
    %879 = vmatprep.subr.bf16.mxu0 0
    %880 = vmatpush1.bf16.msra.mxu0 0
    %881 = vmatprep.subr.bf16.mxu0 0
    %882 = vmatpush1.bf16.msra.mxu0 0
    %883 = vmatprep.subr.bf16.mxu0 0
    %884 = vmatpush1.bf16.msra.mxu0 0
    %885 = vmatprep.subr.bf16.mxu0 0
    %886 = vmatpush1.bf16.msra.mxu0 0
    %887 = vmatprep.subr.bf16.mxu0 0
    %888 = vmatpush1.bf16.msra.mxu0 0
    %889 = vmatprep.subr.bf16.mxu0 0
    %890 = vmatpush1.bf16.msra.mxu0 0
    %891 = vmatprep.subr.bf16.mxu0 0
    %892 = vmatpush1.bf16.msra.mxu0 0
    %893 = vmatprep.mubr.bf16.mxu0 0
    %894 = vmatmul.mubr.bf16.gmra.mrb[0].mxu0 %v482
    %v895 = vpop.f32.mrb[0].mxu0
    %v896 = vadd.f32 0.0, %v895
    %v897 = vpop.f32.mrb[0].mxu0
    %v898 = vpop.f32.mrb[0].mxu0
    %v899 = vpop.f32.mrb[0].mxu0
    %900 = vdwg.mxu0
    %v901 = vmul.f32 %v896, %v853
    %v902 = vld [vmem:[#allocation2 + $0x506] sm:$0xff]
    %v903 = vld [vmem:[#allocation2 + $0x50e] sm:$0xff]
    %v904 = vpack.c.bf16 %v903, %v902
    %905 = vmatprep.subr.bf16.mxu0 0
    %906 = vmatpush1.bf16.msra.mxu0 %v904
    %907 = vmatprep.subr.bf16.mxu0 0
    %908 = vmatpush1.bf16.msra.mxu0 0
    %909 = vmatprep.subr.bf16.mxu0 0
    %910 = vmatpush1.bf16.msra.mxu0 0
    %911 = vmatprep.subr.bf16.mxu0 0
    %912 = vmatpush1.bf16.msra.mxu0 0
    %913 = vmatprep.subr.bf16.mxu0 0
    %914 = vmatpush1.bf16.msra.mxu0 0
    %915 = vmatprep.subr.bf16.mxu0 0
    %916 = vmatpush1.bf16.msra.mxu0 0
    %917 = vmatprep.subr.bf16.mxu0 0
    %918 = vmatpush1.bf16.msra.mxu0 0
    %919 = vmatprep.subr.bf16.mxu0 0
    %920 = vmatpush1.bf16.msra.mxu0 0
    %921 = vmatprep.subr.bf16.mxu0 0
    %922 = vmatpush1.bf16.msra.mxu0 0
    %923 = vmatprep.subr.bf16.mxu0 0
    %924 = vmatpush1.bf16.msra.mxu0 0
    %925 = vmatprep.subr.bf16.mxu0 0
    %926 = vmatpush1.bf16.msra.mxu0 0
    %927 = vmatprep.subr.bf16.mxu0 0
    %928 = vmatpush1.bf16.msra.mxu0 0
    %929 = vmatprep.subr.bf16.mxu0 0
    %930 = vmatpush1.bf16.msra.mxu0 0
    %931 = vmatprep.subr.bf16.mxu0 0
    %932 = vmatpush1.bf16.msra.mxu0 0
    %933 = vmatprep.subr.bf16.mxu0 0
    %934 = vmatpush1.bf16.msra.mxu0 0
    %935 = vmatprep.subr.bf16.mxu0 0
    %936 = vmatpush1.bf16.msra.mxu0 0
    %937 = vmatprep.mubr.bf16.mxu0 0
    %938 = vmatmul.mubr.bf16.gmra.mrb[0].mxu0 %v482
    %v939 = vpop.f32.mrb[0].mxu0
    %v940 = vadd.f32 0.0, %v939
    %v941 = vpop.f32.mrb[0].mxu0
    %v942 = vpop.f32.mrb[0].mxu0
    %v943 = vpop.f32.mrb[0].mxu0
    %944 = vdwg.mxu0
    %v945 = vld [vmem:[#allocation2 + $0x536] sm:$0xff]
    %v946 = vld [vmem:[#allocation2 + $0x53e] sm:$0xff]
    %v947 = vld [vmem:[#allocation2 + $0x546] sm:$0xff]
    %v948 = vld [vmem:[#allocation2 + $0x54e] sm:$0xff]
    %v949 = vld [vmem:[#allocation2 + $0x556] sm:$0xff]
    %v950 = vld [vmem:[#allocation2 + $0x55e] sm:$0xff]
    %v951 = vld [vmem:[#allocation2 + $0x566] sm:$0xff]
    %v952 = vld [vmem:[#allocation2 + $0x56e] sm:$0xff]
    %v953 = vld [vmem:[#allocation2 + $0x576] sm:$0xff]
    %v954 = vld [vmem:[#allocation2 + $0x57e] sm:$0xff]
    %v955 = vld [vmem:[#allocation2 + $0x586] sm:$0xff]
    %v956 = vld [vmem:[#allocation2 + $0x58e] sm:$0xff]
    %v957 = vld [vmem:[#allocation2 + $0x596] sm:$0xff]
    %v958 = vld [vmem:[#allocation2 + $0x59e] sm:$0xff]
    %v959 = vld [vmem:[#allocation2 + $0x5a6] sm:$0xff]
    %v960 = vld [vmem:[#allocation2 + $0x5ae] sm:$0xff]
    %v961 = vpack.c.bf16 %v853, %v853
    %v962 = vpack.c.bf16 %v946, %v945
    %v963 = vpack.c.bf16 %v948, %v947
    %v964 = vpack.c.bf16 %v950, %v949
    %v965 = vpack.c.bf16 %v952, %v951
    %v966 = vpack.c.bf16 %v954, %v953
    %v967 = vpack.c.bf16 %v956, %v955
    %v968 = vpack.c.bf16 %v958, %v957
    %v969 = vpack.c.bf16 %v960, %v959
    %970 = vmatprep.subr.bf16.mxu0 0
    %971 = vmatpush1.bf16.msra.mxu0 %v962
    %972 = vmatprep.subr.bf16.mxu0 0
    %973 = vmatpush1.bf16.msra.mxu0 %v963
    %974 = vmatprep.subr.bf16.mxu0 0
    %975 = vmatpush1.bf16.msra.mxu0 %v964
    %976 = vmatprep.subr.bf16.mxu0 0
    %977 = vmatpush1.bf16.msra.mxu0 %v965
    %978 = vmatprep.subr.bf16.mxu0 0
    %979 = vmatpush1.bf16.msra.mxu0 %v966
    %980 = vmatprep.subr.bf16.mxu0 0
    %981 = vmatpush1.bf16.msra.mxu0 %v967
    %982 = vmatprep.subr.bf16.mxu0 0
    %983 = vmatpush1.bf16.msra.mxu0 %v968
    %984 = vmatprep.subr.bf16.mxu0 0
    %985 = vmatpush1.bf16.msra.mxu0 %v969
    %986 = vmatprep.subr.bf16.mxu0 0
    %987 = vmatpush1.bf16.msra.mxu0 0
    %988 = vmatprep.subr.bf16.mxu0 0
    %989 = vmatpush1.bf16.msra.mxu0 0
    %990 = vmatprep.subr.bf16.mxu0 0
    %991 = vmatpush1.bf16.msra.mxu0 0
    %992 = vmatprep.subr.bf16.mxu0 0
    %993 = vmatpush1.bf16.msra.mxu0 0
    %994 = vmatprep.subr.bf16.mxu0 0
    %995 = vmatpush1.bf16.msra.mxu0 0
    %996 = vmatprep.subr.bf16.mxu0 0
    %997 = vmatpush1.bf16.msra.mxu0 0
    %998 = vmatprep.subr.bf16.mxu0 0
    %999 = vmatpush1.bf16.msra.mxu0 0
    %1000 = vmatprep.subr.bf16.mxu0 0
    %1001 = vmatpush1.bf16.msra.mxu0 0
    %1002 = vmatprep.mubr.bf16.mxu0 0
    %1003 = vmatmul.mubr.bf16.gmra.mrb[0].mxu0 %v961
    %v1004 = vpop.f32.mrb[0].mxu0
    %v1005 = vadd.f32 0.0, %v1004
    %v1006 = vpop.f32.mrb[0].mxu0
    %v1007 = vpop.f32.mrb[0].mxu0
    %v1008 = vpop.f32.mrb[0].mxu0
    %1009 = vdwg.mxu0
    %v1010 = vmul.f32 %v940, %v1005
    %v1011 = vadd.f32 %v901, %v1010
    %v1012 = vld [vmem:[#allocation2 + $0x516] sm:$0xff]
    %v1013 = vld [vmem:[#allocation2 + $0x51e] sm:$0xff]
    %v1014 = vpack.c.bf16 %v1013, %v1012
    %1015 = vmatprep.subr.bf16.mxu0 0
    %1016 = vmatpush1.bf16.msra.mxu0 %v1014
    %1017 = vmatprep.subr.bf16.mxu0 0
    %1018 = vmatpush1.bf16.msra.mxu0 0
    %1019 = vmatprep.subr.bf16.mxu0 0
    %1020 = vmatpush1.bf16.msra.mxu0 0
    %1021 = vmatprep.subr.bf16.mxu0 0
    %1022 = vmatpush1.bf16.msra.mxu0 0
    %1023 = vmatprep.subr.bf16.mxu0 0
    %1024 = vmatpush1.bf16.msra.mxu0 0
    %1025 = vmatprep.subr.bf16.mxu0 0
    %1026 = vmatpush1.bf16.msra.mxu0 0
    %1027 = vmatprep.subr.bf16.mxu0 0
    %1028 = vmatpush1.bf16.msra.mxu0 0
    %1029 = vmatprep.subr.bf16.mxu0 0
    %1030 = vmatpush1.bf16.msra.mxu0 0
    %1031 = vmatprep.subr.bf16.mxu0 0
    %1032 = vmatpush1.bf16.msra.mxu0 0
    %1033 = vmatprep.subr.bf16.mxu0 0
    %1034 = vmatpush1.bf16.msra.mxu0 0
    %1035 = vmatprep.subr.bf16.mxu0 0
    %1036 = vmatpush1.bf16.msra.mxu0 0
    %1037 = vmatprep.subr.bf16.mxu0 0
    %1038 = vmatpush1.bf16.msra.mxu0 0
    %1039 = vmatprep.subr.bf16.mxu0 0
    %1040 = vmatpush1.bf16.msra.mxu0 0
    %1041 = vmatprep.subr.bf16.mxu0 0
    %1042 = vmatpush1.bf16.msra.mxu0 0
    %1043 = vmatprep.subr.bf16.mxu0 0
    %1044 = vmatpush1.bf16.msra.mxu0 0
    %1045 = vmatprep.subr.bf16.mxu0 0
    %1046 = vmatpush1.bf16.msra.mxu0 0
    %1047 = vmatprep.mubr.bf16.mxu0 0
    %1048 = vmatmul.mubr.bf16.gmra.mrb[0].mxu0 %v482
    %v1049 = vpop.f32.mrb[0].mxu0
    %v1050 = vadd.f32 0.0, %v1049
    %v1051 = vpop.f32.mrb[0].mxu0
    %v1052 = vpop.f32.mrb[0].mxu0
    %v1053 = vpop.f32.mrb[0].mxu0
    %1054 = vdwg.mxu0
    %v1055 = vld [vmem:[#allocation2 + $0x5b6] sm:$0xff]
    %v1056 = vld [vmem:[#allocation2 + $0x5be] sm:$0xff]
    %v1057 = vld [vmem:[#allocation2 + $0x5c6] sm:$0xff]
    %v1058 = vld [vmem:[#allocation2 + $0x5ce] sm:$0xff]
    %v1059 = vld [vmem:[#allocation2 + $0x5d6] sm:$0xff]
    %v1060 = vld [vmem:[#allocation2 + $0x5de] sm:$0xff]
    %v1061 = vld [vmem:[#allocation2 + $0x5e6] sm:$0xff]
    %v1062 = vld [vmem:[#allocation2 + $0x5ee] sm:$0xff]
    %v1063 = vld [vmem:[#allocation2 + $0x5f6] sm:$0xff]
    %v1064 = vld [vmem:[#allocation2 + $0x5fe] sm:$0xff]
    %v1065 = vld [vmem:[#allocation2 + $0x606] sm:$0xff]
    %v1066 = vld [vmem:[#allocation2 + $0x60e] sm:$0xff]
    %v1067 = vld [vmem:[#allocation2 + $0x616] sm:$0xff]
    %v1068 = vld [vmem:[#allocation2 + $0x61e] sm:$0xff]
    %v1069 = vld [vmem:[#allocation2 + $0x626] sm:$0xff]
    %v1070 = vld [vmem:[#allocation2 + $0x62e] sm:$0xff]
    %v1071 = vpack.c.bf16 %v1056, %v1055
    %v1072 = vpack.c.bf16 %v1058, %v1057
    %v1073 = vpack.c.bf16 %v1060, %v1059
    %v1074 = vpack.c.bf16 %v1062, %v1061
    %v1075 = vpack.c.bf16 %v1064, %v1063
    %v1076 = vpack.c.bf16 %v1066, %v1065
    %v1077 = vpack.c.bf16 %v1068, %v1067
    %v1078 = vpack.c.bf16 %v1070, %v1069
    %1079 = vmatprep.subr.bf16.mxu0 0
    %1080 = vmatpush1.bf16.msra.mxu0 %v1071
    %1081 = vmatprep.subr.bf16.mxu0 0
    %1082 = vmatpush1.bf16.msra.mxu0 %v1072
    %1083 = vmatprep.subr.bf16.mxu0 0
    %1084 = vmatpush1.bf16.msra.mxu0 %v1073
    %1085 = vmatprep.subr.bf16.mxu0 0
    %1086 = vmatpush1.bf16.msra.mxu0 %v1074
    %1087 = vmatprep.subr.bf16.mxu0 0
    %1088 = vmatpush1.bf16.msra.mxu0 %v1075
    %1089 = vmatprep.subr.bf16.mxu0 0
    %1090 = vmatpush1.bf16.msra.mxu0 %v1076
    %1091 = vmatprep.subr.bf16.mxu0 0
    %1092 = vmatpush1.bf16.msra.mxu0 %v1077
    %1093 = vmatprep.subr.bf16.mxu0 0
    %1094 = vmatpush1.bf16.msra.mxu0 %v1078
    %1095 = vmatprep.subr.bf16.mxu0 0
    %1096 = vmatpush1.bf16.msra.mxu0 0
    %1097 = vmatprep.subr.bf16.mxu0 0
    %1098 = vmatpush1.bf16.msra.mxu0 0
    %1099 = vmatprep.subr.bf16.mxu0 0
    %1100 = vmatpush1.bf16.msra.mxu0 0
    %1101 = vmatprep.subr.bf16.mxu0 0
    %1102 = vmatpush1.bf16.msra.mxu0 0
    %1103 = vmatprep.subr.bf16.mxu0 0
    %1104 = vmatpush1.bf16.msra.mxu0 0
    %1105 = vmatprep.subr.bf16.mxu0 0
    %1106 = vmatpush1.bf16.msra.mxu0 0
    %1107 = vmatprep.subr.bf16.mxu0 0
    %1108 = vmatpush1.bf16.msra.mxu0 0
    %1109 = vmatprep.subr.bf16.mxu0 0
    %1110 = vmatpush1.bf16.msra.mxu0 0
    %1111 = vmatprep.mubr.bf16.mxu0 0
    %1112 = vmatmul.mubr.bf16.gmra.mrb[0].mxu0 %v961
    %v1113 = vpop.f32.mrb[0].mxu0
    %v1114 = vadd.f32 0.0, %v1113
    %v1115 = vpop.f32.mrb[0].mxu0
    %v1116 = vpop.f32.mrb[0].mxu0
    %v1117 = vpop.f32.mrb[0].mxu0
    %1118 = vdwg.mxu0
    %v1119 = vmul.f32 %v1050, %v1114
    %v1120 = vadd.f32 %v1011, %v1119
    %v1121 = vld [vmem:[#allocation2 + $0x526] sm:$0xff]
    %v1122 = vld [vmem:[#allocation2 + $0x52e] sm:$0xff]
    %v1123 = vpack.c.bf16 %v1122, %v1121
    %1124 = vmatprep.subr.bf16.mxu0 0
    %1125 = vmatpush1.bf16.msra.mxu0 %v1123
    %1126 = vmatprep.subr.bf16.mxu0 0
    %1127 = vmatpush1.bf16.msra.mxu0 0
    %1128 = vmatprep.subr.bf16.mxu0 0
    %1129 = vmatpush1.bf16.msra.mxu0 0
    %1130 = vmatprep.subr.bf16.mxu0 0
    %1131 = vmatpush1.bf16.msra.mxu0 0
    %1132 = vmatprep.subr.bf16.mxu0 0
    %1133 = vmatpush1.bf16.msra.mxu0 0
    %1134 = vmatprep.subr.bf16.mxu0 0
    %1135 = vmatpush1.bf16.msra.mxu0 0
    %1136 = vmatprep.subr.bf16.mxu0 0
    %1137 = vmatpush1.bf16.msra.mxu0 0
    %1138 = vmatprep.subr.bf16.mxu0 0
    %1139 = vmatpush1.bf16.msra.mxu0 0
    %1140 = vmatprep.subr.bf16.mxu0 0
    %1141 = vmatpush1.bf16.msra.mxu0 0
    %1142 = vmatprep.subr.bf16.mxu0 0
    %1143 = vmatpush1.bf16.msra.mxu0 0
    %1144 = vmatprep.subr.bf16.mxu0 0
    %1145 = vmatpush1.bf16.msra.mxu0 0
    %1146 = vmatprep.subr.bf16.mxu0 0
    %1147 = vmatpush1.bf16.msra.mxu0 0
    %1148 = vmatprep.subr.bf16.mxu0 0
    %1149 = vmatpush1.bf16.msra.mxu0 0
    %1150 = vmatprep.subr.bf16.mxu0 0
    %1151 = vmatpush1.bf16.msra.mxu0 0
    %1152 = vmatprep.subr.bf16.mxu0 0
    %1153 = vmatpush1.bf16.msra.mxu0 0
    %1154 = vmatprep.subr.bf16.mxu0 0
    %1155 = vmatpush1.bf16.msra.mxu0 0
    %1156 = vmatprep.mubr.bf16.mxu0 0
    %1157 = vmatmul.mubr.bf16.gmra.mrb[0].mxu0 %v482
    %v1158 = vpop.f32.mrb[0].mxu0
    %v1159 = vadd.f32 0.0, %v1158
    %v1160 = vpop.f32.mrb[0].mxu0
    %v1161 = vpop.f32.mrb[0].mxu0
    %v1162 = vpop.f32.mrb[0].mxu0
    %1163 = vdwg.mxu0
    %v1164 = vld [vmem:[#allocation2 + $0x636] sm:$0xff]
    %v1165 = vld [vmem:[#allocation2 + $0x63e] sm:$0xff]
    %v1166 = vld [vmem:[#allocation2 + $0x646] sm:$0xff]
    %v1167 = vld [vmem:[#allocation2 + $0x64e] sm:$0xff]
    %v1168 = vld [vmem:[#allocation2 + $0x656] sm:$0xff]
    %v1169 = vld [vmem:[#allocation2 + $0x65e] sm:$0xff]
    %v1170 = vld [vmem:[#allocation2 + $0x666] sm:$0xff]
    %v1171 = vld [vmem:[#allocation2 + $0x66e] sm:$0xff]
    %v1172 = vld [vmem:[#allocation2 + $0x676] sm:$0xff]
    %v1173 = vld [vmem:[#allocation2 + $0x67e] sm:$0xff]
    %v1174 = vld [vmem:[#allocation2 + $0x686] sm:$0xff]
    %v1175 = vld [vmem:[#allocation2 + $0x68e] sm:$0xff]
    %v1176 = vld [vmem:[#allocation2 + $0x696] sm:$0xff]
    %v1177 = vld [vmem:[#allocation2 + $0x69e] sm:$0xff]
    %v1178 = vld [vmem:[#allocation2 + $0x6a6] sm:$0xff]
    %v1179 = vld [vmem:[#allocation2 + $0x6ae] sm:$0xff]
    %v1180 = vpack.c.bf16 %v1165, %v1164
    %v1181 = vpack.c.bf16 %v1167, %v1166
    %v1182 = vpack.c.bf16 %v1169, %v1168
    %v1183 = vpack.c.bf16 %v1171, %v1170
    %v1184 = vpack.c.bf16 %v1173, %v1172
    %v1185 = vpack.c.bf16 %v1175, %v1174
    %v1186 = vpack.c.bf16 %v1177, %v1176
    %v1187 = vpack.c.bf16 %v1179, %v1178
    %1188 = vmatprep.subr.bf16.mxu0 0
    %1189 = vmatpush1.bf16.msra.mxu0 %v1180
    %1190 = vmatprep.subr.bf16.mxu0 0
    %1191 = vmatpush1.bf16.msra.mxu0 %v1181
    %1192 = vmatprep.subr.bf16.mxu0 0
    %1193 = vmatpush1.bf16.msra.mxu0 %v1182
    %1194 = vmatprep.subr.bf16.mxu0 0
    %1195 = vmatpush1.bf16.msra.mxu0 %v1183
    %1196 = vmatprep.subr.bf16.mxu0 0
    %1197 = vmatpush1.bf16.msra.mxu0 %v1184
    %1198 = vmatprep.subr.bf16.mxu0 0
    %1199 = vmatpush1.bf16.msra.mxu0 %v1185
    %1200 = vmatprep.subr.bf16.mxu0 0
    %1201 = vmatpush1.bf16.msra.mxu0 %v1186
    %1202 = vmatprep.subr.bf16.mxu0 0
    %1203 = vmatpush1.bf16.msra.mxu0 %v1187
    %1204 = vmatprep.subr.bf16.mxu0 0
    %1205 = vmatpush1.bf16.msra.mxu0 0
    %1206 = vmatprep.subr.bf16.mxu0 0
    %1207 = vmatpush1.bf16.msra.mxu0 0
    %1208 = vmatprep.subr.bf16.mxu0 0
    %1209 = vmatpush1.bf16.msra.mxu0 0
    %1210 = vmatprep.subr.bf16.mxu0 0
    %1211 = vmatpush1.bf16.msra.mxu0 0
    %1212 = vmatprep.subr.bf16.mxu0 0
    %1213 = vmatpush1.bf16.msra.mxu0 0
    %1214 = vmatprep.subr.bf16.mxu0 0
    %1215 = vmatpush1.bf16.msra.mxu0 0
    %1216 = vmatprep.subr.bf16.mxu0 0
    %1217 = vmatpush1.bf16.msra.mxu0 0
    %1218 = vmatprep.subr.bf16.mxu0 0
    %1219 = vmatpush1.bf16.msra.mxu0 0
    %1220 = vmatprep.mubr.bf16.mxu0 0
    %1221 = vmatmul.mubr.bf16.gmra.mrb[0].mxu0 %v961
    %v1222 = vpop.f32.mrb[0].mxu0
    %v1223 = vadd.f32 0.0, %v1222
    %v1224 = vpop.f32.mrb[0].mxu0
    %v1225 = vpop.f32.mrb[0].mxu0
    %v1226 = vpop.f32.mrb[0].mxu0
    %1227 = vdwg.mxu0
    %v1228 = vmul.f32 %v1159, %v1223
    %v1229 = vadd.f32 %v1120, %v1228
    %v1230 = vmax.f32 %v1229, 0.0
    %v1231 = vld [vmem:[#allocation2 + $0x1a7] sm:$0xff]
    %v1232 = vld [vmem:[#allocation2 + $0x1af] sm:$0xff]
    %v1233 = vld [vmem:[#allocation2 + $0x1b7] sm:$0xff]
    %v1234 = vld [vmem:[#allocation2 + $0x1bf] sm:$0xff]
    %v1235 = vld [vmem:[#allocation2 + $0x1c7] sm:$0xff]
    %v1236 = vld [vmem:[#allocation2 + $0x1cf] sm:$0xff]
    %v1237 = vld [vmem:[#allocation2 + $0x1d7] sm:$0xff]
    %v1238 = vld [vmem:[#allocation2 + $0x1df] sm:$0xff]
    %v1239 = vld [vmem:[#allocation2 + $0x1e7] sm:$0xff]
    %v1240 = vld [vmem:[#allocation2 + $0x1ef] sm:$0xff]
    %v1241 = vld [vmem:[#allocation2 + $0x1f7] sm:$0xff]
    %v1242 = vld [vmem:[#allocation2 + $0x1ff] sm:$0xff]
    %v1243 = vld [vmem:[#allocation2 + $0x207] sm:$0xff]
    %v1244 = vld [vmem:[#allocation2 + $0x20f] sm:$0xff]
    %v1245 = vld [vmem:[#allocation2 + $0x217] sm:$0xff]
    %v1246 = vld [vmem:[#allocation2 + $0x21f] sm:$0xff]
    %v1247 = vld [vmem:[#allocation2 + $0x227] sm:$0x1]
    %v1248 = vpack.c.bf16 %v1230, %v1230
    %v1249 = vpack.c.bf16 %v1232, %v1231
    %v1250 = vpack.c.bf16 %v1234, %v1233
    %v1251 = vpack.c.bf16 %v1236, %v1235
    %v1252 = vpack.c.bf16 %v1238, %v1237
    %v1253 = vpack.c.bf16 %v1240, %v1239
    %v1254 = vpack.c.bf16 %v1242, %v1241
    %v1255 = vpack.c.bf16 %v1244, %v1243
    %v1256 = vpack.c.bf16 %v1246, %v1245
    %v1257 = vlaneseq
    %v1258 = vshrl.u32 %v1257, 7
    %v1259 = vsub.s32 0, %v1258
    %v1260 = vrot.slane %v1247, %v1259
    %1261 = vmatprep.subr.bf16.mxu0 0
    %1262 = vmatpush1.bf16.msra.mxu0 %v1249
    %1263 = vmatprep.subr.bf16.mxu0 0
    %1264 = vmatpush1.bf16.msra.mxu0 %v1250
    %1265 = vmatprep.subr.bf16.mxu0 0
    %1266 = vmatpush1.bf16.msra.mxu0 %v1251
    %1267 = vmatprep.subr.bf16.mxu0 0
    %1268 = vmatpush1.bf16.msra.mxu0 %v1252
    %1269 = vmatprep.subr.bf16.mxu0 0
    %1270 = vmatpush1.bf16.msra.mxu0 %v1253
    %1271 = vmatprep.subr.bf16.mxu0 0
    %1272 = vmatpush1.bf16.msra.mxu0 %v1254
    %1273 = vmatprep.subr.bf16.mxu0 0
    %1274 = vmatpush1.bf16.msra.mxu0 %v1255
    %1275 = vmatprep.subr.bf16.mxu0 0
    %1276 = vmatpush1.bf16.msra.mxu0 %v1256
    %1277 = vmatprep.subr.bf16.mxu0 0
    %1278 = vmatpush1.bf16.msra.mxu0 0
    %1279 = vmatprep.subr.bf16.mxu0 0
    %1280 = vmatpush1.bf16.msra.mxu0 0
    %1281 = vmatprep.subr.bf16.mxu0 0
    %1282 = vmatpush1.bf16.msra.mxu0 0
    %1283 = vmatprep.subr.bf16.mxu0 0
    %1284 = vmatpush1.bf16.msra.mxu0 0
    %1285 = vmatprep.subr.bf16.mxu0 0
    %1286 = vmatpush1.bf16.msra.mxu0 0
    %1287 = vmatprep.subr.bf16.mxu0 0
    %1288 = vmatpush1.bf16.msra.mxu0 0
    %1289 = vmatprep.subr.bf16.mxu0 0
    %1290 = vmatpush1.bf16.msra.mxu0 0
    %1291 = vmatprep.subr.bf16.mxu0 0
    %1292 = vmatpush1.bf16.msra.mxu0 0
    %1293 = vmatprep.mubr.bf16.mxu0 0
    %1294 = vmatmul.mubr.bf16.gmra.mrb[0].mxu0 %v1248
    %v1295 = vpop.f32.mrb[0].mxu0
    %v1296 = vadd.f32 %v1260, %v1295
    %v1297 = vpop.f32.mrb[0].mxu0
    %v1298 = vpop.f32.mrb[0].mxu0
    %v1299 = vpop.f32.mrb[0].mxu0
    %1300 = vdwg.mxu0
    %1301 = vmatprep.subr.bf16.mxu0 0
    %1302 = vmatpush1.bf16.msra.mxu0 %v860
    %1303 = vmatprep.subr.bf16.mxu0 0
    %1304 = vmatpush1.bf16.msra.mxu0 0
    %1305 = vmatprep.subr.bf16.mxu0 0
    %1306 = vmatpush1.bf16.msra.mxu0 0
    %1307 = vmatprep.subr.bf16.mxu0 0
    %1308 = vmatpush1.bf16.msra.mxu0 0
    %1309 = vmatprep.subr.bf16.mxu0 0
    %1310 = vmatpush1.bf16.msra.mxu0 0
    %1311 = vmatprep.subr.bf16.mxu0 0
    %1312 = vmatpush1.bf16.msra.mxu0 0
    %1313 = vmatprep.subr.bf16.mxu0 0
    %1314 = vmatpush1.bf16.msra.mxu0 0
    %1315 = vmatprep.subr.bf16.mxu0 0
    %1316 = vmatpush1.bf16.msra.mxu0 0
    %1317 = vmatprep.subr.bf16.mxu0 0
    %1318 = vmatpush1.bf16.msra.mxu0 0
    %1319 = vmatprep.subr.bf16.mxu0 0
    %1320 = vmatpush1.bf16.msra.mxu0 0
    %1321 = vmatprep.subr.bf16.mxu0 0
    %1322 = vmatpush1.bf16.msra.mxu0 0
    %1323 = vmatprep.subr.bf16.mxu0 0
    %1324 = vmatpush1.bf16.msra.mxu0 0
    %1325 = vmatprep.subr.bf16.mxu0 0
    %1326 = vmatpush1.bf16.msra.mxu0 0
    %1327 = vmatprep.subr.bf16.mxu0 0
    %1328 = vmatpush1.bf16.msra.mxu0 0
    %1329 = vmatprep.subr.bf16.mxu0 0
    %1330 = vmatpush1.bf16.msra.mxu0 0
    %1331 = vmatprep.subr.bf16.mxu0 0
    %1332 = vmatpush1.bf16.msra.mxu0 0
    %1333 = vmatprep.mubr.bf16.mxu0 0
    %1334 = vmatmul.mubr.bf16.gmra.mrb[0].mxu0 %v691
    %v1335 = vpop.f32.mrb[0].mxu0
    %v1336 = vadd.f32 0.0, %v1335
    %v1337 = vpop.f32.mrb[0].mxu0
    %v1338 = vpop.f32.mrb[0].mxu0
    %v1339 = vpop.f32.mrb[0].mxu0
    %1340 = vdwg.mxu0
    %v1341 = vmul.f32 %v1336, %v1296
    %1342 = vmatprep.subr.bf16.mxu0 0
    %1343 = vmatpush1.bf16.msra.mxu0 %v904
    %1344 = vmatprep.subr.bf16.mxu0 0
    %1345 = vmatpush1.bf16.msra.mxu0 0
    %1346 = vmatprep.subr.bf16.mxu0 0
    %1347 = vmatpush1.bf16.msra.mxu0 0
    %1348 = vmatprep.subr.bf16.mxu0 0
    %1349 = vmatpush1.bf16.msra.mxu0 0
    %1350 = vmatprep.subr.bf16.mxu0 0
    %1351 = vmatpush1.bf16.msra.mxu0 0
    %1352 = vmatprep.subr.bf16.mxu0 0
    %1353 = vmatpush1.bf16.msra.mxu0 0
    %1354 = vmatprep.subr.bf16.mxu0 0
    %1355 = vmatpush1.bf16.msra.mxu0 0
    %1356 = vmatprep.subr.bf16.mxu0 0
    %1357 = vmatpush1.bf16.msra.mxu0 0
    %1358 = vmatprep.subr.bf16.mxu0 0
    %1359 = vmatpush1.bf16.msra.mxu0 0
    %1360 = vmatprep.subr.bf16.mxu0 0
    %1361 = vmatpush1.bf16.msra.mxu0 0
    %1362 = vmatprep.subr.bf16.mxu0 0
    %1363 = vmatpush1.bf16.msra.mxu0 0
    %1364 = vmatprep.subr.bf16.mxu0 0
    %1365 = vmatpush1.bf16.msra.mxu0 0
    %1366 = vmatprep.subr.bf16.mxu0 0
    %1367 = vmatpush1.bf16.msra.mxu0 0
    %1368 = vmatprep.subr.bf16.mxu0 0
    %1369 = vmatpush1.bf16.msra.mxu0 0
    %1370 = vmatprep.subr.bf16.mxu0 0
    %1371 = vmatpush1.bf16.msra.mxu0 0
    %1372 = vmatprep.subr.bf16.mxu0 0
    %1373 = vmatpush1.bf16.msra.mxu0 0
    %1374 = vmatprep.mubr.bf16.mxu0 0
    %1375 = vmatmul.mubr.bf16.gmra.mrb[0].mxu0 %v691
    %v1376 = vpop.f32.mrb[0].mxu0
    %v1377 = vadd.f32 0.0, %v1376
    %v1378 = vpop.f32.mrb[0].mxu0
    %v1379 = vpop.f32.mrb[0].mxu0
    %v1380 = vpop.f32.mrb[0].mxu0
    %1381 = vdwg.mxu0
    %v1382 = vpack.c.bf16 %v1296, %v1296
    %1383 = vmatprep.subr.bf16.mxu0 0
    %1384 = vmatpush1.bf16.msra.mxu0 %v962
    %1385 = vmatprep.subr.bf16.mxu0 0
    %1386 = vmatpush1.bf16.msra.mxu0 %v963
    %1387 = vmatprep.subr.bf16.mxu0 0
    %1388 = vmatpush1.bf16.msra.mxu0 %v964
    %1389 = vmatprep.subr.bf16.mxu0 0
    %1390 = vmatpush1.bf16.msra.mxu0 %v965
    %1391 = vmatprep.subr.bf16.mxu0 0
    %1392 = vmatpush1.bf16.msra.mxu0 %v966
    %1393 = vmatprep.subr.bf16.mxu0 0
    %1394 = vmatpush1.bf16.msra.mxu0 %v967
    %1395 = vmatprep.subr.bf16.mxu0 0
    %1396 = vmatpush1.bf16.msra.mxu0 %v968
    %1397 = vmatprep.subr.bf16.mxu0 0
    %1398 = vmatpush1.bf16.msra.mxu0 %v969
    %1399 = vmatprep.subr.bf16.mxu0 0
    %1400 = vmatpush1.bf16.msra.mxu0 0
    %1401 = vmatprep.subr.bf16.mxu0 0
    %1402 = vmatpush1.bf16.msra.mxu0 0
    %1403 = vmatprep.subr.bf16.mxu0 0
    %1404 = vmatpush1.bf16.msra.mxu0 0
    %1405 = vmatprep.subr.bf16.mxu0 0
    %1406 = vmatpush1.bf16.msra.mxu0 0
    %1407 = vmatprep.subr.bf16.mxu0 0
    %1408 = vmatpush1.bf16.msra.mxu0 0
    %1409 = vmatprep.subr.bf16.mxu0 0
    %1410 = vmatpush1.bf16.msra.mxu0 0
    %1411 = vmatprep.subr.bf16.mxu0 0
    %1412 = vmatpush1.bf16.msra.mxu0 0
    %1413 = vmatprep.subr.bf16.mxu0 0
    %1414 = vmatpush1.bf16.msra.mxu0 0
    %1415 = vmatprep.mubr.bf16.mxu0 0
    %1416 = vmatmul.mubr.bf16.gmra.mrb[0].mxu0 %v1382
    %v1417 = vpop.f32.mrb[0].mxu0
    %v1418 = vadd.f32 0.0, %v1417
    %v1419 = vpop.f32.mrb[0].mxu0
    %v1420 = vpop.f32.mrb[0].mxu0
    %v1421 = vpop.f32.mrb[0].mxu0
    %1422 = vdwg.mxu0
    %v1423 = vmul.f32 %v1377, %v1418
    %v1424 = vadd.f32 %v1341, %v1423
    %1425 = vmatprep.subr.bf16.mxu0 0
    %1426 = vmatpush1.bf16.msra.mxu0 %v1014
    %1427 = vmatprep.subr.bf16.mxu0 0
    %1428 = vmatpush1.bf16.msra.mxu0 0
    %1429 = vmatprep.subr.bf16.mxu0 0
    %1430 = vmatpush1.bf16.msra.mxu0 0
    %1431 = vmatprep.subr.bf16.mxu0 0
    %1432 = vmatpush1.bf16.msra.mxu0 0
    %1433 = vmatprep.subr.bf16.mxu0 0
    %1434 = vmatpush1.bf16.msra.mxu0 0
    %1435 = vmatprep.subr.bf16.mxu0 0
    %1436 = vmatpush1.bf16.msra.mxu0 0
    %1437 = vmatprep.subr.bf16.mxu0 0
    %1438 = vmatpush1.bf16.msra.mxu0 0
    %1439 = vmatprep.subr.bf16.mxu0 0
    %1440 = vmatpush1.bf16.msra.mxu0 0
    %1441 = vmatprep.subr.bf16.mxu0 0
    %1442 = vmatpush1.bf16.msra.mxu0 0
    %1443 = vmatprep.subr.bf16.mxu0 0
    %1444 = vmatpush1.bf16.msra.mxu0 0
    %1445 = vmatprep.subr.bf16.mxu0 0
    %1446 = vmatpush1.bf16.msra.mxu0 0
    %1447 = vmatprep.subr.bf16.mxu0 0
    %1448 = vmatpush1.bf16.msra.mxu0 0
    %1449 = vmatprep.subr.bf16.mxu0 0
    %1450 = vmatpush1.bf16.msra.mxu0 0
    %1451 = vmatprep.subr.bf16.mxu0 0
    %1452 = vmatpush1.bf16.msra.mxu0 0
    %1453 = vmatprep.subr.bf16.mxu0 0
    %1454 = vmatpush1.bf16.msra.mxu0 0
    %1455 = vmatprep.subr.bf16.mxu0 0
    %1456 = vmatpush1.bf16.msra.mxu0 0
    %1457 = vmatprep.mubr.bf16.mxu0 0
    %1458 = vmatmul.mubr.bf16.gmra.mrb[0].mxu0 %v691
    %v1459 = vpop.f32.mrb[0].mxu0
    %v1460 = vadd.f32 0.0, %v1459
    %v1461 = vpop.f32.mrb[0].mxu0
    %v1462 = vpop.f32.mrb[0].mxu0
    %v1463 = vpop.f32.mrb[0].mxu0
    %1464 = vdwg.mxu0
    %1465 = vmatprep.subr.bf16.mxu0 0
    %1466 = vmatpush1.bf16.msra.mxu0 %v1071
    %1467 = vmatprep.subr.bf16.mxu0 0
    %1468 = vmatpush1.bf16.msra.mxu0 %v1072
    %1469 = vmatprep.subr.bf16.mxu0 0
    %1470 = vmatpush1.bf16.msra.mxu0 %v1073
    %1471 = vmatprep.subr.bf16.mxu0 0
    %1472 = vmatpush1.bf16.msra.mxu0 %v1074
    %1473 = vmatprep.subr.bf16.mxu0 0
    %1474 = vmatpush1.bf16.msra.mxu0 %v1075
    %1475 = vmatprep.subr.bf16.mxu0 0
    %1476 = vmatpush1.bf16.msra.mxu0 %v1076
    %1477 = vmatprep.subr.bf16.mxu0 0
    %1478 = vmatpush1.bf16.msra.mxu0 %v1077
    %1479 = vmatprep.subr.bf16.mxu0 0
    %1480 = vmatpush1.bf16.msra.mxu0 %v1078
    %1481 = vmatprep.subr.bf16.mxu0 0
    %1482 = vmatpush1.bf16.msra.mxu0 0
    %1483 = vmatprep.subr.bf16.mxu0 0
    %1484 = vmatpush1.bf16.msra.mxu0 0
    %1485 = vmatprep.subr.bf16.mxu0 0
    %1486 = vmatpush1.bf16.msra.mxu0 0
    %1487 = vmatprep.subr.bf16.mxu0 0
    %1488 = vmatpush1.bf16.msra.mxu0 0
    %1489 = vmatprep.subr.bf16.mxu0 0
    %1490 = vmatpush1.bf16.msra.mxu0 0
    %1491 = vmatprep.subr.bf16.mxu0 0
    %1492 = vmatpush1.bf16.msra.mxu0 0
    %1493 = vmatprep.subr.bf16.mxu0 0
    %1494 = vmatpush1.bf16.msra.mxu0 0
    %1495 = vmatprep.subr.bf16.mxu0 0
    %1496 = vmatpush1.bf16.msra.mxu0 0
    %1497 = vmatprep.mubr.bf16.mxu0 0
    %1498 = vmatmul.mubr.bf16.gmra.mrb[0].mxu0 %v1382
    %v1499 = vpop.f32.mrb[0].mxu0
    %v1500 = vadd.f32 0.0, %v1499
    %v1501 = vpop.f32.mrb[0].mxu0
    %v1502 = vpop.f32.mrb[0].mxu0
    %v1503 = vpop.f32.mrb[0].mxu0
    %1504 = vdwg.mxu0
    %v1505 = vmul.f32 %v1460, %v1500
    %v1506 = vadd.f32 %v1424, %v1505
    %1507 = vmatprep.subr.bf16.mxu0 0
    %1508 = vmatpush1.bf16.msra.mxu0 %v1123
    %1509 = vmatprep.subr.bf16.mxu0 0
    %1510 = vmatpush1.bf16.msra.mxu0 0
    %1511 = vmatprep.subr.bf16.mxu0 0
    %1512 = vmatpush1.bf16.msra.mxu0 0
    %1513 = vmatprep.subr.bf16.mxu0 0
    %1514 = vmatpush1.bf16.msra.mxu0 0
    %1515 = vmatprep.subr.bf16.mxu0 0
    %1516 = vmatpush1.bf16.msra.mxu0 0
    %1517 = vmatprep.subr.bf16.mxu0 0
    %1518 = vmatpush1.bf16.msra.mxu0 0
    %1519 = vmatprep.subr.bf16.mxu0 0
    %1520 = vmatpush1.bf16.msra.mxu0 0
    %1521 = vmatprep.subr.bf16.mxu0 0
    %1522 = vmatpush1.bf16.msra.mxu0 0
    %1523 = vmatprep.subr.bf16.mxu0 0
    %1524 = vmatpush1.bf16.msra.mxu0 0
    %1525 = vmatprep.subr.bf16.mxu0 0
    %1526 = vmatpush1.bf16.msra.mxu0 0
    %1527 = vmatprep.subr.bf16.mxu0 0
    %1528 = vmatpush1.bf16.msra.mxu0 0
    %1529 = vmatprep.subr.bf16.mxu0 0
    %1530 = vmatpush1.bf16.msra.mxu0 0
    %1531 = vmatprep.subr.bf16.mxu0 0
    %1532 = vmatpush1.bf16.msra.mxu0 0
    %1533 = vmatprep.subr.bf16.mxu0 0
    %1534 = vmatpush1.bf16.msra.mxu0 0
    %1535 = vmatprep.subr.bf16.mxu0 0
    %1536 = vmatpush1.bf16.msra.mxu0 0
    %1537 = vmatprep.subr.bf16.mxu0 0
    %1538 = vmatpush1.bf16.msra.mxu0 0
    %1539 = vmatprep.mubr.bf16.mxu0 0
    %1540 = vmatmul.mubr.bf16.gmra.mrb[0].mxu0 %v691
    %v1541 = vpop.f32.mrb[0].mxu0
    %v1542 = vadd.f32 0.0, %v1541
    %v1543 = vpop.f32.mrb[0].mxu0
    %v1544 = vpop.f32.mrb[0].mxu0
    %v1545 = vpop.f32.mrb[0].mxu0
    %1546 = vdwg.mxu0
    %1547 = vmatprep.subr.bf16.mxu0 0
    %1548 = vmatpush1.bf16.msra.mxu0 %v1180
    %1549 = vmatprep.subr.bf16.mxu0 0
    %1550 = vmatpush1.bf16.msra.mxu0 %v1181
    %1551 = vmatprep.subr.bf16.mxu0 0
    %1552 = vmatpush1.bf16.msra.mxu0 %v1182
    %1553 = vmatprep.subr.bf16.mxu0 0
    %1554 = vmatpush1.bf16.msra.mxu0 %v1183
    %1555 = vmatprep.subr.bf16.mxu0 0
    %1556 = vmatpush1.bf16.msra.mxu0 %v1184
    %1557 = vmatprep.subr.bf16.mxu0 0
    %1558 = vmatpush1.bf16.msra.mxu0 %v1185
    %1559 = vmatprep.subr.bf16.mxu0 0
    %1560 = vmatpush1.bf16.msra.mxu0 %v1186
    %1561 = vmatprep.subr.bf16.mxu0 0
    %1562 = vmatpush1.bf16.msra.mxu0 %v1187
    %1563 = vmatprep.subr.bf16.mxu0 0
    %1564 = vmatpush1.bf16.msra.mxu0 0
    %1565 = vmatprep.subr.bf16.mxu0 0
    %1566 = vmatpush1.bf16.msra.mxu0 0
    %1567 = vmatprep.subr.bf16.mxu0 0
    %1568 = vmatpush1.bf16.msra.mxu0 0
    %1569 = vmatprep.subr.bf16.mxu0 0
    %1570 = vmatpush1.bf16.msra.mxu0 0
    %1571 = vmatprep.subr.bf16.mxu0 0
    %1572 = vmatpush1.bf16.msra.mxu0 0
    %1573 = vmatprep.subr.bf16.mxu0 0
    %1574 = vmatpush1.bf16.msra.mxu0 0
    %1575 = vmatprep.subr.bf16.mxu0 0
    %1576 = vmatpush1.bf16.msra.mxu0 0
    %1577 = vmatprep.subr.bf16.mxu0 0
    %1578 = vmatpush1.bf16.msra.mxu0 0
    %1579 = vmatprep.mubr.bf16.mxu0 0
    %1580 = vmatmul.mubr.bf16.gmra.mrb[0].mxu0 %v1382
    %v1581 = vpop.f32.mrb[0].mxu0
    %v1582 = vadd.f32 0.0, %v1581
    %v1583 = vpop.f32.mrb[0].mxu0
    %v1584 = vpop.f32.mrb[0].mxu0
    %v1585 = vpop.f32.mrb[0].mxu0
    %1586 = vdwg.mxu0
    %v1587 = vmul.f32 %v1542, %v1582
    %v1588 = vadd.f32 %v1506, %v1587
    %v1589 = vmax.f32 %v1588, 0.0
    %v1590 = vld [vmem:[#allocation2 + $0x228] sm:$0xff]
    %v1591 = vld [vmem:[#allocation2 + $0x230] sm:$0xff]
    %v1592 = vld [vmem:[#allocation2 + $0x238] sm:$0xff]
    %v1593 = vld [vmem:[#allocation2 + $0x240] sm:$0xff]
    %v1594 = vld [vmem:[#allocation2 + $0x248] sm:$0xff]
    %v1595 = vld [vmem:[#allocation2 + $0x250] sm:$0xff]
    %v1596 = vld [vmem:[#allocation2 + $0x258] sm:$0xff]
    %v1597 = vld [vmem:[#allocation2 + $0x260] sm:$0xff]
    %v1598 = vld [vmem:[#allocation2 + $0x268] sm:$0xff]
    %v1599 = vld [vmem:[#allocation2 + $0x270] sm:$0xff]
    %v1600 = vld [vmem:[#allocation2 + $0x278] sm:$0xff]
    %v1601 = vld [vmem:[#allocation2 + $0x280] sm:$0xff]
    %v1602 = vld [vmem:[#allocation2 + $0x288] sm:$0xff]
    %v1603 = vld [vmem:[#allocation2 + $0x290] sm:$0xff]
    %v1604 = vld [vmem:[#allocation2 + $0x298] sm:$0xff]
    %v1605 = vld [vmem:[#allocation2 + $0x2a0] sm:$0xff]
    %v1606 = vld [vmem:[#allocation2 + $0x2a8] sm:$0x1]
    %v1607 = vpack.c.bf16 %v1589, %v1589
    %v1608 = vpack.c.bf16 %v1591, %v1590
    %v1609 = vpack.c.bf16 %v1593, %v1592
    %v1610 = vpack.c.bf16 %v1595, %v1594
    %v1611 = vpack.c.bf16 %v1597, %v1596
    %v1612 = vpack.c.bf16 %v1599, %v1598
    %v1613 = vpack.c.bf16 %v1601, %v1600
    %v1614 = vpack.c.bf16 %v1603, %v1602
    %v1615 = vpack.c.bf16 %v1605, %v1604
    %v1616 = vlaneseq
    %v1617 = vshrl.u32 %v1616, 7
    %v1618 = vsub.s32 0, %v1617
    %v1619 = vrot.slane %v1606, %v1618
    %1620 = vmatprep.subr.bf16.mxu0 0
    %1621 = vmatpush1.bf16.msra.mxu0 %v1608
    %1622 = vmatprep.subr.bf16.mxu0 0
    %1623 = vmatpush1.bf16.msra.mxu0 %v1609
    %1624 = vmatprep.subr.bf16.mxu0 0
    %1625 = vmatpush1.bf16.msra.mxu0 %v1610
    %1626 = vmatprep.subr.bf16.mxu0 0
    %1627 = vmatpush1.bf16.msra.mxu0 %v1611
    %1628 = vmatprep.subr.bf16.mxu0 0
    %1629 = vmatpush1.bf16.msra.mxu0 %v1612
    %1630 = vmatprep.subr.bf16.mxu0 0
    %1631 = vmatpush1.bf16.msra.mxu0 %v1613
    %1632 = vmatprep.subr.bf16.mxu0 0
    %1633 = vmatpush1.bf16.msra.mxu0 %v1614
    %1634 = vmatprep.subr.bf16.mxu0 0
    %1635 = vmatpush1.bf16.msra.mxu0 %v1615
    %1636 = vmatprep.subr.bf16.mxu0 0
    %1637 = vmatpush1.bf16.msra.mxu0 0
    %1638 = vmatprep.subr.bf16.mxu0 0
    %1639 = vmatpush1.bf16.msra.mxu0 0
    %1640 = vmatprep.subr.bf16.mxu0 0
    %1641 = vmatpush1.bf16.msra.mxu0 0
    %1642 = vmatprep.subr.bf16.mxu0 0
    %1643 = vmatpush1.bf16.msra.mxu0 0
    %1644 = vmatprep.subr.bf16.mxu0 0
    %1645 = vmatpush1.bf16.msra.mxu0 0
    %1646 = vmatprep.subr.bf16.mxu0 0
    %1647 = vmatpush1.bf16.msra.mxu0 0
    %1648 = vmatprep.subr.bf16.mxu0 0
    %1649 = vmatpush1.bf16.msra.mxu0 0
    %1650 = vmatprep.subr.bf16.mxu0 0
    %1651 = vmatpush1.bf16.msra.mxu0 0
    %1652 = vmatprep.mubr.bf16.mxu0 0
    %1653 = vmatmul.mubr.bf16.gmra.mrb[0].mxu0 %v1607
    %v1654 = vpop.f32.mrb[0].mxu0
    %v1655 = vadd.f32 %v1619, %v1654
    %v1656 = vpop.f32.mrb[0].mxu0
    %v1657 = vpop.f32.mrb[0].mxu0
    %v1658 = vpop.f32.mrb[0].mxu0
    %1659 = vdwg.mxu0
    %v1660 = vld [vmem:[#allocation2 + $0x6b6] sm:$0xf]
    %v1661 = vpack.c.bf16 %v802, %v802
    %v1662 = vpack.c.bf16 %v1660, %v1660
    %v1664 = vsel %vm791, %v1661, 0
    %vm1666 = vcmask 1041408
    %v1668 = vsel %vm1666, %v1662, 0
    %1670 = vmatprep.subr.bf16.mxu0 0
    %1671 = vmatpush1.bf16.msra.mxu0 %v1668
    %1672 = vmatprep.subr.bf16.mxu0 0
    %1673 = vmatpush1.bf16.msra.mxu0 0
    %1674 = vmatprep.subr.bf16.mxu0 0
    %1675 = vmatpush1.bf16.msra.mxu0 0
    %1676 = vmatprep.subr.bf16.mxu0 0
    %1677 = vmatpush1.bf16.msra.mxu0 0
    %1678 = vmatprep.subr.bf16.mxu0 0
    %1679 = vmatpush1.bf16.msra.mxu0 0
    %1680 = vmatprep.subr.bf16.mxu0 0
    %1681 = vmatpush1.bf16.msra.mxu0 0
    %1682 = vmatprep.subr.bf16.mxu0 0
    %1683 = vmatpush1.bf16.msra.mxu0 0
    %1684 = vmatprep.subr.bf16.mxu0 0
    %1685 = vmatpush1.bf16.msra.mxu0 0
    %1686 = vmatprep.subr.bf16.mxu0 0
    %1687 = vmatpush1.bf16.msra.mxu0 0
    %1688 = vmatprep.subr.bf16.mxu0 0
    %1689 = vmatpush1.bf16.msra.mxu0 0
    %1690 = vmatprep.subr.bf16.mxu0 0
    %1691 = vmatpush1.bf16.msra.mxu0 0
    %1692 = vmatprep.subr.bf16.mxu0 0
    %1693 = vmatpush1.bf16.msra.mxu0 0
    %1694 = vmatprep.subr.bf16.mxu0 0
    %1695 = vmatpush1.bf16.msra.mxu0 0
    %1696 = vmatprep.subr.bf16.mxu0 0
    %1697 = vmatpush1.bf16.msra.mxu0 0
    %1698 = vmatprep.subr.bf16.mxu0 0
    %1699 = vmatpush1.bf16.msra.mxu0 0
    %1700 = vmatprep.subr.bf16.mxu0 0
    %1701 = vmatpush1.bf16.msra.mxu0 0
    %1702 = vmatprep.mubr.bf16.mxu0 0
    %1703 = vmatmul.mubr.bf16.gmra.mrb[0].mxu0 %v1664
    %v1704 = vpop.f32.mrb[0].mxu0
    %v1705 = vadd.f32 0.0, %v1704
    %v1706 = vpop.f32.mrb[0].mxu0
    %v1707 = vpop.f32.mrb[0].mxu0
    %v1708 = vpop.f32.mrb[0].mxu0
    %1709 = vdwg.mxu0
    %v1710 = vmul.f32 %v1705, %v1655
    %v1711 = vld [vmem:[#allocation2 + $0x6ba] sm:$0xff]
    %v1712 = vld [vmem:[#allocation2 + $0x6c2] sm:$0xff]
    %v1713 = vld [vmem:[#allocation2 + $0x6ca] sm:$0xff]
    %v1714 = vld [vmem:[#allocation2 + $0x6d2] sm:$0xff]
    %v1715 = vld [vmem:[#allocation2 + $0x6da] sm:$0xff]
    %v1716 = vld [vmem:[#allocation2 + $0x6e2] sm:$0xff]
    %v1717 = vld [vmem:[#allocation2 + $0x6ea] sm:$0xff]
    %v1718 = vld [vmem:[#allocation2 + $0x6f2] sm:$0xff]
    %v1719 = vld [vmem:[#allocation2 + $0x6fa] sm:$0xff]
    %v1720 = vld [vmem:[#allocation2 + $0x702] sm:$0xff]
    %v1721 = vld [vmem:[#allocation2 + $0x70a] sm:$0xff]
    %v1722 = vld [vmem:[#allocation2 + $0x712] sm:$0xff]
    %v1723 = vld [vmem:[#allocation2 + $0x71a] sm:$0xff]
    %v1724 = vld [vmem:[#allocation2 + $0x722] sm:$0xff]
    %v1725 = vld [vmem:[#allocation2 + $0x72a] sm:$0xff]
    %v1726 = vld [vmem:[#allocation2 + $0x732] sm:$0xff]
    %v1727 = vpack.c.bf16 %v1710, %v1710
    %v1728 = vpack.c.bf16 %v1712, %v1711
    %v1729 = vpack.c.bf16 %v1714, %v1713
    %v1730 = vpack.c.bf16 %v1716, %v1715
    %v1731 = vpack.c.bf16 %v1718, %v1717
    %v1732 = vpack.c.bf16 %v1720, %v1719
    %v1733 = vpack.c.bf16 %v1722, %v1721
    %v1734 = vpack.c.bf16 %v1724, %v1723
    %v1735 = vpack.c.bf16 %v1726, %v1725
    %1736 = vmatprep.subr.bf16.mxu0 0
    %1737 = vmatpush1.bf16.msra.mxu0 %v1728
    %1738 = vmatprep.subr.bf16.mxu0 0
    %1739 = vmatpush1.bf16.msra.mxu0 %v1729
    %1740 = vmatprep.subr.bf16.mxu0 0
    %1741 = vmatpush1.bf16.msra.mxu0 %v1730
    %1742 = vmatprep.subr.bf16.mxu0 0
    %1743 = vmatpush1.bf16.msra.mxu0 %v1731
    %1744 = vmatprep.subr.bf16.mxu0 0
    %1745 = vmatpush1.bf16.msra.mxu0 %v1732
    %1746 = vmatprep.subr.bf16.mxu0 0
    %1747 = vmatpush1.bf16.msra.mxu0 %v1733
    %1748 = vmatprep.subr.bf16.mxu0 0
    %1749 = vmatpush1.bf16.msra.mxu0 %v1734
    %1750 = vmatprep.subr.bf16.mxu0 0
    %1751 = vmatpush1.bf16.msra.mxu0 %v1735
    %1752 = vmatprep.subr.bf16.mxu0 0
    %1753 = vmatpush1.bf16.msra.mxu0 0
    %1754 = vmatprep.subr.bf16.mxu0 0
    %1755 = vmatpush1.bf16.msra.mxu0 0
    %1756 = vmatprep.subr.bf16.mxu0 0
    %1757 = vmatpush1.bf16.msra.mxu0 0
    %1758 = vmatprep.subr.bf16.mxu0 0
    %1759 = vmatpush1.bf16.msra.mxu0 0
    %1760 = vmatprep.subr.bf16.mxu0 0
    %1761 = vmatpush1.bf16.msra.mxu0 0
    %1762 = vmatprep.subr.bf16.mxu0 0
    %1763 = vmatpush1.bf16.msra.mxu0 0
    %1764 = vmatprep.subr.bf16.mxu0 0
    %1765 = vmatpush1.bf16.msra.mxu0 0
    %1766 = vmatprep.subr.bf16.mxu0 0
    %1767 = vmatpush1.bf16.msra.mxu0 0
    %1768 = vmatprep.mubr.bf16.mxu0 0
    %1769 = vmatmul.mubr.bf16.gmra.mrb[0].mxu0 %v1727
    %v1770 = vpop.f32.mrb[0].mxu0
    %v1771 = vadd.f32 0.0, %v1770
    %v1772 = vpop.f32.mrb[0].mxu0
    %v1773 = vpop.f32.mrb[0].mxu0
    %v1774 = vpop.f32.mrb[0].mxu0
    %1775 = vdwg.mxu0
    %v1776 = vmax.f32 %v1771, 0.0
    %v1777 = vld [vmem:[#allocation2 + $0x2a9] sm:$0xff]
    %v1778 = vld [vmem:[#allocation2 + $0x2b1] sm:$0xff]
    %v1779 = vld [vmem:[#allocation2 + $0x2b9] sm:$0xff]
    %v1780 = vld [vmem:[#allocation2 + $0x2c1] sm:$0xff]
    %v1781 = vld [vmem:[#allocation2 + $0x2c9] sm:$0x1]
    %v1782 = vpack.c.bf16 %v1776, %v1776
    %v1783 = vpack.c.bf16 %v1778, %v1777
    %v1784 = vpack.c.bf16 %v1780, %v1779
    %v1785 = vlaneseq
    %v1786 = vshrl.u32 %v1785, 7
    %v1787 = vsub.s32 0, %v1786
    %v1788 = vrot.slane %v1781, %v1787
    %v1790 = vsel %vm39, %v1782, 0
    %1792 = vmatprep.subr.bf16.mxu0 0
    %1793 = vmatpush1.bf16.msra.mxu0 %v1783
    %1794 = vmatprep.subr.bf16.mxu0 0
    %1795 = vmatpush1.bf16.msra.mxu0 %v1784
    %1796 = vmatprep.subr.bf16.mxu0 0
    %1797 = vmatpush1.bf16.msra.mxu0 0
    %1798 = vmatprep.subr.bf16.mxu0 0
    %1799 = vmatpush1.bf16.msra.mxu0 0
    %1800 = vmatprep.subr.bf16.mxu0 0
    %1801 = vmatpush1.bf16.msra.mxu0 0
    %1802 = vmatprep.subr.bf16.mxu0 0
    %1803 = vmatpush1.bf16.msra.mxu0 0
    %1804 = vmatprep.subr.bf16.mxu0 0
    %1805 = vmatpush1.bf16.msra.mxu0 0
    %1806 = vmatprep.subr.bf16.mxu0 0
    %1807 = vmatpush1.bf16.msra.mxu0 0
    %1808 = vmatprep.subr.bf16.mxu0 0
    %1809 = vmatpush1.bf16.msra.mxu0 0
    %1810 = vmatprep.subr.bf16.mxu0 0
    %1811 = vmatpush1.bf16.msra.mxu0 0
    %1812 = vmatprep.subr.bf16.mxu0 0
    %1813 = vmatpush1.bf16.msra.mxu0 0
    %1814 = vmatprep.subr.bf16.mxu0 0
    %1815 = vmatpush1.bf16.msra.mxu0 0
    %1816 = vmatprep.subr.bf16.mxu0 0
    %1817 = vmatpush1.bf16.msra.mxu0 0
    %1818 = vmatprep.subr.bf16.mxu0 0
    %1819 = vmatpush1.bf16.msra.mxu0 0
    %1820 = vmatprep.subr.bf16.mxu0 0
    %1821 = vmatpush1.bf16.msra.mxu0 0
    %1822 = vmatprep.subr.bf16.mxu0 0
    %1823 = vmatpush1.bf16.msra.mxu0 0
    %1824 = vmatprep.mubr.bf16.mxu0 0
    %1825 = vmatmul.mubr.bf16.gmra.mrb[0].mxu0 %v1790
    %v1826 = vpop.f32.mrb[0].mxu0
    %v1827 = vadd.f32 %v1788, %v1826
    %v1828 = vpop.f32.mrb[0].mxu0
    %v1829 = vpop.f32.mrb[0].mxu0
    %v1830 = vpop.f32.mrb[0].mxu0
    %1831 = vdwg.mxu0
    %v1832 = vmul.f32 %v1827, 0.5
    %v1833 = vmul.f32 %v1832, 1.442695
    %v1834 = vpow.pop %v1833
    %1836 = vrot.lane.b32.xlu0 %v1834, 16
    %v1837 = vpop.permute.xlu0 %1836
    %v1839 = vmul.f32 %v26, %v1837
    %1841 = vrot.lane.b32.xlu0 %v1839, 104
    %v1842 = vpop.permute.xlu0 %1841
    %v1844 = vadd.f32 %v1827, %v1842
    %v1845 = vld [vmem:[#allocation2 + $0x84] sm:$0xff]
    %v1846 = vld [vmem:[#allocation2 + $0x8c] sm:$0x1]
    %v1847 = vpack.c.bf16 %v1844, %v1844
    %v1848 = vpack.c.bf16 %v1845, %v1845
    %v1849 = vlaneseq
    %v1850 = vshrl.u32 %v1849, 7
    %v1851 = vsub.s32 0, %v1850
    %v1852 = vrot.slane %v1846, %v1851
    %vm1853 = vcmask 64512
    %v1855 = vsel %vm1853, %v1847, 0
    %vm1857 = vcmask 1043456
    %v1859 = vsel %vm1857, %v1848, 0
    %1861 = vmatprep.subr.bf16.mxu0 0
    %1862 = vmatpush1.bf16.msra.mxu0 %v1859
    %1863 = vmatprep.subr.bf16.mxu0 0
    %1864 = vmatpush1.bf16.msra.mxu0 0
    %1865 = vmatprep.subr.bf16.mxu0 0
    %1866 = vmatpush1.bf16.msra.mxu0 0
    %1867 = vmatprep.subr.bf16.mxu0 0
    %1868 = vmatpush1.bf16.msra.mxu0 0
    %1869 = vmatprep.subr.bf16.mxu0 0
    %1870 = vmatpush1.bf16.msra.mxu0 0
    %1871 = vmatprep.subr.bf16.mxu0 0
    %1872 = vmatpush1.bf16.msra.mxu0 0
    %1873 = vmatprep.subr.bf16.mxu0 0
    %1874 = vmatpush1.bf16.msra.mxu0 0
    %1875 = vmatprep.subr.bf16.mxu0 0
    %1876 = vmatpush1.bf16.msra.mxu0 0
    %1877 = vmatprep.subr.bf16.mxu0 0
    %1878 = vmatpush1.bf16.msra.mxu0 0
    %1879 = vmatprep.subr.bf16.mxu0 0
    %1880 = vmatpush1.bf16.msra.mxu0 0
    %1881 = vmatprep.subr.bf16.mxu0 0
    %1882 = vmatpush1.bf16.msra.mxu0 0
    %1883 = vmatprep.subr.bf16.mxu0 0
    %1884 = vmatpush1.bf16.msra.mxu0 0
    %1885 = vmatprep.subr.bf16.mxu0 0
    %1886 = vmatpush1.bf16.msra.mxu0 0
    %1887 = vmatprep.subr.bf16.mxu0 0
    %1888 = vmatpush1.bf16.msra.mxu0 0
    %1889 = vmatprep.subr.bf16.mxu0 0
    %1890 = vmatpush1.bf16.msra.mxu0 0
    %1891 = vmatprep.subr.bf16.mxu0 0
    %1892 = vmatpush1.bf16.msra.mxu0 0
    %1893 = vmatprep.mubr.bf16.mxu0 0
    %1894 = vmatmul.mubr.bf16.gmra.mrb[0].mxu0 %v1855
    %v1895 = vpop.f32.mrb[0].mxu0
    %v1896 = vadd.f32 %v1852, %v1895
    %v1897 = vpop.f32.mrb[0].mxu0
    %v1898 = vpop.f32.mrb[0].mxu0
    %v1899 = vpop.f32.mrb[0].mxu0
    %1900 = vdwg.mxu0
    %v1901 = vmax.f32 %v1896, 0.0
    %v1902 = vld [vmem:[#allocation2 + $0x8d] sm:$0xff]
    %v1903 = vld [vmem:[#allocation2 + $0x95] sm:$0xff]
    %v1904 = vld [vmem:[#allocation2 + $0x9d] sm:$0xff]
    %v1905 = vld [vmem:[#allocation2 + $0xa5] sm:$0xff]
    %v1906 = vld [vmem:[#allocation2 + $0xad] sm:$0x1]
    %v1907 = vpack.c.bf16 %v1901, %v1901
    %v1908 = vpack.c.bf16 %v1903, %v1902
    %v1909 = vpack.c.bf16 %v1905, %v1904
    %v1910 = vlaneseq
    %v1911 = vshrl.u32 %v1910, 7
    %v1912 = vsub.s32 0, %v1911
    %v1913 = vrot.slane %v1906, %v1912
    %v1915 = vsel %vm39, %v1907, 0
    %1917 = vmatprep.subr.bf16.mxu0 0
    %1918 = vmatpush1.bf16.msra.mxu0 %v1908
    %1919 = vmatprep.subr.bf16.mxu0 0
    %1920 = vmatpush1.bf16.msra.mxu0 %v1909
    %1921 = vmatprep.subr.bf16.mxu0 0
    %1922 = vmatpush1.bf16.msra.mxu0 0
    %1923 = vmatprep.subr.bf16.mxu0 0
    %1924 = vmatpush1.bf16.msra.mxu0 0
    %1925 = vmatprep.subr.bf16.mxu0 0
    %1926 = vmatpush1.bf16.msra.mxu0 0
    %1927 = vmatprep.subr.bf16.mxu0 0
    %1928 = vmatpush1.bf16.msra.mxu0 0
    %1929 = vmatprep.subr.bf16.mxu0 0
    %1930 = vmatpush1.bf16.msra.mxu0 0
    %1931 = vmatprep.subr.bf16.mxu0 0
    %1932 = vmatpush1.bf16.msra.mxu0 0
    %1933 = vmatprep.subr.bf16.mxu0 0
    %1934 = vmatpush1.bf16.msra.mxu0 0
    %1935 = vmatprep.subr.bf16.mxu0 0
    %1936 = vmatpush1.bf16.msra.mxu0 0
    %1937 = vmatprep.subr.bf16.mxu0 0
    %1938 = vmatpush1.bf16.msra.mxu0 0
    %1939 = vmatprep.subr.bf16.mxu0 0
    %1940 = vmatpush1.bf16.msra.mxu0 0
    %1941 = vmatprep.subr.bf16.mxu0 0
    %1942 = vmatpush1.bf16.msra.mxu0 0
    %1943 = vmatprep.subr.bf16.mxu0 0
    %1944 = vmatpush1.bf16.msra.mxu0 0
    %1945 = vmatprep.subr.bf16.mxu0 0
    %1946 = vmatpush1.bf16.msra.mxu0 0
    %1947 = vmatprep.subr.bf16.mxu0 0
    %1948 = vmatpush1.bf16.msra.mxu0 0
    %1949 = vmatprep.mubr.bf16.mxu0 0
    %1950 = vmatmul.mubr.bf16.gmra.mrb[0].mxu0 %v1915
    %v1951 = vpop.f32.mrb[0].mxu0
    %v1952 = vadd.f32 %v1913, %v1951
    %v1953 = vpop.f32.mrb[0].mxu0
    %v1954 = vpop.f32.mrb[0].mxu0
    %v1955 = vpop.f32.mrb[0].mxu0
    %1956 = vdwg.mxu0
    %v1957 = vmul.f32 %v241, %v1952
    %v1958 = vmax.f32 %v1952, 0.0
    %v1959 = vmax.f32 %v1957, 0.0
    %v1960 = vld [vmem:[#allocation2 + $0x2ca] sm:$0xff]
    %v1961 = vld [vmem:[#allocation2 + $0x2d2] sm:$0xff]
    %v1962 = vld [vmem:[#allocation2 + $0x2da] sm:$0xff]
    %v1963 = vld [vmem:[#allocation2 + $0x2e2] sm:$0xff]
    %v1964 = vld [vmem:[#allocation2 + $0x2ea] sm:$0x1]
    %v1965 = vpack.c.bf16 %v1959, %v1959
    %v1966 = vpack.c.bf16 %v1961, %v1960
    %v1967 = vpack.c.bf16 %v1963, %v1962
    %v1968 = vlaneseq
    %v1969 = vshrl.u32 %v1968, 7
    %v1970 = vsub.s32 0, %v1969
    %v1971 = vrot.slane %v1964, %v1970
    %v1973 = vsel %vm39, %v1965, 0
    %1975 = vmatprep.subr.bf16.mxu0 0
    %1976 = vmatpush1.bf16.msra.mxu0 %v1966
    %1977 = vmatprep.subr.bf16.mxu0 0
    %1978 = vmatpush1.bf16.msra.mxu0 %v1967
    %1979 = vmatprep.subr.bf16.mxu0 0
    %1980 = vmatpush1.bf16.msra.mxu0 0
    %1981 = vmatprep.subr.bf16.mxu0 0
    %1982 = vmatpush1.bf16.msra.mxu0 0
    %1983 = vmatprep.subr.bf16.mxu0 0
    %1984 = vmatpush1.bf16.msra.mxu0 0
    %1985 = vmatprep.subr.bf16.mxu0 0
    %1986 = vmatpush1.bf16.msra.mxu0 0
    %1987 = vmatprep.subr.bf16.mxu0 0
    %1988 = vmatpush1.bf16.msra.mxu0 0
    %1989 = vmatprep.subr.bf16.mxu0 0
    %1990 = vmatpush1.bf16.msra.mxu0 0
    %1991 = vmatprep.subr.bf16.mxu0 0
    %1992 = vmatpush1.bf16.msra.mxu0 0
    %1993 = vmatprep.subr.bf16.mxu0 0
    %1994 = vmatpush1.bf16.msra.mxu0 0
    %1995 = vmatprep.subr.bf16.mxu0 0
    %1996 = vmatpush1.bf16.msra.mxu0 0
    %1997 = vmatprep.subr.bf16.mxu0 0
    %1998 = vmatpush1.bf16.msra.mxu0 0
    %1999 = vmatprep.subr.bf16.mxu0 0
    %2000 = vmatpush1.bf16.msra.mxu0 0
    %2001 = vmatprep.subr.bf16.mxu0 0
    %2002 = vmatpush1.bf16.msra.mxu0 0
    %2003 = vmatprep.subr.bf16.mxu0 0
    %2004 = vmatpush1.bf16.msra.mxu0 0
    %2005 = vmatprep.subr.bf16.mxu0 0
    %2006 = vmatpush1.bf16.msra.mxu0 0
    %2007 = vmatprep.mubr.bf16.mxu0 0
    %2008 = vmatmul.mubr.bf16.gmra.mrb[0].mxu0 %v1973
    %v2009 = vpop.f32.mrb[0].mxu0
    %v2010 = vadd.f32 %v1971, %v2009
    %v2011 = vpop.f32.mrb[0].mxu0
    %v2012 = vpop.f32.mrb[0].mxu0
    %v2013 = vpop.f32.mrb[0].mxu0
    %2014 = vdwg.mxu0
    %v2015 = vmax.f32 %v2010, 0.0
    %v2016 = vld [vmem:[#allocation2 + $0x2eb] sm:$0xff]
    %v2017 = vld [vmem:[#allocation2 + $0x2f3] sm:$0xff]
    %v2018 = vld [vmem:[#allocation2 + $0x2fb] sm:$0xff]
    %v2019 = vld [vmem:[#allocation2 + $0x303] sm:$0xff]
    %v2020 = vld [vmem:[#allocation2 + $0x30b] sm:$0x1]
    %v2021 = vpack.c.bf16 %v2015, %v2015
    %v2022 = vpack.c.bf16 %v2017, %v2016
    %v2023 = vpack.c.bf16 %v2019, %v2018
    %v2024 = vlaneseq
    %v2025 = vshrl.u32 %v2024, 7
    %v2026 = vsub.s32 0, %v2025
    %v2027 = vrot.slane %v2020, %v2026
    %v2029 = vsel %vm39, %v2021, 0
    %2031 = vmatprep.subr.bf16.mxu0 0
    %2032 = vmatpush1.bf16.msra.mxu0 %v2022
    %2033 = vmatprep.subr.bf16.mxu0 0
    %2034 = vmatpush1.bf16.msra.mxu0 %v2023
    %2035 = vmatprep.subr.bf16.mxu0 0
    %2036 = vmatpush1.bf16.msra.mxu0 0
    %2037 = vmatprep.subr.bf16.mxu0 0
    %2038 = vmatpush1.bf16.msra.mxu0 0
    %2039 = vmatprep.subr.bf16.mxu0 0
    %2040 = vmatpush1.bf16.msra.mxu0 0
    %2041 = vmatprep.subr.bf16.mxu0 0
    %2042 = vmatpush1.bf16.msra.mxu0 0
    %2043 = vmatprep.subr.bf16.mxu0 0
    %2044 = vmatpush1.bf16.msra.mxu0 0
    %2045 = vmatprep.subr.bf16.mxu0 0
    %2046 = vmatpush1.bf16.msra.mxu0 0
    %2047 = vmatprep.subr.bf16.mxu0 0
    %2048 = vmatpush1.bf16.msra.mxu0 0
    %2049 = vmatprep.subr.bf16.mxu0 0
    %2050 = vmatpush1.bf16.msra.mxu0 0
    %2051 = vmatprep.subr.bf16.mxu0 0
    %2052 = vmatpush1.bf16.msra.mxu0 0
    %2053 = vmatprep.subr.bf16.mxu0 0
    %2054 = vmatpush1.bf16.msra.mxu0 0
    %2055 = vmatprep.subr.bf16.mxu0 0
    %2056 = vmatpush1.bf16.msra.mxu0 0
    %2057 = vmatprep.subr.bf16.mxu0 0
    %2058 = vmatpush1.bf16.msra.mxu0 0
    %2059 = vmatprep.subr.bf16.mxu0 0
    %2060 = vmatpush1.bf16.msra.mxu0 0
    %2061 = vmatprep.subr.bf16.mxu0 0
    %2062 = vmatpush1.bf16.msra.mxu0 0
    %2063 = vmatprep.mubr.bf16.mxu0 0
    %2064 = vmatmul.mubr.bf16.gmra.mrb[0].mxu0 %v2029
    %v2065 = vpop.f32.mrb[0].mxu0
    %v2066 = vadd.f32 %v2027, %v2065
    %v2067 = vpop.f32.mrb[0].mxu0
    %v2068 = vpop.f32.mrb[0].mxu0
    %v2069 = vpop.f32.mrb[0].mxu0
    %2070 = vdwg.mxu0
    %v2071 = vmax.f32 %v2066, 0.0
    %v2072 = vld [vmem:[#allocation2 + $0x30c] sm:$0xff]
    %v2073 = vld [vmem:[#allocation2 + $0x314] sm:$0xff]
    %v2074 = vld [vmem:[#allocation2 + $0x31c] sm:$0xff]
    %v2075 = vld [vmem:[#allocation2 + $0x324] sm:$0xff]
    %v2076 = vld [vmem:[#allocation2 + $0x32c] sm:$0x1]
    %v2077 = vpack.c.bf16 %v2071, %v2071
    %v2078 = vpack.c.bf16 %v2073, %v2072
    %v2079 = vpack.c.bf16 %v2075, %v2074
    %v2080 = vlaneseq
    %v2081 = vshrl.u32 %v2080, 7
    %v2082 = vsub.s32 0, %v2081
    %v2083 = vrot.slane %v2076, %v2082
    %v2085 = vsel %vm39, %v2077, 0
    %2087 = vmatprep.subr.bf16.mxu0 0
    %2088 = vmatpush1.bf16.msra.mxu0 %v2078
    %2089 = vmatprep.subr.bf16.mxu0 0
    %2090 = vmatpush1.bf16.msra.mxu0 %v2079
    %2091 = vmatprep.subr.bf16.mxu0 0
    %2092 = vmatpush1.bf16.msra.mxu0 0
    %2093 = vmatprep.subr.bf16.mxu0 0
    %2094 = vmatpush1.bf16.msra.mxu0 0
    %2095 = vmatprep.subr.bf16.mxu0 0
    %2096 = vmatpush1.bf16.msra.mxu0 0
    %2097 = vmatprep.subr.bf16.mxu0 0
    %2098 = vmatpush1.bf16.msra.mxu0 0
    %2099 = vmatprep.subr.bf16.mxu0 0
    %2100 = vmatpush1.bf16.msra.mxu0 0
    %2101 = vmatprep.subr.bf16.mxu0 0
    %2102 = vmatpush1.bf16.msra.mxu0 0
    %2103 = vmatprep.subr.bf16.mxu0 0
    %2104 = vmatpush1.bf16.msra.mxu0 0
    %2105 = vmatprep.subr.bf16.mxu0 0
    %2106 = vmatpush1.bf16.msra.mxu0 0
    %2107 = vmatprep.subr.bf16.mxu0 0
    %2108 = vmatpush1.bf16.msra.mxu0 0
    %2109 = vmatprep.subr.bf16.mxu0 0
    %2110 = vmatpush1.bf16.msra.mxu0 0
    %2111 = vmatprep.subr.bf16.mxu0 0
    %2112 = vmatpush1.bf16.msra.mxu0 0
    %2113 = vmatprep.subr.bf16.mxu0 0
    %2114 = vmatpush1.bf16.msra.mxu0 0
    %2115 = vmatprep.subr.bf16.mxu0 0
    %2116 = vmatpush1.bf16.msra.mxu0 0
    %2117 = vmatprep.subr.bf16.mxu0 0
    %2118 = vmatpush1.bf16.msra.mxu0 0
    %2119 = vmatprep.mubr.bf16.mxu0 0
    %2120 = vmatmul.mubr.bf16.gmra.mrb[0].mxu0 %v2085
    %v2121 = vpop.f32.mrb[0].mxu0
    %v2122 = vadd.f32 %v2083, %v2121
    %v2123 = vpop.f32.mrb[0].mxu0
    %v2124 = vpop.f32.mrb[0].mxu0
    %v2125 = vpop.f32.mrb[0].mxu0
    %2126 = vdwg.mxu0
    %v2127 = vsel %vm416, %v2122, -inf
    %2128 = vmax.xlane.f32.xlu0 %v2127
    %v2129 = vpop.xlane.xlu0 %2128
    %v2130 = vsub.f32 %v2122, %v2129
    %v2131 = vmul.f32 %v2130, 1.442695
    %v2132 = vpow.pop %v2131
    %v2133 = vpack.c.bf16 %v2132, %v2132
    %v2135 = vsel %vm416, %v2133, 0
    %2137 = vmatprep.subr.bf16.mxu0 0
    %2138 = vmatpush1.bf16.msra.mxu0 %v426
    %2139 = vmatprep.subr.bf16.mxu0 0
    %2140 = vmatpush1.bf16.msra.mxu0 0
    %2141 = vmatprep.subr.bf16.mxu0 0
    %2142 = vmatpush1.bf16.msra.mxu0 0
    %2143 = vmatprep.subr.bf16.mxu0 0
    %2144 = vmatpush1.bf16.msra.mxu0 0
    %2145 = vmatprep.subr.bf16.mxu0 0
    %2146 = vmatpush1.bf16.msra.mxu0 0
    %2147 = vmatprep.subr.bf16.mxu0 0
    %2148 = vmatpush1.bf16.msra.mxu0 0
    %2149 = vmatprep.subr.bf16.mxu0 0
    %2150 = vmatpush1.bf16.msra.mxu0 0
    %2151 = vmatprep.subr.bf16.mxu0 0
    %2152 = vmatpush1.bf16.msra.mxu0 0
    %2153 = vmatprep.subr.bf16.mxu0 0
    %2154 = vmatpush1.bf16.msra.mxu0 0
    %2155 = vmatprep.subr.bf16.mxu0 0
    %2156 = vmatpush1.bf16.msra.mxu0 0
    %2157 = vmatprep.subr.bf16.mxu0 0
    %2158 = vmatpush1.bf16.msra.mxu0 0
    %2159 = vmatprep.subr.bf16.mxu0 0
    %2160 = vmatpush1.bf16.msra.mxu0 0
    %2161 = vmatprep.subr.bf16.mxu0 0
    %2162 = vmatpush1.bf16.msra.mxu0 0
    %2163 = vmatprep.subr.bf16.mxu0 0
    %2164 = vmatpush1.bf16.msra.mxu0 0
    %2165 = vmatprep.subr.bf16.mxu0 0
    %2166 = vmatpush1.bf16.msra.mxu0 0
    %2167 = vmatprep.subr.bf16.mxu0 0
    %2168 = vmatpush1.bf16.msra.mxu0 0
    %2169 = vmatprep.mubr.bf16.mxu0 0
    %2170 = vmatmul.mubr.bf16.gmra.mrb[0].mxu0 %v2135
    %v2171 = vpop.f32.mrb[0].mxu0
    %v2172 = vadd.f32 0.0, %v2171
    %v2173 = vpop.f32.mrb[0].mxu0
    %v2174 = vpop.f32.mrb[0].mxu0
    %v2175 = vpop.f32.mrb[0].mxu0
    %2176 = vdwg.mxu0
    %v2177 = vrcp.pop %v2172
    %v2178 = vmul.f32 %v2132, %v2177
    %v2179 = vld [vmem:[#allocation2 + $0x32d] sm:$0xff]
    %v2180 = vld [vmem:[#allocation2 + $0x335] sm:$0xff]
    %v2181 = vld [vmem:[#allocation2 + $0x33d] sm:$0x1]
    %v2182 = vpack.c.bf16 %v2178, %v2178
    %v2183 = vpack.c.bf16 %v2180, %v2179
    %v2184 = vlaneseq
    %v2185 = vshrl.u32 %v2184, 7
    %v2186 = vsub.s32 0, %v2185
    %v2187 = vrot.slane %v2181, %v2186
    %v2189 = vsel %vm416, %v2182, 0
    %2191 = vmatprep.subr.bf16.mxu0 0
    %2192 = vmatpush1.bf16.msra.mxu0 %v2183
    %2193 = vmatprep.subr.bf16.mxu0 0
    %2194 = vmatpush1.bf16.msra.mxu0 0
    %2195 = vmatprep.subr.bf16.mxu0 0
    %2196 = vmatpush1.bf16.msra.mxu0 0
    %2197 = vmatprep.subr.bf16.mxu0 0
    %2198 = vmatpush1.bf16.msra.mxu0 0
    %2199 = vmatprep.subr.bf16.mxu0 0
    %2200 = vmatpush1.bf16.msra.mxu0 0
    %2201 = vmatprep.subr.bf16.mxu0 0
    %2202 = vmatpush1.bf16.msra.mxu0 0
    %2203 = vmatprep.subr.bf16.mxu0 0
    %2204 = vmatpush1.bf16.msra.mxu0 0
    %2205 = vmatprep.subr.bf16.mxu0 0
    %2206 = vmatpush1.bf16.msra.mxu0 0
    %2207 = vmatprep.subr.bf16.mxu0 0
    %2208 = vmatpush1.bf16.msra.mxu0 0
    %2209 = vmatprep.subr.bf16.mxu0 0
    %2210 = vmatpush1.bf16.msra.mxu0 0
    %2211 = vmatprep.subr.bf16.mxu0 0
    %2212 = vmatpush1.bf16.msra.mxu0 0
    %2213 = vmatprep.subr.bf16.mxu0 0
    %2214 = vmatpush1.bf16.msra.mxu0 0
    %2215 = vmatprep.subr.bf16.mxu0 0
    %2216 = vmatpush1.bf16.msra.mxu0 0
    %2217 = vmatprep.subr.bf16.mxu0 0
    %2218 = vmatpush1.bf16.msra.mxu0 0
    %2219 = vmatprep.subr.bf16.mxu0 0
    %2220 = vmatpush1.bf16.msra.mxu0 0
    %2221 = vmatprep.subr.bf16.mxu0 0
    %2222 = vmatpush1.bf16.msra.mxu0 0
    %2223 = vmatprep.mubr.bf16.mxu0 0
    %2224 = vmatmul.mubr.bf16.gmra.mrb[0].mxu0 %v2189
    %v2225 = vpop.f32.mrb[0].mxu0
    %v2226 = vadd.f32 %v2187, %v2225
    %v2227 = vpop.f32.mrb[0].mxu0
    %v2228 = vpop.f32.mrb[0].mxu0
    %v2229 = vpop.f32.mrb[0].mxu0
    %2230 = vdwg.mxu0
    %v2231 = vmul.f32 %v2226, %v2066
    %v2232 = vmax.f32 %v2231, 0.0
    %v2233 = vld [vmem:[#allocation2 + $0x33e] sm:$0xff]
    %v2234 = vld [vmem:[#allocation2 + $0x346] sm:$0xff]
    %v2235 = vld [vmem:[#allocation2 + $0x34e] sm:$0xff]
    %v2236 = vld [vmem:[#allocation2 + $0x356] sm:$0xff]
    %v2237 = vld [vmem:[#allocation2 + $0x35e] sm:$0x1]
    %v2238 = vpack.c.bf16 %v2232, %v2232
    %v2239 = vpack.c.bf16 %v2234, %v2233
    %v2240 = vpack.c.bf16 %v2236, %v2235
    %v2241 = vlaneseq
    %v2242 = vshrl.u32 %v2241, 7
    %v2243 = vsub.s32 0, %v2242
    %v2244 = vrot.slane %v2237, %v2243
    %v2246 = vsel %vm39, %v2238, 0
    %2248 = vmatprep.subr.bf16.mxu0 0
    %2249 = vmatpush1.bf16.msra.mxu0 %v2239
    %2250 = vmatprep.subr.bf16.mxu0 0
    %2251 = vmatpush1.bf16.msra.mxu0 %v2240
    %2252 = vmatprep.subr.bf16.mxu0 0
    %2253 = vmatpush1.bf16.msra.mxu0 0
    %2254 = vmatprep.subr.bf16.mxu0 0
    %2255 = vmatpush1.bf16.msra.mxu0 0
    %2256 = vmatprep.subr.bf16.mxu0 0
    %2257 = vmatpush1.bf16.msra.mxu0 0
    %2258 = vmatprep.subr.bf16.mxu0 0
    %2259 = vmatpush1.bf16.msra.mxu0 0
    %2260 = vmatprep.subr.bf16.mxu0 0
    %2261 = vmatpush1.bf16.msra.mxu0 0
    %2262 = vmatprep.subr.bf16.mxu0 0
    %2263 = vmatpush1.bf16.msra.mxu0 0
    %2264 = vmatprep.subr.bf16.mxu0 0
    %2265 = vmatpush1.bf16.msra.mxu0 0
    %2266 = vmatprep.subr.bf16.mxu0 0
    %2267 = vmatpush1.bf16.msra.mxu0 0
    %2268 = vmatprep.subr.bf16.mxu0 0
    %2269 = vmatpush1.bf16.msra.mxu0 0
    %2270 = vmatprep.subr.bf16.mxu0 0
    %2271 = vmatpush1.bf16.msra.mxu0 0
    %2272 = vmatprep.subr.bf16.mxu0 0
    %2273 = vmatpush1.bf16.msra.mxu0 0
    %2274 = vmatprep.subr.bf16.mxu0 0
    %2275 = vmatpush1.bf16.msra.mxu0 0
    %2276 = vmatprep.subr.bf16.mxu0 0
    %2277 = vmatpush1.bf16.msra.mxu0 0
    %2278 = vmatprep.subr.bf16.mxu0 0
    %2279 = vmatpush1.bf16.msra.mxu0 0
    %2280 = vmatprep.mubr.bf16.mxu0 0
    %2281 = vmatmul.mubr.bf16.gmra.mrb[0].mxu0 %v2246
    %v2282 = vpop.f32.mrb[0].mxu0
    %v2283 = vadd.f32 %v2244, %v2282
    %v2284 = vpop.f32.mrb[0].mxu0
    %v2285 = vpop.f32.mrb[0].mxu0
    %v2286 = vpop.f32.mrb[0].mxu0
    %2287 = vdwg.mxu0
    %v2288 = vsel %vm416, %v2283, -inf
    %2289 = vmax.xlane.f32.xlu0 %v2288
    %v2290 = vpop.xlane.xlu0 %2289
    %v2291 = vsub.f32 %v2283, %v2290
    %v2292 = vmul.f32 %v2291, 1.442695
    %v2293 = vpow.pop %v2292
    %v2294 = vpack.c.bf16 %v2293, %v2293
    %v2296 = vsel %vm416, %v2294, 0
    %2298 = vmatprep.subr.bf16.mxu0 0
    %2299 = vmatpush1.bf16.msra.mxu0 %v426
    %2300 = vmatprep.subr.bf16.mxu0 0
    %2301 = vmatpush1.bf16.msra.mxu0 0
    %2302 = vmatprep.subr.bf16.mxu0 0
    %2303 = vmatpush1.bf16.msra.mxu0 0
    %2304 = vmatprep.subr.bf16.mxu0 0
    %2305 = vmatpush1.bf16.msra.mxu0 0
    %2306 = vmatprep.subr.bf16.mxu0 0
    %2307 = vmatpush1.bf16.msra.mxu0 0
    %2308 = vmatprep.subr.bf16.mxu0 0
    %2309 = vmatpush1.bf16.msra.mxu0 0
    %2310 = vmatprep.subr.bf16.mxu0 0
    %2311 = vmatpush1.bf16.msra.mxu0 0
    %2312 = vmatprep.subr.bf16.mxu0 0
    %2313 = vmatpush1.bf16.msra.mxu0 0
    %2314 = vmatprep.subr.bf16.mxu0 0
    %2315 = vmatpush1.bf16.msra.mxu0 0
    %2316 = vmatprep.subr.bf16.mxu0 0
    %2317 = vmatpush1.bf16.msra.mxu0 0
    %2318 = vmatprep.subr.bf16.mxu0 0
    %2319 = vmatpush1.bf16.msra.mxu0 0
    %2320 = vmatprep.subr.bf16.mxu0 0
    %2321 = vmatpush1.bf16.msra.mxu0 0
    %2322 = vmatprep.subr.bf16.mxu0 0
    %2323 = vmatpush1.bf16.msra.mxu0 0
    %2324 = vmatprep.subr.bf16.mxu0 0
    %2325 = vmatpush1.bf16.msra.mxu0 0
    %2326 = vmatprep.subr.bf16.mxu0 0
    %2327 = vmatpush1.bf16.msra.mxu0 0
    %2328 = vmatprep.subr.bf16.mxu0 0
    %2329 = vmatpush1.bf16.msra.mxu0 0
    %2330 = vmatprep.mubr.bf16.mxu0 0
    %2331 = vmatmul.mubr.bf16.gmra.mrb[0].mxu0 %v2296
    %v2332 = vpop.f32.mrb[0].mxu0
    %v2333 = vadd.f32 0.0, %v2332
    %v2334 = vpop.f32.mrb[0].mxu0
    %v2335 = vpop.f32.mrb[0].mxu0
    %v2336 = vpop.f32.mrb[0].mxu0
    %2337 = vdwg.mxu0
    %v2338 = vrcp.pop %v2333
    %v2339 = vmul.f32 %v2293, %v2338
    %v2340 = vld [vmem:[#allocation2 + $0x35f] sm:$0xff]
    %v2341 = vld [vmem:[#allocation2 + $0x367] sm:$0xff]
    %v2342 = vld [vmem:[#allocation2 + $0x36f] sm:$0x1]
    %v2343 = vpack.c.bf16 %v2341, %v2340
    %v2344 = vlaneseq
    %v2345 = vshrl.u32 %v2344, 7
    %v2346 = vsub.s32 0, %v2345
    %v2347 = vrot.slane %v2342, %v2346
    %2348 = vmatprep.subr.bf16.mxu0 0
    %2349 = vmatpush1.bf16.msra.mxu0 %v2343
    %2350 = vmatprep.subr.bf16.mxu0 0
    %2351 = vmatpush1.bf16.msra.mxu0 0
    %2352 = vmatprep.subr.bf16.mxu0 0
    %2353 = vmatpush1.bf16.msra.mxu0 0
    %2354 = vmatprep.subr.bf16.mxu0 0
    %2355 = vmatpush1.bf16.msra.mxu0 0
    %2356 = vmatprep.subr.bf16.mxu0 0
    %2357 = vmatpush1.bf16.msra.mxu0 0
    %2358 = vmatprep.subr.bf16.mxu0 0
    %2359 = vmatpush1.bf16.msra.mxu0 0
    %2360 = vmatprep.subr.bf16.mxu0 0
    %2361 = vmatpush1.bf16.msra.mxu0 0
    %2362 = vmatprep.subr.bf16.mxu0 0
    %2363 = vmatpush1.bf16.msra.mxu0 0
    %2364 = vmatprep.subr.bf16.mxu0 0
    %2365 = vmatpush1.bf16.msra.mxu0 0
    %2366 = vmatprep.subr.bf16.mxu0 0
    %2367 = vmatpush1.bf16.msra.mxu0 0
    %2368 = vmatprep.subr.bf16.mxu0 0
    %2369 = vmatpush1.bf16.msra.mxu0 0
    %2370 = vmatprep.subr.bf16.mxu0 0
    %2371 = vmatpush1.bf16.msra.mxu0 0
    %2372 = vmatprep.subr.bf16.mxu0 0
    %2373 = vmatpush1.bf16.msra.mxu0 0
    %2374 = vmatprep.subr.bf16.mxu0 0
    %2375 = vmatpush1.bf16.msra.mxu0 0
    %2376 = vmatprep.subr.bf16.mxu0 0
    %2377 = vmatpush1.bf16.msra.mxu0 0
    %2378 = vmatprep.subr.bf16.mxu0 0
    %2379 = vmatpush1.bf16.msra.mxu0 0
    %2380 = vmatprep.mubr.bf16.mxu0 0
    %2381 = vmatmul.mubr.bf16.gmra.mrb[0].mxu0 %v2189
    %v2382 = vpop.f32.mrb[0].mxu0
    %v2383 = vadd.f32 %v2347, %v2382
    %v2384 = vpop.f32.mrb[0].mxu0
    %v2385 = vpop.f32.mrb[0].mxu0
    %v2386 = vpop.f32.mrb[0].mxu0
    %2387 = vdwg.mxu0
    %v2388 = vld [vmem:[#allocation2 + $0x370] sm:$0xff]
    %v2389 = vld [vmem:[#allocation2 + $0x378] sm:$0xff]
    %v2390 = vld [vmem:[#allocation2 + $0x380] sm:$0x1]
    %v2391 = vpack.c.bf16 %v2339, %v2339
    %v2392 = vpack.c.bf16 %v2389, %v2388
    %v2393 = vlaneseq
    %v2394 = vshrl.u32 %v2393, 7
    %v2395 = vsub.s32 0, %v2394
    %v2396 = vrot.slane %v2390, %v2395
    %v2398 = vsel %vm416, %v2391, 0
    %2400 = vmatprep.subr.bf16.mxu0 0
    %2401 = vmatpush1.bf16.msra.mxu0 %v2392
    %2402 = vmatprep.subr.bf16.mxu0 0
    %2403 = vmatpush1.bf16.msra.mxu0 0
    %2404 = vmatprep.subr.bf16.mxu0 0
    %2405 = vmatpush1.bf16.msra.mxu0 0
    %2406 = vmatprep.subr.bf16.mxu0 0
    %2407 = vmatpush1.bf16.msra.mxu0 0
    %2408 = vmatprep.subr.bf16.mxu0 0
    %2409 = vmatpush1.bf16.msra.mxu0 0
    %2410 = vmatprep.subr.bf16.mxu0 0
    %2411 = vmatpush1.bf16.msra.mxu0 0
    %2412 = vmatprep.subr.bf16.mxu0 0
    %2413 = vmatpush1.bf16.msra.mxu0 0
    %2414 = vmatprep.subr.bf16.mxu0 0
    %2415 = vmatpush1.bf16.msra.mxu0 0
    %2416 = vmatprep.subr.bf16.mxu0 0
    %2417 = vmatpush1.bf16.msra.mxu0 0
    %2418 = vmatprep.subr.bf16.mxu0 0
    %2419 = vmatpush1.bf16.msra.mxu0 0
    %2420 = vmatprep.subr.bf16.mxu0 0
    %2421 = vmatpush1.bf16.msra.mxu0 0
    %2422 = vmatprep.subr.bf16.mxu0 0
    %2423 = vmatpush1.bf16.msra.mxu0 0
    %2424 = vmatprep.subr.bf16.mxu0 0
    %2425 = vmatpush1.bf16.msra.mxu0 0
    %2426 = vmatprep.subr.bf16.mxu0 0
    %2427 = vmatpush1.bf16.msra.mxu0 0
    %2428 = vmatprep.subr.bf16.mxu0 0
    %2429 = vmatpush1.bf16.msra.mxu0 0
    %2430 = vmatprep.subr.bf16.mxu0 0
    %2431 = vmatpush1.bf16.msra.mxu0 0
    %2432 = vmatprep.mubr.bf16.mxu0 0
    %2433 = vmatmul.mubr.bf16.gmra.mrb[0].mxu0 %v2398
    %v2434 = vpop.f32.mrb[0].mxu0
    %v2435 = vadd.f32 %v2396, %v2434
    %v2436 = vpop.f32.mrb[0].mxu0
    %v2437 = vpop.f32.mrb[0].mxu0
    %v2438 = vpop.f32.mrb[0].mxu0
    %2439 = vdwg.mxu0
    %v2440 = vadd.f32 %v2383, %v2435
    %v2441 = vmul.f32 %v2440, %v2066
    %v2442 = vmax.f32 %v2441, 0.0
    %v2443 = vld [vmem:[#allocation2 + $0x381] sm:$0xff]
    %v2444 = vld [vmem:[#allocation2 + $0x389] sm:$0xff]
    %v2445 = vld [vmem:[#allocation2 + $0x391] sm:$0xff]
    %v2446 = vld [vmem:[#allocation2 + $0x399] sm:$0xff]
    %v2447 = vld [vmem:[#allocation2 + $0x3a1] sm:$0x1]
    %v2448 = vpack.c.bf16 %v2442, %v2442
    %v2449 = vpack.c.bf16 %v2444, %v2443
    %v2450 = vpack.c.bf16 %v2446, %v2445
    %v2451 = vlaneseq
    %v2452 = vshrl.u32 %v2451, 7
    %v2453 = vsub.s32 0, %v2452
    %v2454 = vrot.slane %v2447, %v2453
    %v2456 = vsel %vm39, %v2448, 0
    %2458 = vmatprep.subr.bf16.mxu0 0
    %2459 = vmatpush1.bf16.msra.mxu0 %v2449
    %2460 = vmatprep.subr.bf16.mxu0 0
    %2461 = vmatpush1.bf16.msra.mxu0 %v2450
    %2462 = vmatprep.subr.bf16.mxu0 0
    %2463 = vmatpush1.bf16.msra.mxu0 0
    %2464 = vmatprep.subr.bf16.mxu0 0
    %2465 = vmatpush1.bf16.msra.mxu0 0
    %2466 = vmatprep.subr.bf16.mxu0 0
    %2467 = vmatpush1.bf16.msra.mxu0 0
    %2468 = vmatprep.subr.bf16.mxu0 0
    %2469 = vmatpush1.bf16.msra.mxu0 0
    %2470 = vmatprep.subr.bf16.mxu0 0
    %2471 = vmatpush1.bf16.msra.mxu0 0
    %2472 = vmatprep.subr.bf16.mxu0 0
    %2473 = vmatpush1.bf16.msra.mxu0 0
    %2474 = vmatprep.subr.bf16.mxu0 0
    %2475 = vmatpush1.bf16.msra.mxu0 0
    %2476 = vmatprep.subr.bf16.mxu0 0
    %2477 = vmatpush1.bf16.msra.mxu0 0
    %2478 = vmatprep.subr.bf16.mxu0 0
    %2479 = vmatpush1.bf16.msra.mxu0 0
    %2480 = vmatprep.subr.bf16.mxu0 0
    %2481 = vmatpush1.bf16.msra.mxu0 0
    %2482 = vmatprep.subr.bf16.mxu0 0
    %2483 = vmatpush1.bf16.msra.mxu0 0
    %2484 = vmatprep.subr.bf16.mxu0 0
    %2485 = vmatpush1.bf16.msra.mxu0 0
    %2486 = vmatprep.subr.bf16.mxu0 0
    %2487 = vmatpush1.bf16.msra.mxu0 0
    %2488 = vmatprep.subr.bf16.mxu0 0
    %2489 = vmatpush1.bf16.msra.mxu0 0
    %2490 = vmatprep.mubr.bf16.mxu0 0
    %2491 = vmatmul.mubr.bf16.gmra.mrb[0].mxu0 %v2456
    %v2492 = vpop.f32.mrb[0].mxu0
    %v2493 = vadd.f32 %v2454, %v2492
    %v2494 = vpop.f32.mrb[0].mxu0
    %v2495 = vpop.f32.mrb[0].mxu0
    %v2496 = vpop.f32.mrb[0].mxu0
    %2497 = vdwg.mxu0
    %v2498 = vsel %vm791, %v2493, -inf
    %2499 = vmax.xlane.f32.xlu0 %v2498
    %v2500 = vpop.xlane.xlu0 %2499
    %v2501 = vsub.f32 %v2493, %v2500
    %v2502 = vmul.f32 %v2501, 1.442695
    %v2503 = vpow.pop %v2502
    %v2504 = vsel %vm791, %v2503, 0.0
    %2505 = vadd.xlane.f32.xlu0 %v2504
    %v2506 = vpop.xlane.xlu0 %2505
    %v2507 = vrcp.pop %v2506
    %v2508 = vmul.f32 %v2503, %v2507
    %v2509 = vld [vmem:[#allocation2 + $0x3a2] sm:$0xff]
    %v2510 = vld [vmem:[#allocation2 + $0x3aa] sm:$0xff]
    %v2511 = vld [vmem:[#allocation2 + $0x3b2] sm:$0xff]
    %v2512 = vld [vmem:[#allocation2 + $0x3ba] sm:$0xff]
    %v2513 = vld [vmem:[#allocation2 + $0x3c2] sm:$0x1]
    %v2514 = vpack.c.bf16 %v1958, %v1958
    %v2515 = vpack.c.bf16 %v2510, %v2509
    %v2516 = vpack.c.bf16 %v2512, %v2511
    %v2517 = vlaneseq
    %v2518 = vshrl.u32 %v2517, 7
    %v2519 = vsub.s32 0, %v2518
    %v2520 = vrot.slane %v2513, %v2519
    %v2522 = vsel %vm39, %v2514, 0
    %2524 = vmatprep.subr.bf16.mxu0 0
    %2525 = vmatpush1.bf16.msra.mxu0 %v2515
    %2526 = vmatprep.subr.bf16.mxu0 0
    %2527 = vmatpush1.bf16.msra.mxu0 %v2516
    %2528 = vmatprep.subr.bf16.mxu0 0
    %2529 = vmatpush1.bf16.msra.mxu0 0
    %2530 = vmatprep.subr.bf16.mxu0 0
    %2531 = vmatpush1.bf16.msra.mxu0 0
    %2532 = vmatprep.subr.bf16.mxu0 0
    %2533 = vmatpush1.bf16.msra.mxu0 0
    %2534 = vmatprep.subr.bf16.mxu0 0
    %2535 = vmatpush1.bf16.msra.mxu0 0
    %2536 = vmatprep.subr.bf16.mxu0 0
    %2537 = vmatpush1.bf16.msra.mxu0 0
    %2538 = vmatprep.subr.bf16.mxu0 0
    %2539 = vmatpush1.bf16.msra.mxu0 0
    %2540 = vmatprep.subr.bf16.mxu0 0
    %2541 = vmatpush1.bf16.msra.mxu0 0
    %2542 = vmatprep.subr.bf16.mxu0 0
    %2543 = vmatpush1.bf16.msra.mxu0 0
    %2544 = vmatprep.subr.bf16.mxu0 0
    %2545 = vmatpush1.bf16.msra.mxu0 0
    %2546 = vmatprep.subr.bf16.mxu0 0
    %2547 = vmatpush1.bf16.msra.mxu0 0
    %2548 = vmatprep.subr.bf16.mxu0 0
    %2549 = vmatpush1.bf16.msra.mxu0 0
    %2550 = vmatprep.subr.bf16.mxu0 0
    %2551 = vmatpush1.bf16.msra.mxu0 0
    %2552 = vmatprep.subr.bf16.mxu0 0
    %2553 = vmatpush1.bf16.msra.mxu0 0
    %2554 = vmatprep.subr.bf16.mxu0 0
    %2555 = vmatpush1.bf16.msra.mxu0 0
    %2556 = vmatprep.mubr.bf16.mxu0 0
    %2557 = vmatmul.mubr.bf16.gmra.mrb[0].mxu0 %v2522
    %v2558 = vpop.f32.mrb[0].mxu0
    %v2559 = vadd.f32 %v2520, %v2558
    %v2560 = vpop.f32.mrb[0].mxu0
    %v2561 = vpop.f32.mrb[0].mxu0
    %v2562 = vpop.f32.mrb[0].mxu0
    %2563 = vdwg.mxu0
    %2564 = vmatprep.subr.bf16.mxu0 0
    %2565 = vmatpush1.bf16.msra.mxu0 %v860
    %2566 = vmatprep.subr.bf16.mxu0 0
    %2567 = vmatpush1.bf16.msra.mxu0 0
    %2568 = vmatprep.subr.bf16.mxu0 0
    %2569 = vmatpush1.bf16.msra.mxu0 0
    %2570 = vmatprep.subr.bf16.mxu0 0
    %2571 = vmatpush1.bf16.msra.mxu0 0
    %2572 = vmatprep.subr.bf16.mxu0 0
    %2573 = vmatpush1.bf16.msra.mxu0 0
    %2574 = vmatprep.subr.bf16.mxu0 0
    %2575 = vmatpush1.bf16.msra.mxu0 0
    %2576 = vmatprep.subr.bf16.mxu0 0
    %2577 = vmatpush1.bf16.msra.mxu0 0
    %2578 = vmatprep.subr.bf16.mxu0 0
    %2579 = vmatpush1.bf16.msra.mxu0 0
    %2580 = vmatprep.subr.bf16.mxu0 0
    %2581 = vmatpush1.bf16.msra.mxu0 0
    %2582 = vmatprep.subr.bf16.mxu0 0
    %2583 = vmatpush1.bf16.msra.mxu0 0
    %2584 = vmatprep.subr.bf16.mxu0 0
    %2585 = vmatpush1.bf16.msra.mxu0 0
    %2586 = vmatprep.subr.bf16.mxu0 0
    %2587 = vmatpush1.bf16.msra.mxu0 0
    %2588 = vmatprep.subr.bf16.mxu0 0
    %2589 = vmatpush1.bf16.msra.mxu0 0
    %2590 = vmatprep.subr.bf16.mxu0 0
    %2591 = vmatpush1.bf16.msra.mxu0 0
    %2592 = vmatprep.subr.bf16.mxu0 0
    %2593 = vmatpush1.bf16.msra.mxu0 0
    %2594 = vmatprep.subr.bf16.mxu0 0
    %2595 = vmatpush1.bf16.msra.mxu0 0
    %2596 = vmatprep.mubr.bf16.mxu0 0
    %2597 = vmatmul.mubr.bf16.gmra.mrb[0].mxu0 %v2189
    %v2598 = vpop.f32.mrb[0].mxu0
    %v2599 = vadd.f32 0.0, %v2598
    %v2600 = vpop.f32.mrb[0].mxu0
    %v2601 = vpop.f32.mrb[0].mxu0
    %v2602 = vpop.f32.mrb[0].mxu0
    %2603 = vdwg.mxu0
    %v2604 = vmul.f32 %v2599, %v2559
    %2605 = vmatprep.subr.bf16.mxu0 0
    %2606 = vmatpush1.bf16.msra.mxu0 %v904
    %2607 = vmatprep.subr.bf16.mxu0 0
    %2608 = vmatpush1.bf16.msra.mxu0 0
    %2609 = vmatprep.subr.bf16.mxu0 0
    %2610 = vmatpush1.bf16.msra.mxu0 0
    %2611 = vmatprep.subr.bf16.mxu0 0
    %2612 = vmatpush1.bf16.msra.mxu0 0
    %2613 = vmatprep.subr.bf16.mxu0 0
    %2614 = vmatpush1.bf16.msra.mxu0 0
    %2615 = vmatprep.subr.bf16.mxu0 0
    %2616 = vmatpush1.bf16.msra.mxu0 0
    %2617 = vmatprep.subr.bf16.mxu0 0
    %2618 = vmatpush1.bf16.msra.mxu0 0
    %2619 = vmatprep.subr.bf16.mxu0 0
    %2620 = vmatpush1.bf16.msra.mxu0 0
    %2621 = vmatprep.subr.bf16.mxu0 0
    %2622 = vmatpush1.bf16.msra.mxu0 0
    %2623 = vmatprep.subr.bf16.mxu0 0
    %2624 = vmatpush1.bf16.msra.mxu0 0
    %2625 = vmatprep.subr.bf16.mxu0 0
    %2626 = vmatpush1.bf16.msra.mxu0 0
    %2627 = vmatprep.subr.bf16.mxu0 0
    %2628 = vmatpush1.bf16.msra.mxu0 0
    %2629 = vmatprep.subr.bf16.mxu0 0
    %2630 = vmatpush1.bf16.msra.mxu0 0
    %2631 = vmatprep.subr.bf16.mxu0 0
    %2632 = vmatpush1.bf16.msra.mxu0 0
    %2633 = vmatprep.subr.bf16.mxu0 0
    %2634 = vmatpush1.bf16.msra.mxu0 0
    %2635 = vmatprep.subr.bf16.mxu0 0
    %2636 = vmatpush1.bf16.msra.mxu0 0
    %2637 = vmatprep.mubr.bf16.mxu0 0
    %2638 = vmatmul.mubr.bf16.gmra.mrb[0].mxu0 %v2189
    %v2639 = vpop.f32.mrb[0].mxu0
    %v2640 = vadd.f32 0.0, %v2639
    %v2641 = vpop.f32.mrb[0].mxu0
    %v2642 = vpop.f32.mrb[0].mxu0
    %v2643 = vpop.f32.mrb[0].mxu0
    %2644 = vdwg.mxu0
    %v2645 = vpack.c.bf16 %v2559, %v2559
    %2646 = vmatprep.subr.bf16.mxu0 0
    %2647 = vmatpush1.bf16.msra.mxu0 %v962
    %2648 = vmatprep.subr.bf16.mxu0 0
    %2649 = vmatpush1.bf16.msra.mxu0 %v963
    %2650 = vmatprep.subr.bf16.mxu0 0
    %2651 = vmatpush1.bf16.msra.mxu0 %v964
    %2652 = vmatprep.subr.bf16.mxu0 0
    %2653 = vmatpush1.bf16.msra.mxu0 %v965
    %2654 = vmatprep.subr.bf16.mxu0 0
    %2655 = vmatpush1.bf16.msra.mxu0 %v966
    %2656 = vmatprep.subr.bf16.mxu0 0
    %2657 = vmatpush1.bf16.msra.mxu0 %v967
    %2658 = vmatprep.subr.bf16.mxu0 0
    %2659 = vmatpush1.bf16.msra.mxu0 %v968
    %2660 = vmatprep.subr.bf16.mxu0 0
    %2661 = vmatpush1.bf16.msra.mxu0 %v969
    %2662 = vmatprep.subr.bf16.mxu0 0
    %2663 = vmatpush1.bf16.msra.mxu0 0
    %2664 = vmatprep.subr.bf16.mxu0 0
    %2665 = vmatpush1.bf16.msra.mxu0 0
    %2666 = vmatprep.subr.bf16.mxu0 0
    %2667 = vmatpush1.bf16.msra.mxu0 0
    %2668 = vmatprep.subr.bf16.mxu0 0
    %2669 = vmatpush1.bf16.msra.mxu0 0
    %2670 = vmatprep.subr.bf16.mxu0 0
    %2671 = vmatpush1.bf16.msra.mxu0 0
    %2672 = vmatprep.subr.bf16.mxu0 0
    %2673 = vmatpush1.bf16.msra.mxu0 0
    %2674 = vmatprep.subr.bf16.mxu0 0
    %2675 = vmatpush1.bf16.msra.mxu0 0
    %2676 = vmatprep.subr.bf16.mxu0 0
    %2677 = vmatpush1.bf16.msra.mxu0 0
    %2678 = vmatprep.mubr.bf16.mxu0 0
    %2679 = vmatmul.mubr.bf16.gmra.mrb[0].mxu0 %v2645
    %v2680 = vpop.f32.mrb[0].mxu0
    %v2681 = vadd.f32 0.0, %v2680
    %v2682 = vpop.f32.mrb[0].mxu0
    %v2683 = vpop.f32.mrb[0].mxu0
    %v2684 = vpop.f32.mrb[0].mxu0
    %2685 = vdwg.mxu0
    %v2686 = vmul.f32 %v2640, %v2681
    %v2687 = vadd.f32 %v2604, %v2686
    %2688 = vmatprep.subr.bf16.mxu0 0
    %2689 = vmatpush1.bf16.msra.mxu0 %v1014
    %2690 = vmatprep.subr.bf16.mxu0 0
    %2691 = vmatpush1.bf16.msra.mxu0 0
    %2692 = vmatprep.subr.bf16.mxu0 0
    %2693 = vmatpush1.bf16.msra.mxu0 0
    %2694 = vmatprep.subr.bf16.mxu0 0
    %2695 = vmatpush1.bf16.msra.mxu0 0
    %2696 = vmatprep.subr.bf16.mxu0 0
    %2697 = vmatpush1.bf16.msra.mxu0 0
    %2698 = vmatprep.subr.bf16.mxu0 0
    %2699 = vmatpush1.bf16.msra.mxu0 0
    %2700 = vmatprep.subr.bf16.mxu0 0
    %2701 = vmatpush1.bf16.msra.mxu0 0
    %2702 = vmatprep.subr.bf16.mxu0 0
    %2703 = vmatpush1.bf16.msra.mxu0 0
    %2704 = vmatprep.subr.bf16.mxu0 0
    %2705 = vmatpush1.bf16.msra.mxu0 0
    %2706 = vmatprep.subr.bf16.mxu0 0
    %2707 = vmatpush1.bf16.msra.mxu0 0
    %2708 = vmatprep.subr.bf16.mxu0 0
    %2709 = vmatpush1.bf16.msra.mxu0 0
    %2710 = vmatprep.subr.bf16.mxu0 0
    %2711 = vmatpush1.bf16.msra.mxu0 0
    %2712 = vmatprep.subr.bf16.mxu0 0
    %2713 = vmatpush1.bf16.msra.mxu0 0
    %2714 = vmatprep.subr.bf16.mxu0 0
    %2715 = vmatpush1.bf16.msra.mxu0 0
    %2716 = vmatprep.subr.bf16.mxu0 0
    %2717 = vmatpush1.bf16.msra.mxu0 0
    %2718 = vmatprep.subr.bf16.mxu0 0
    %2719 = vmatpush1.bf16.msra.mxu0 0
    %2720 = vmatprep.mubr.bf16.mxu0 0
    %2721 = vmatmul.mubr.bf16.gmra.mrb[0].mxu0 %v2189
    %v2722 = vpop.f32.mrb[0].mxu0
    %v2723 = vadd.f32 0.0, %v2722
    %v2724 = vpop.f32.mrb[0].mxu0
    %v2725 = vpop.f32.mrb[0].mxu0
    %v2726 = vpop.f32.mrb[0].mxu0
    %2727 = vdwg.mxu0
    %2728 = vmatprep.subr.bf16.mxu0 0
    %2729 = vmatpush1.bf16.msra.mxu0 %v1071
    %2730 = vmatprep.subr.bf16.mxu0 0
    %2731 = vmatpush1.bf16.msra.mxu0 %v1072
    %2732 = vmatprep.subr.bf16.mxu0 0
    %2733 = vmatpush1.bf16.msra.mxu0 %v1073
    %2734 = vmatprep.subr.bf16.mxu0 0
    %2735 = vmatpush1.bf16.msra.mxu0 %v1074
    %2736 = vmatprep.subr.bf16.mxu0 0
    %2737 = vmatpush1.bf16.msra.mxu0 %v1075
    %2738 = vmatprep.subr.bf16.mxu0 0
    %2739 = vmatpush1.bf16.msra.mxu0 %v1076
    %2740 = vmatprep.subr.bf16.mxu0 0
    %2741 = vmatpush1.bf16.msra.mxu0 %v1077
    %2742 = vmatprep.subr.bf16.mxu0 0
    %2743 = vmatpush1.bf16.msra.mxu0 %v1078
    %2744 = vmatprep.subr.bf16.mxu0 0
    %2745 = vmatpush1.bf16.msra.mxu0 0
    %2746 = vmatprep.subr.bf16.mxu0 0
    %2747 = vmatpush1.bf16.msra.mxu0 0
    %2748 = vmatprep.subr.bf16.mxu0 0
    %2749 = vmatpush1.bf16.msra.mxu0 0
    %2750 = vmatprep.subr.bf16.mxu0 0
    %2751 = vmatpush1.bf16.msra.mxu0 0
    %2752 = vmatprep.subr.bf16.mxu0 0
    %2753 = vmatpush1.bf16.msra.mxu0 0
    %2754 = vmatprep.subr.bf16.mxu0 0
    %2755 = vmatpush1.bf16.msra.mxu0 0
    %2756 = vmatprep.subr.bf16.mxu0 0
    %2757 = vmatpush1.bf16.msra.mxu0 0
    %2758 = vmatprep.subr.bf16.mxu0 0
    %2759 = vmatpush1.bf16.msra.mxu0 0
    %2760 = vmatprep.mubr.bf16.mxu0 0
    %2761 = vmatmul.mubr.bf16.gmra.mrb[0].mxu0 %v2645
    %v2762 = vpop.f32.mrb[0].mxu0
    %v2763 = vadd.f32 0.0, %v2762
    %v2764 = vpop.f32.mrb[0].mxu0
    %v2765 = vpop.f32.mrb[0].mxu0
    %v2766 = vpop.f32.mrb[0].mxu0
    %2767 = vdwg.mxu0
    %v2768 = vmul.f32 %v2723, %v2763
    %v2769 = vadd.f32 %v2687, %v2768
    %2770 = vmatprep.subr.bf16.mxu0 0
    %2771 = vmatpush1.bf16.msra.mxu0 %v1123
    %2772 = vmatprep.subr.bf16.mxu0 0
    %2773 = vmatpush1.bf16.msra.mxu0 0
    %2774 = vmatprep.subr.bf16.mxu0 0
    %2775 = vmatpush1.bf16.msra.mxu0 0
    %2776 = vmatprep.subr.bf16.mxu0 0
    %2777 = vmatpush1.bf16.msra.mxu0 0
    %2778 = vmatprep.subr.bf16.mxu0 0
    %2779 = vmatpush1.bf16.msra.mxu0 0
    %2780 = vmatprep.subr.bf16.mxu0 0
    %2781 = vmatpush1.bf16.msra.mxu0 0
    %2782 = vmatprep.subr.bf16.mxu0 0
    %2783 = vmatpush1.bf16.msra.mxu0 0
    %2784 = vmatprep.subr.bf16.mxu0 0
    %2785 = vmatpush1.bf16.msra.mxu0 0
    %2786 = vmatprep.subr.bf16.mxu0 0
    %2787 = vmatpush1.bf16.msra.mxu0 0
    %2788 = vmatprep.subr.bf16.mxu0 0
    %2789 = vmatpush1.bf16.msra.mxu0 0
    %2790 = vmatprep.subr.bf16.mxu0 0
    %2791 = vmatpush1.bf16.msra.mxu0 0
    %2792 = vmatprep.subr.bf16.mxu0 0
    %2793 = vmatpush1.bf16.msra.mxu0 0
    %2794 = vmatprep.subr.bf16.mxu0 0
    %2795 = vmatpush1.bf16.msra.mxu0 0
    %2796 = vmatprep.subr.bf16.mxu0 0
    %2797 = vmatpush1.bf16.msra.mxu0 0
    %2798 = vmatprep.subr.bf16.mxu0 0
    %2799 = vmatpush1.bf16.msra.mxu0 0
    %2800 = vmatprep.subr.bf16.mxu0 0
    %2801 = vmatpush1.bf16.msra.mxu0 0
    %2802 = vmatprep.mubr.bf16.mxu0 0
    %2803 = vmatmul.mubr.bf16.gmra.mrb[0].mxu0 %v2189
    %v2804 = vpop.f32.mrb[0].mxu0
    %v2805 = vadd.f32 0.0, %v2804
    %v2806 = vpop.f32.mrb[0].mxu0
    %v2807 = vpop.f32.mrb[0].mxu0
    %v2808 = vpop.f32.mrb[0].mxu0
    %2809 = vdwg.mxu0
    %2810 = vmatprep.subr.bf16.mxu0 0
    %2811 = vmatpush1.bf16.msra.mxu0 %v1180
    %2812 = vmatprep.subr.bf16.mxu0 0
    %2813 = vmatpush1.bf16.msra.mxu0 %v1181
    %2814 = vmatprep.subr.bf16.mxu0 0
    %2815 = vmatpush1.bf16.msra.mxu0 %v1182
    %2816 = vmatprep.subr.bf16.mxu0 0
    %2817 = vmatpush1.bf16.msra.mxu0 %v1183
    %2818 = vmatprep.subr.bf16.mxu0 0
    %2819 = vmatpush1.bf16.msra.mxu0 %v1184
    %2820 = vmatprep.subr.bf16.mxu0 0
    %2821 = vmatpush1.bf16.msra.mxu0 %v1185
    %2822 = vmatprep.subr.bf16.mxu0 0
    %2823 = vmatpush1.bf16.msra.mxu0 %v1186
    %2824 = vmatprep.subr.bf16.mxu0 0
    %2825 = vmatpush1.bf16.msra.mxu0 %v1187
    %2826 = vmatprep.subr.bf16.mxu0 0
    %2827 = vmatpush1.bf16.msra.mxu0 0
    %2828 = vmatprep.subr.bf16.mxu0 0
    %2829 = vmatpush1.bf16.msra.mxu0 0
    %2830 = vmatprep.subr.bf16.mxu0 0
    %2831 = vmatpush1.bf16.msra.mxu0 0
    %2832 = vmatprep.subr.bf16.mxu0 0
    %2833 = vmatpush1.bf16.msra.mxu0 0
    %2834 = vmatprep.subr.bf16.mxu0 0
    %2835 = vmatpush1.bf16.msra.mxu0 0
    %2836 = vmatprep.subr.bf16.mxu0 0
    %2837 = vmatpush1.bf16.msra.mxu0 0
    %2838 = vmatprep.subr.bf16.mxu0 0
    %2839 = vmatpush1.bf16.msra.mxu0 0
    %2840 = vmatprep.subr.bf16.mxu0 0
    %2841 = vmatpush1.bf16.msra.mxu0 0
    %2842 = vmatprep.mubr.bf16.mxu0 0
    %2843 = vmatmul.mubr.bf16.gmra.mrb[0].mxu0 %v2645
    %v2844 = vpop.f32.mrb[0].mxu0
    %v2845 = vadd.f32 0.0, %v2844
    %v2846 = vpop.f32.mrb[0].mxu0
    %v2847 = vpop.f32.mrb[0].mxu0
    %v2848 = vpop.f32.mrb[0].mxu0
    %2849 = vdwg.mxu0
    %v2850 = vmul.f32 %v2805, %v2845
    %v2851 = vadd.f32 %v2769, %v2850
    %v2852 = vmax.f32 %v2851, 0.0
    %v2853 = vld [vmem:[#allocation2 + $0x3c3] sm:$0xff]
    %v2854 = vld [vmem:[#allocation2 + $0x3cb] sm:$0xff]
    %v2855 = vld [vmem:[#allocation2 + $0x3d3] sm:$0xff]
    %v2856 = vld [vmem:[#allocation2 + $0x3db] sm:$0xff]
    %v2857 = vld [vmem:[#allocation2 + $0x3e3] sm:$0xff]
    %v2858 = vld [vmem:[#allocation2 + $0x3eb] sm:$0xff]
    %v2859 = vld [vmem:[#allocation2 + $0x3f3] sm:$0xff]
    %v2860 = vld [vmem:[#allocation2 + $0x3fb] sm:$0xff]
    %v2861 = vld [vmem:[#allocation2 + $0x403] sm:$0xff]
    %v2862 = vld [vmem:[#allocation2 + $0x40b] sm:$0xff]
    %v2863 = vld [vmem:[#allocation2 + $0x413] sm:$0xff]
    %v2864 = vld [vmem:[#allocation2 + $0x41b] sm:$0xff]
    %v2865 = vld [vmem:[#allocation2 + $0x423] sm:$0xff]
    %v2866 = vld [vmem:[#allocation2 + $0x42b] sm:$0xff]
    %v2867 = vld [vmem:[#allocation2 + $0x433] sm:$0xff]
    %v2868 = vld [vmem:[#allocation2 + $0x43b] sm:$0xff]
    %v2869 = vld [vmem:[#allocation2 + $0x443] sm:$0x1]
    %v2870 = vpack.c.bf16 %v2852, %v2852
    %v2871 = vpack.c.bf16 %v2854, %v2853
    %v2872 = vpack.c.bf16 %v2856, %v2855
    %v2873 = vpack.c.bf16 %v2858, %v2857
    %v2874 = vpack.c.bf16 %v2860, %v2859
    %v2875 = vpack.c.bf16 %v2862, %v2861
    %v2876 = vpack.c.bf16 %v2864, %v2863
    %v2877 = vpack.c.bf16 %v2866, %v2865
    %v2878 = vpack.c.bf16 %v2868, %v2867
    %v2879 = vlaneseq
    %v2880 = vshrl.u32 %v2879, 7
    %v2881 = vsub.s32 0, %v2880
    %v2882 = vrot.slane %v2869, %v2881
    %2883 = vmatprep.subr.bf16.mxu0 0
    %2884 = vmatpush1.bf16.msra.mxu0 %v2871
    %2885 = vmatprep.subr.bf16.mxu0 0
    %2886 = vmatpush1.bf16.msra.mxu0 %v2872
    %2887 = vmatprep.subr.bf16.mxu0 0
    %2888 = vmatpush1.bf16.msra.mxu0 %v2873
    %2889 = vmatprep.subr.bf16.mxu0 0
    %2890 = vmatpush1.bf16.msra.mxu0 %v2874
    %2891 = vmatprep.subr.bf16.mxu0 0
    %2892 = vmatpush1.bf16.msra.mxu0 %v2875
    %2893 = vmatprep.subr.bf16.mxu0 0
    %2894 = vmatpush1.bf16.msra.mxu0 %v2876
    %2895 = vmatprep.subr.bf16.mxu0 0
    %2896 = vmatpush1.bf16.msra.mxu0 %v2877
    %2897 = vmatprep.subr.bf16.mxu0 0
    %2898 = vmatpush1.bf16.msra.mxu0 %v2878
    %2899 = vmatprep.subr.bf16.mxu0 0
    %2900 = vmatpush1.bf16.msra.mxu0 0
    %2901 = vmatprep.subr.bf16.mxu0 0
    %2902 = vmatpush1.bf16.msra.mxu0 0
    %2903 = vmatprep.subr.bf16.mxu0 0
    %2904 = vmatpush1.bf16.msra.mxu0 0
    %2905 = vmatprep.subr.bf16.mxu0 0
    %2906 = vmatpush1.bf16.msra.mxu0 0
    %2907 = vmatprep.subr.bf16.mxu0 0
    %2908 = vmatpush1.bf16.msra.mxu0 0
    %2909 = vmatprep.subr.bf16.mxu0 0
    %2910 = vmatpush1.bf16.msra.mxu0 0
    %2911 = vmatprep.subr.bf16.mxu0 0
    %2912 = vmatpush1.bf16.msra.mxu0 0
    %2913 = vmatprep.subr.bf16.mxu0 0
    %2914 = vmatpush1.bf16.msra.mxu0 0
    %2915 = vmatprep.mubr.bf16.mxu0 0
    %2916 = vmatmul.mubr.bf16.gmra.mrb[0].mxu0 %v2870
    %v2917 = vpop.f32.mrb[0].mxu0
    %v2918 = vadd.f32 %v2882, %v2917
    %v2919 = vpop.f32.mrb[0].mxu0
    %v2920 = vpop.f32.mrb[0].mxu0
    %v2921 = vpop.f32.mrb[0].mxu0
    %2922 = vdwg.mxu0
    %2923 = vmatprep.subr.bf16.mxu0 0
    %2924 = vmatpush1.bf16.msra.mxu0 %v860
    %2925 = vmatprep.subr.bf16.mxu0 0
    %2926 = vmatpush1.bf16.msra.mxu0 0
    %2927 = vmatprep.subr.bf16.mxu0 0
    %2928 = vmatpush1.bf16.msra.mxu0 0
    %2929 = vmatprep.subr.bf16.mxu0 0
    %2930 = vmatpush1.bf16.msra.mxu0 0
    %2931 = vmatprep.subr.bf16.mxu0 0
    %2932 = vmatpush1.bf16.msra.mxu0 0
    %2933 = vmatprep.subr.bf16.mxu0 0
    %2934 = vmatpush1.bf16.msra.mxu0 0
    %2935 = vmatprep.subr.bf16.mxu0 0
    %2936 = vmatpush1.bf16.msra.mxu0 0
    %2937 = vmatprep.subr.bf16.mxu0 0
    %2938 = vmatpush1.bf16.msra.mxu0 0
    %2939 = vmatprep.subr.bf16.mxu0 0
    %2940 = vmatpush1.bf16.msra.mxu0 0
    %2941 = vmatprep.subr.bf16.mxu0 0
    %2942 = vmatpush1.bf16.msra.mxu0 0
    %2943 = vmatprep.subr.bf16.mxu0 0
    %2944 = vmatpush1.bf16.msra.mxu0 0
    %2945 = vmatprep.subr.bf16.mxu0 0
    %2946 = vmatpush1.bf16.msra.mxu0 0
    %2947 = vmatprep.subr.bf16.mxu0 0
    %2948 = vmatpush1.bf16.msra.mxu0 0
    %2949 = vmatprep.subr.bf16.mxu0 0
    %2950 = vmatpush1.bf16.msra.mxu0 0
    %2951 = vmatprep.subr.bf16.mxu0 0
    %2952 = vmatpush1.bf16.msra.mxu0 0
    %2953 = vmatprep.subr.bf16.mxu0 0
    %2954 = vmatpush1.bf16.msra.mxu0 0
    %2955 = vmatprep.mubr.bf16.mxu0 0
    %2956 = vmatmul.mubr.bf16.gmra.mrb[0].mxu0 %v2398
    %v2957 = vpop.f32.mrb[0].mxu0
    %v2958 = vadd.f32 0.0, %v2957
    %v2959 = vpop.f32.mrb[0].mxu0
    %v2960 = vpop.f32.mrb[0].mxu0
    %v2961 = vpop.f32.mrb[0].mxu0
    %2962 = vdwg.mxu0
    %v2963 = vmul.f32 %v2958, %v2918
    %2964 = vmatprep.subr.bf16.mxu0 0
    %2965 = vmatpush1.bf16.msra.mxu0 %v904
    %2966 = vmatprep.subr.bf16.mxu0 0
    %2967 = vmatpush1.bf16.msra.mxu0 0
    %2968 = vmatprep.subr.bf16.mxu0 0
    %2969 = vmatpush1.bf16.msra.mxu0 0
    %2970 = vmatprep.subr.bf16.mxu0 0
    %2971 = vmatpush1.bf16.msra.mxu0 0
    %2972 = vmatprep.subr.bf16.mxu0 0
    %2973 = vmatpush1.bf16.msra.mxu0 0
    %2974 = vmatprep.subr.bf16.mxu0 0
    %2975 = vmatpush1.bf16.msra.mxu0 0
    %2976 = vmatprep.subr.bf16.mxu0 0
    %2977 = vmatpush1.bf16.msra.mxu0 0
    %2978 = vmatprep.subr.bf16.mxu0 0
    %2979 = vmatpush1.bf16.msra.mxu0 0
    %2980 = vmatprep.subr.bf16.mxu0 0
    %2981 = vmatpush1.bf16.msra.mxu0 0
    %2982 = vmatprep.subr.bf16.mxu0 0
    %2983 = vmatpush1.bf16.msra.mxu0 0
    %2984 = vmatprep.subr.bf16.mxu0 0
    %2985 = vmatpush1.bf16.msra.mxu0 0
    %2986 = vmatprep.subr.bf16.mxu0 0
    %2987 = vmatpush1.bf16.msra.mxu0 0
    %2988 = vmatprep.subr.bf16.mxu0 0
    %2989 = vmatpush1.bf16.msra.mxu0 0
    %2990 = vmatprep.subr.bf16.mxu0 0
    %2991 = vmatpush1.bf16.msra.mxu0 0
    %2992 = vmatprep.subr.bf16.mxu0 0
    %2993 = vmatpush1.bf16.msra.mxu0 0
    %2994 = vmatprep.subr.bf16.mxu0 0
    %2995 = vmatpush1.bf16.msra.mxu0 0
    %2996 = vmatprep.mubr.bf16.mxu0 0
    %2997 = vmatmul.mubr.bf16.gmra.mrb[0].mxu0 %v2398
    %v2998 = vpop.f32.mrb[0].mxu0
    %v2999 = vadd.f32 0.0, %v2998
    %v3000 = vpop.f32.mrb[0].mxu0
    %v3001 = vpop.f32.mrb[0].mxu0
    %v3002 = vpop.f32.mrb[0].mxu0
    %3003 = vdwg.mxu0
    %v3004 = vpack.c.bf16 %v2918, %v2918
    %3005 = vmatprep.subr.bf16.mxu0 0
    %3006 = vmatpush1.bf16.msra.mxu0 %v962
    %3007 = vmatprep.subr.bf16.mxu0 0
    %3008 = vmatpush1.bf16.msra.mxu0 %v963
    %3009 = vmatprep.subr.bf16.mxu0 0
    %3010 = vmatpush1.bf16.msra.mxu0 %v964
    %3011 = vmatprep.subr.bf16.mxu0 0
    %3012 = vmatpush1.bf16.msra.mxu0 %v965
    %3013 = vmatprep.subr.bf16.mxu0 0
    %3014 = vmatpush1.bf16.msra.mxu0 %v966
    %3015 = vmatprep.subr.bf16.mxu0 0
    %3016 = vmatpush1.bf16.msra.mxu0 %v967
    %3017 = vmatprep.subr.bf16.mxu0 0
    %3018 = vmatpush1.bf16.msra.mxu0 %v968
    %3019 = vmatprep.subr.bf16.mxu0 0
    %3020 = vmatpush1.bf16.msra.mxu0 %v969
    %3021 = vmatprep.subr.bf16.mxu0 0
    %3022 = vmatpush1.bf16.msra.mxu0 0
    %3023 = vmatprep.subr.bf16.mxu0 0
    %3024 = vmatpush1.bf16.msra.mxu0 0
    %3025 = vmatprep.subr.bf16.mxu0 0
    %3026 = vmatpush1.bf16.msra.mxu0 0
    %3027 = vmatprep.subr.bf16.mxu0 0
    %3028 = vmatpush1.bf16.msra.mxu0 0
    %3029 = vmatprep.subr.bf16.mxu0 0
    %3030 = vmatpush1.bf16.msra.mxu0 0
    %3031 = vmatprep.subr.bf16.mxu0 0
    %3032 = vmatpush1.bf16.msra.mxu0 0
    %3033 = vmatprep.subr.bf16.mxu0 0
    %3034 = vmatpush1.bf16.msra.mxu0 0
    %3035 = vmatprep.subr.bf16.mxu0 0
    %3036 = vmatpush1.bf16.msra.mxu0 0
    %3037 = vmatprep.mubr.bf16.mxu0 0
    %3038 = vmatmul.mubr.bf16.gmra.mrb[0].mxu0 %v3004
    %v3039 = vpop.f32.mrb[0].mxu0
    %v3040 = vadd.f32 0.0, %v3039
    %v3041 = vpop.f32.mrb[0].mxu0
    %v3042 = vpop.f32.mrb[0].mxu0
    %v3043 = vpop.f32.mrb[0].mxu0
    %3044 = vdwg.mxu0
    %v3045 = vmul.f32 %v2999, %v3040
    %v3046 = vadd.f32 %v2963, %v3045
    %3047 = vmatprep.subr.bf16.mxu0 0
    %3048 = vmatpush1.bf16.msra.mxu0 %v1014
    %3049 = vmatprep.subr.bf16.mxu0 0
    %3050 = vmatpush1.bf16.msra.mxu0 0
    %3051 = vmatprep.subr.bf16.mxu0 0
    %3052 = vmatpush1.bf16.msra.mxu0 0
    %3053 = vmatprep.subr.bf16.mxu0 0
    %3054 = vmatpush1.bf16.msra.mxu0 0
    %3055 = vmatprep.subr.bf16.mxu0 0
    %3056 = vmatpush1.bf16.msra.mxu0 0
    %3057 = vmatprep.subr.bf16.mxu0 0
    %3058 = vmatpush1.bf16.msra.mxu0 0
    %3059 = vmatprep.subr.bf16.mxu0 0
    %3060 = vmatpush1.bf16.msra.mxu0 0
    %3061 = vmatprep.subr.bf16.mxu0 0
    %3062 = vmatpush1.bf16.msra.mxu0 0
    %3063 = vmatprep.subr.bf16.mxu0 0
    %3064 = vmatpush1.bf16.msra.mxu0 0
    %3065 = vmatprep.subr.bf16.mxu0 0
    %3066 = vmatpush1.bf16.msra.mxu0 0
    %3067 = vmatprep.subr.bf16.mxu0 0
    %3068 = vmatpush1.bf16.msra.mxu0 0
    %3069 = vmatprep.subr.bf16.mxu0 0
    %3070 = vmatpush1.bf16.msra.mxu0 0
    %3071 = vmatprep.subr.bf16.mxu0 0
    %3072 = vmatpush1.bf16.msra.mxu0 0
    %3073 = vmatprep.subr.bf16.mxu0 0
    %3074 = vmatpush1.bf16.msra.mxu0 0
    %3075 = vmatprep.subr.bf16.mxu0 0
    %3076 = vmatpush1.bf16.msra.mxu0 0
    %3077 = vmatprep.subr.bf16.mxu0 0
    %3078 = vmatpush1.bf16.msra.mxu0 0
    %3079 = vmatprep.mubr.bf16.mxu0 0
    %3080 = vmatmul.mubr.bf16.gmra.mrb[0].mxu0 %v2398
    %v3081 = vpop.f32.mrb[0].mxu0
    %v3082 = vadd.f32 0.0, %v3081
    %v3083 = vpop.f32.mrb[0].mxu0
    %v3084 = vpop.f32.mrb[0].mxu0
    %v3085 = vpop.f32.mrb[0].mxu0
    %3086 = vdwg.mxu0
    %3087 = vmatprep.subr.bf16.mxu0 0
    %3088 = vmatpush1.bf16.msra.mxu0 %v1071
    %3089 = vmatprep.subr.bf16.mxu0 0
    %3090 = vmatpush1.bf16.msra.mxu0 %v1072
    %3091 = vmatprep.subr.bf16.mxu0 0
    %3092 = vmatpush1.bf16.msra.mxu0 %v1073
    %3093 = vmatprep.subr.bf16.mxu0 0
    %3094 = vmatpush1.bf16.msra.mxu0 %v1074
    %3095 = vmatprep.subr.bf16.mxu0 0
    %3096 = vmatpush1.bf16.msra.mxu0 %v1075
    %3097 = vmatprep.subr.bf16.mxu0 0
    %3098 = vmatpush1.bf16.msra.mxu0 %v1076
    %3099 = vmatprep.subr.bf16.mxu0 0
    %3100 = vmatpush1.bf16.msra.mxu0 %v1077
    %3101 = vmatprep.subr.bf16.mxu0 0
    %3102 = vmatpush1.bf16.msra.mxu0 %v1078
    %3103 = vmatprep.subr.bf16.mxu0 0
    %3104 = vmatpush1.bf16.msra.mxu0 0
    %3105 = vmatprep.subr.bf16.mxu0 0
    %3106 = vmatpush1.bf16.msra.mxu0 0
    %3107 = vmatprep.subr.bf16.mxu0 0
    %3108 = vmatpush1.bf16.msra.mxu0 0
    %3109 = vmatprep.subr.bf16.mxu0 0
    %3110 = vmatpush1.bf16.msra.mxu0 0
    %3111 = vmatprep.subr.bf16.mxu0 0
    %3112 = vmatpush1.bf16.msra.mxu0 0
    %3113 = vmatprep.subr.bf16.mxu0 0
    %3114 = vmatpush1.bf16.msra.mxu0 0
    %3115 = vmatprep.subr.bf16.mxu0 0
    %3116 = vmatpush1.bf16.msra.mxu0 0
    %3117 = vmatprep.subr.bf16.mxu0 0
    %3118 = vmatpush1.bf16.msra.mxu0 0
    %3119 = vmatprep.mubr.bf16.mxu0 0
    %3120 = vmatmul.mubr.bf16.gmra.mrb[0].mxu0 %v3004
    %v3121 = vpop.f32.mrb[0].mxu0
    %v3122 = vadd.f32 0.0, %v3121
    %v3123 = vpop.f32.mrb[0].mxu0
    %v3124 = vpop.f32.mrb[0].mxu0
    %v3125 = vpop.f32.mrb[0].mxu0
    %3126 = vdwg.mxu0
    %v3127 = vmul.f32 %v3082, %v3122
    %v3128 = vadd.f32 %v3046, %v3127
    %3129 = vmatprep.subr.bf16.mxu0 0
    %3130 = vmatpush1.bf16.msra.mxu0 %v1123
    %3131 = vmatprep.subr.bf16.mxu0 0
    %3132 = vmatpush1.bf16.msra.mxu0 0
    %3133 = vmatprep.subr.bf16.mxu0 0
    %3134 = vmatpush1.bf16.msra.mxu0 0
    %3135 = vmatprep.subr.bf16.mxu0 0
    %3136 = vmatpush1.bf16.msra.mxu0 0
    %3137 = vmatprep.subr.bf16.mxu0 0
    %3138 = vmatpush1.bf16.msra.mxu0 0
    %3139 = vmatprep.subr.bf16.mxu0 0
    %3140 = vmatpush1.bf16.msra.mxu0 0
    %3141 = vmatprep.subr.bf16.mxu0 0
    %3142 = vmatpush1.bf16.msra.mxu0 0
    %3143 = vmatprep.subr.bf16.mxu0 0
    %3144 = vmatpush1.bf16.msra.mxu0 0
    %3145 = vmatprep.subr.bf16.mxu0 0
    %3146 = vmatpush1.bf16.msra.mxu0 0
    %3147 = vmatprep.subr.bf16.mxu0 0
    %3148 = vmatpush1.bf16.msra.mxu0 0
    %3149 = vmatprep.subr.bf16.mxu0 0
    %3150 = vmatpush1.bf16.msra.mxu0 0
    %3151 = vmatprep.subr.bf16.mxu0 0
    %3152 = vmatpush1.bf16.msra.mxu0 0
    %3153 = vmatprep.subr.bf16.mxu0 0
    %3154 = vmatpush1.bf16.msra.mxu0 0
    %3155 = vmatprep.subr.bf16.mxu0 0
    %3156 = vmatpush1.bf16.msra.mxu0 0
    %3157 = vmatprep.subr.bf16.mxu0 0
    %3158 = vmatpush1.bf16.msra.mxu0 0
    %3159 = vmatprep.subr.bf16.mxu0 0
    %3160 = vmatpush1.bf16.msra.mxu0 0
    %3161 = vmatprep.mubr.bf16.mxu0 0
    %3162 = vmatmul.mubr.bf16.gmra.mrb[0].mxu0 %v2398
    %v3163 = vpop.f32.mrb[0].mxu0
    %v3164 = vadd.f32 0.0, %v3163
    %v3165 = vpop.f32.mrb[0].mxu0
    %v3166 = vpop.f32.mrb[0].mxu0
    %v3167 = vpop.f32.mrb[0].mxu0
    %3168 = vdwg.mxu0
    %3169 = vmatprep.subr.bf16.mxu0 0
    %3170 = vmatpush1.bf16.msra.mxu0 %v1180
    %3171 = vmatprep.subr.bf16.mxu0 0
    %3172 = vmatpush1.bf16.msra.mxu0 %v1181
    %3173 = vmatprep.subr.bf16.mxu0 0
    %3174 = vmatpush1.bf16.msra.mxu0 %v1182
    %3175 = vmatprep.subr.bf16.mxu0 0
    %3176 = vmatpush1.bf16.msra.mxu0 %v1183
    %3177 = vmatprep.subr.bf16.mxu0 0
    %3178 = vmatpush1.bf16.msra.mxu0 %v1184
    %3179 = vmatprep.subr.bf16.mxu0 0
    %3180 = vmatpush1.bf16.msra.mxu0 %v1185
    %3181 = vmatprep.subr.bf16.mxu0 0
    %3182 = vmatpush1.bf16.msra.mxu0 %v1186
    %3183 = vmatprep.subr.bf16.mxu0 0
    %3184 = vmatpush1.bf16.msra.mxu0 %v1187
    %3185 = vmatprep.subr.bf16.mxu0 0
    %3186 = vmatpush1.bf16.msra.mxu0 0
    %3187 = vmatprep.subr.bf16.mxu0 0
    %3188 = vmatpush1.bf16.msra.mxu0 0
    %3189 = vmatprep.subr.bf16.mxu0 0
    %3190 = vmatpush1.bf16.msra.mxu0 0
    %3191 = vmatprep.subr.bf16.mxu0 0
    %3192 = vmatpush1.bf16.msra.mxu0 0
    %3193 = vmatprep.subr.bf16.mxu0 0
    %3194 = vmatpush1.bf16.msra.mxu0 0
    %3195 = vmatprep.subr.bf16.mxu0 0
    %3196 = vmatpush1.bf16.msra.mxu0 0
    %3197 = vmatprep.subr.bf16.mxu0 0
    %3198 = vmatpush1.bf16.msra.mxu0 0
    %3199 = vmatprep.subr.bf16.mxu0 0
    %3200 = vmatpush1.bf16.msra.mxu0 0
    %3201 = vmatprep.mubr.bf16.mxu0 0
    %3202 = vmatmul.mubr.bf16.gmra.mrb[0].mxu0 %v3004
    %v3203 = vpop.f32.mrb[0].mxu0
    %v3204 = vadd.f32 0.0, %v3203
    %v3205 = vpop.f32.mrb[0].mxu0
    %v3206 = vpop.f32.mrb[0].mxu0
    %v3207 = vpop.f32.mrb[0].mxu0
    %3208 = vdwg.mxu0
    %v3209 = vmul.f32 %v3164, %v3204
    %v3210 = vadd.f32 %v3128, %v3209
    %v3211 = vmax.f32 %v3210, 0.0
    %v3212 = vld [vmem:[#allocation2 + $0x444] sm:$0xff]
    %v3213 = vld [vmem:[#allocation2 + $0x44c] sm:$0xff]
    %v3214 = vld [vmem:[#allocation2 + $0x454] sm:$0xff]
    %v3215 = vld [vmem:[#allocation2 + $0x45c] sm:$0xff]
    %v3216 = vld [vmem:[#allocation2 + $0x464] sm:$0xff]
    %v3217 = vld [vmem:[#allocation2 + $0x46c] sm:$0xff]
    %v3218 = vld [vmem:[#allocation2 + $0x474] sm:$0xff]
    %v3219 = vld [vmem:[#allocation2 + $0x47c] sm:$0xff]
    %v3220 = vld [vmem:[#allocation2 + $0x484] sm:$0xff]
    %v3221 = vld [vmem:[#allocation2 + $0x48c] sm:$0xff]
    %v3222 = vld [vmem:[#allocation2 + $0x494] sm:$0xff]
    %v3223 = vld [vmem:[#allocation2 + $0x49c] sm:$0xff]
    %v3224 = vld [vmem:[#allocation2 + $0x4a4] sm:$0xff]
    %v3225 = vld [vmem:[#allocation2 + $0x4ac] sm:$0xff]
    %v3226 = vld [vmem:[#allocation2 + $0x4b4] sm:$0xff]
    %v3227 = vld [vmem:[#allocation2 + $0x4bc] sm:$0xff]
    %v3228 = vld [vmem:[#allocation2 + $0x4c4] sm:$0x1]
    %v3229 = vpack.c.bf16 %v3211, %v3211
    %v3230 = vpack.c.bf16 %v3213, %v3212
    %v3231 = vpack.c.bf16 %v3215, %v3214
    %v3232 = vpack.c.bf16 %v3217, %v3216
    %v3233 = vpack.c.bf16 %v3219, %v3218
    %v3234 = vpack.c.bf16 %v3221, %v3220
    %v3235 = vpack.c.bf16 %v3223, %v3222
    %v3236 = vpack.c.bf16 %v3225, %v3224
    %v3237 = vpack.c.bf16 %v3227, %v3226
    %v3238 = vlaneseq
    %v3239 = vshrl.u32 %v3238, 7
    %v3240 = vsub.s32 0, %v3239
    %v3241 = vrot.slane %v3228, %v3240
    %3242 = vmatprep.subr.bf16.mxu0 0
    %3243 = vmatpush1.bf16.msra.mxu0 %v3230
    %3244 = vmatprep.subr.bf16.mxu0 0
    %3245 = vmatpush1.bf16.msra.mxu0 %v3231
    %3246 = vmatprep.subr.bf16.mxu0 0
    %3247 = vmatpush1.bf16.msra.mxu0 %v3232
    %3248 = vmatprep.subr.bf16.mxu0 0
    %3249 = vmatpush1.bf16.msra.mxu0 %v3233
    %3250 = vmatprep.subr.bf16.mxu0 0
    %3251 = vmatpush1.bf16.msra.mxu0 %v3234
    %3252 = vmatprep.subr.bf16.mxu0 0
    %3253 = vmatpush1.bf16.msra.mxu0 %v3235
    %3254 = vmatprep.subr.bf16.mxu0 0
    %3255 = vmatpush1.bf16.msra.mxu0 %v3236
    %3256 = vmatprep.subr.bf16.mxu0 0
    %3257 = vmatpush1.bf16.msra.mxu0 %v3237
    %3258 = vmatprep.subr.bf16.mxu0 0
    %3259 = vmatpush1.bf16.msra.mxu0 0
    %3260 = vmatprep.subr.bf16.mxu0 0
    %3261 = vmatpush1.bf16.msra.mxu0 0
    %3262 = vmatprep.subr.bf16.mxu0 0
    %3263 = vmatpush1.bf16.msra.mxu0 0
    %3264 = vmatprep.subr.bf16.mxu0 0
    %3265 = vmatpush1.bf16.msra.mxu0 0
    %3266 = vmatprep.subr.bf16.mxu0 0
    %3267 = vmatpush1.bf16.msra.mxu0 0
    %3268 = vmatprep.subr.bf16.mxu0 0
    %3269 = vmatpush1.bf16.msra.mxu0 0
    %3270 = vmatprep.subr.bf16.mxu0 0
    %3271 = vmatpush1.bf16.msra.mxu0 0
    %3272 = vmatprep.subr.bf16.mxu0 0
    %3273 = vmatpush1.bf16.msra.mxu0 0
    %3274 = vmatprep.mubr.bf16.mxu0 0
    %3275 = vmatmul.mubr.bf16.gmra.mrb[0].mxu0 %v3229
    %v3276 = vpop.f32.mrb[0].mxu0
    %v3277 = vadd.f32 %v3241, %v3276
    %v3278 = vpop.f32.mrb[0].mxu0
    %v3279 = vpop.f32.mrb[0].mxu0
    %v3280 = vpop.f32.mrb[0].mxu0
    %3281 = vdwg.mxu0
    %v3282 = vpack.c.bf16 %v2508, %v2508
    %v3284 = vsel %vm791, %v3282, 0
    %3286 = vmatprep.subr.bf16.mxu0 0
    %3287 = vmatpush1.bf16.msra.mxu0 %v1668
    %3288 = vmatprep.subr.bf16.mxu0 0
    %3289 = vmatpush1.bf16.msra.mxu0 0
    %3290 = vmatprep.subr.bf16.mxu0 0
    %3291 = vmatpush1.bf16.msra.mxu0 0
    %3292 = vmatprep.subr.bf16.mxu0 0
    %3293 = vmatpush1.bf16.msra.mxu0 0
    %3294 = vmatprep.subr.bf16.mxu0 0
    %3295 = vmatpush1.bf16.msra.mxu0 0
    %3296 = vmatprep.subr.bf16.mxu0 0
    %3297 = vmatpush1.bf16.msra.mxu0 0
    %3298 = vmatprep.subr.bf16.mxu0 0
    %3299 = vmatpush1.bf16.msra.mxu0 0
    %3300 = vmatprep.subr.bf16.mxu0 0
    %3301 = vmatpush1.bf16.msra.mxu0 0
    %3302 = vmatprep.subr.bf16.mxu0 0
    %3303 = vmatpush1.bf16.msra.mxu0 0
    %3304 = vmatprep.subr.bf16.mxu0 0
    %3305 = vmatpush1.bf16.msra.mxu0 0
    %3306 = vmatprep.subr.bf16.mxu0 0
    %3307 = vmatpush1.bf16.msra.mxu0 0
    %3308 = vmatprep.subr.bf16.mxu0 0
    %3309 = vmatpush1.bf16.msra.mxu0 0
    %3310 = vmatprep.subr.bf16.mxu0 0
    %3311 = vmatpush1.bf16.msra.mxu0 0
    %3312 = vmatprep.subr.bf16.mxu0 0
    %3313 = vmatpush1.bf16.msra.mxu0 0
    %3314 = vmatprep.subr.bf16.mxu0 0
    %3315 = vmatpush1.bf16.msra.mxu0 0
    %3316 = vmatprep.subr.bf16.mxu0 0
    %3317 = vmatpush1.bf16.msra.mxu0 0
    %3318 = vmatprep.mubr.bf16.mxu0 0
    %3319 = vmatmul.mubr.bf16.gmra.mrb[0].mxu0 %v3284
    %v3320 = vpop.f32.mrb[0].mxu0
    %v3321 = vadd.f32 0.0, %v3320
    %v3322 = vpop.f32.mrb[0].mxu0
    %v3323 = vpop.f32.mrb[0].mxu0
    %v3324 = vpop.f32.mrb[0].mxu0
    %3325 = vdwg.mxu0
    %v3326 = vmul.f32 %v3321, %v3277
    %v3327 = vpack.c.bf16 %v3326, %v3326
    %3328 = vmatprep.subr.bf16.mxu0 0
    %3329 = vmatpush1.bf16.msra.mxu0 %v1728
    %3330 = vmatprep.subr.bf16.mxu0 0
    %3331 = vmatpush1.bf16.msra.mxu0 %v1729
    %3332 = vmatprep.subr.bf16.mxu0 0
    %3333 = vmatpush1.bf16.msra.mxu0 %v1730
    %3334 = vmatprep.subr.bf16.mxu0 0
    %3335 = vmatpush1.bf16.msra.mxu0 %v1731
    %3336 = vmatprep.subr.bf16.mxu0 0
    %3337 = vmatpush1.bf16.msra.mxu0 %v1732
    %3338 = vmatprep.subr.bf16.mxu0 0
    %3339 = vmatpush1.bf16.msra.mxu0 %v1733
    %3340 = vmatprep.subr.bf16.mxu0 0
    %3341 = vmatpush1.bf16.msra.mxu0 %v1734
    %3342 = vmatprep.subr.bf16.mxu0 0
    %3343 = vmatpush1.bf16.msra.mxu0 %v1735
    %3344 = vmatprep.subr.bf16.mxu0 0
    %3345 = vmatpush1.bf16.msra.mxu0 0
    %3346 = vmatprep.subr.bf16.mxu0 0
    %3347 = vmatpush1.bf16.msra.mxu0 0
    %3348 = vmatprep.subr.bf16.mxu0 0
    %3349 = vmatpush1.bf16.msra.mxu0 0
    %3350 = vmatprep.subr.bf16.mxu0 0
    %3351 = vmatpush1.bf16.msra.mxu0 0
    %3352 = vmatprep.subr.bf16.mxu0 0
    %3353 = vmatpush1.bf16.msra.mxu0 0
    %3354 = vmatprep.subr.bf16.mxu0 0
    %3355 = vmatpush1.bf16.msra.mxu0 0
    %3356 = vmatprep.subr.bf16.mxu0 0
    %3357 = vmatpush1.bf16.msra.mxu0 0
    %3358 = vmatprep.subr.bf16.mxu0 0
    %3359 = vmatpush1.bf16.msra.mxu0 0
    %3360 = vmatprep.mubr.bf16.mxu0 0
    %3361 = vmatmul.mubr.bf16.gmra.mrb[0].mxu0 %v3327
    %v3362 = vpop.f32.mrb[0].mxu0
    %v3363 = vadd.f32 0.0, %v3362
    %v3364 = vpop.f32.mrb[0].mxu0
    %v3365 = vpop.f32.mrb[0].mxu0
    %v3366 = vpop.f32.mrb[0].mxu0
    %3367 = vdwg.mxu0
    %v3368 = vmax.f32 %v3363, 0.0
    %v3369 = vld [vmem:[#allocation2 + $0x4c5] sm:$0xff]
    %v3370 = vld [vmem:[#allocation2 + $0x4cd] sm:$0xff]
    %v3371 = vld [vmem:[#allocation2 + $0x4d5] sm:$0xff]
    %v3372 = vld [vmem:[#allocation2 + $0x4dd] sm:$0xff]
    %v3373 = vld [vmem:[#allocation2 + $0x4e5] sm:$0x1]
    %v3374 = vpack.c.bf16 %v3368, %v3368
    %v3375 = vpack.c.bf16 %v3370, %v3369
    %v3376 = vpack.c.bf16 %v3372, %v3371
    %v3377 = vlaneseq
    %v3378 = vshrl.u32 %v3377, 7
    %v3379 = vsub.s32 0, %v3378
    %v3380 = vrot.slane %v3373, %v3379
    %v3382 = vsel %vm39, %v3374, 0
    %3384 = vmatprep.subr.bf16.mxu0 0
    %3385 = vmatpush1.bf16.msra.mxu0 %v3375
    %3386 = vmatprep.subr.bf16.mxu0 0
    %3387 = vmatpush1.bf16.msra.mxu0 %v3376
    %3388 = vmatprep.subr.bf16.mxu0 0
    %3389 = vmatpush1.bf16.msra.mxu0 0
    %3390 = vmatprep.subr.bf16.mxu0 0
    %3391 = vmatpush1.bf16.msra.mxu0 0
    %3392 = vmatprep.subr.bf16.mxu0 0
    %3393 = vmatpush1.bf16.msra.mxu0 0
    %3394 = vmatprep.subr.bf16.mxu0 0
    %3395 = vmatpush1.bf16.msra.mxu0 0
    %3396 = vmatprep.subr.bf16.mxu0 0
    %3397 = vmatpush1.bf16.msra.mxu0 0
    %3398 = vmatprep.subr.bf16.mxu0 0
    %3399 = vmatpush1.bf16.msra.mxu0 0
    %3400 = vmatprep.subr.bf16.mxu0 0
    %3401 = vmatpush1.bf16.msra.mxu0 0
    %3402 = vmatprep.subr.bf16.mxu0 0
    %3403 = vmatpush1.bf16.msra.mxu0 0
    %3404 = vmatprep.subr.bf16.mxu0 0
    %3405 = vmatpush1.bf16.msra.mxu0 0
    %3406 = vmatprep.subr.bf16.mxu0 0
    %3407 = vmatpush1.bf16.msra.mxu0 0
    %3408 = vmatprep.subr.bf16.mxu0 0
    %3409 = vmatpush1.bf16.msra.mxu0 0
    %3410 = vmatprep.subr.bf16.mxu0 0
    %3411 = vmatpush1.bf16.msra.mxu0 0
    %3412 = vmatprep.subr.bf16.mxu0 0
    %3413 = vmatpush1.bf16.msra.mxu0 0
    %3414 = vmatprep.subr.bf16.mxu0 0
    %3415 = vmatpush1.bf16.msra.mxu0 0
    %3416 = vmatprep.mubr.bf16.mxu0 0
    %3417 = vmatmul.mubr.bf16.gmra.mrb[0].mxu0 %v3382
    %v3418 = vpop.f32.mrb[0].mxu0
    %v3419 = vadd.f32 %v3380, %v3418
    %v3420 = vpop.f32.mrb[0].mxu0
    %v3421 = vpop.f32.mrb[0].mxu0
    %v3422 = vpop.f32.mrb[0].mxu0
    %3423 = vdwg.mxu0
    %v3424 = vsub.f32 %v26, %v3419
    %v3425 = vmul.f32 %v3424, %v3424
    %v3426 = vsel %vm416, %v3425, 0.0
    %3427 = vadd.xlane.f32.xlu0 %v3426
    %v3428 = vpop.xlane.xlu0 %3427
    %v3429 = vmul.f32 %v1834, %v1834
    %v3430 = vadd.f32 %v1827, 1.0
    %v3431 = vmul.f32 %v1827, %v1827
    %3433 = vrot.lane.b32.xlu0 %v3431, 8
    %v3434 = vpop.permute.xlu0 %3433
    %v3436 = vsub.f32 %v3430, %v3434
    %v3437 = vsub.f32 %v3436, %v3429
    %3439 = vrot.lane.b32.xlu0 %v3437, 120
    %v3440 = vpop.permute.xlu0 %3439
    %v3442 = vsel %vm1853, %v3440, 0.0
    %3443 = vadd.xlane.f32.xlu0 %v3442
    %v3444 = vpop.xlane.xlu0 %3443
    %v3445 = vmul.f32 %v3444, -0.5
    %v3446 = vlaneseq
    %v3447 = vand.u32 %v3446, 127
    %vm3448 = vcmp.eq.s32.totalorder %v3447, 0
    %vm3449 = vcmp.eq.s32.totalorder %v3447, 1
    %v3450 = vsel %vm3449, %v3445, 0.0
    %v3451 = vsel %vm3448, %v3428, %v3450
    %3452 = vst [vmem:[%s2] sm:$0xff] %v3451
    // Predicated region
    $region14: #{fwd.1} parent=1 // pred_check
      _
    $region15: #{fwd.1} parent=1 // pred_check_branch
      %3454 = sbr.rel (0) target = $region17
    $region16: #{fwd.1} parent=1 // pred_region
      _
    $region17: #{fwd.1} parent=1 // pred_fallthru
      _
    // Predicated region
    $region18: #{fwd.1} parent=1 // pred_check
      _
    $region19: #{fwd.1} parent=1 // pred_check_branch
      %3456 = sbr.rel (0) target = $region21
    $region20: #{fwd.1} parent=1 // pred_region
      _
    $region21: #{fwd.1} parent=1 // pred_fallthru
      _
    %3457 = vsyncpa [#allocation3], 1

</llo_original>
